<compile_context>
chip_gen: v6e
topology: v6e:2x2x1
jax: 0.10.0
libtpu: 0.0.40
codegen_flags: <defaults>
</compile_context>

<pallas_src>
import functools

import jax
import jax.numpy as jnp
from jax.experimental import pallas as pl
from jax.experimental.pallas import tpu as pltpu


_LAYER_PARAM_ORDER = (
    "wq", "bq", "wk", "bk", "wv", "bv", "wo", "bo",
    "ln1_w", "ln1_b", "w1", "b1", "w2", "b2", "ln2_w", "ln2_b",
)


def _layer_norm(v, w, b, eps=1e-5):
    """LayerNorm over the last axis (PyTorch default eps=1e-5)."""
    mean = jnp.mean(v, axis=-1, keepdims=True)
    cent = v - mean
    var = jnp.mean(cent * cent, axis=-1, keepdims=True)
    return cent * jax.lax.rsqrt(var + eps) * w + b


# --------------------------------------------------------------------------
# Fused Pallas kernel: PE add + num_layers TransformerEncoderLayers
# --------------------------------------------------------------------------
def _trm_encoder_kernel(x_ref, pe_ref,
                        wq_ref, bq_ref, wk_ref, bk_ref, wv_ref, bv_ref,
                        wo_ref, bo_ref, ln1w_ref, ln1b_ref,
                        w1_ref, b1_ref, w2_ref, b2_ref, ln2w_ref, ln2b_ref,
                        o_ref, *, nhead, num_layers):
    # One batch row (T, D) per grid step; all layers computed in VMEM.
    x = x_ref[0].astype(jnp.float32) + pe_ref[...]          # positional encoding
    t, d = x.shape
    dh = d // nhead
    scale = 1.0 / float(dh) ** 0.5

    for l in range(num_layers):                              # static unroll
        wq, wk, wv, wo = wq_ref[l], wk_ref[l], wv_ref[l], wo_ref[l]
        bq, bk, bv, bo = bq_ref[l], bk_ref[l], bv_ref[l], bo_ref[l]

        q = jnp.dot(x, wq, preferred_element_type=jnp.float32) + bq
        k = jnp.dot(x, wk, preferred_element_type=jnp.float32) + bk
        v = jnp.dot(x, wv, preferred_element_type=jnp.float32) + bv

        # Multi-head self-attention. The head-concat + output projection is
        # folded:  concat_h(O_h) @ Wo == sum_h O_h @ Wo[h*dh:(h+1)*dh, :]
        ctx = jnp.zeros((t, d), jnp.float32)
        for h in range(nhead):
            sl = slice(h * dh, (h + 1) * dh)
            qh, kh, vh = q[:, sl], k[:, sl], v[:, sl]
            s = jax.lax.dot_general(
                qh, kh, (((1,), (1,)), ((), ())),
                preferred_element_type=jnp.float32) * scale
            s = s - jnp.max(s, axis=-1, keepdims=True)
            p = jnp.exp(s)
            p = p / jnp.sum(p, axis=-1, keepdims=True)
            oh = jnp.dot(p, vh, preferred_element_type=jnp.float32)
            ctx = ctx + jnp.dot(oh, wo[sl, :],
                                preferred_element_type=jnp.float32)
        attn_out = ctx + bo

        # Post-LN residual blocks (PyTorch default: norm_first=False, ReLU FFN)
        y = _layer_norm(x + attn_out, ln1w_ref[l], ln1b_ref[l])
        h1 = jnp.dot(y, w1_ref[l], preferred_element_type=jnp.float32) + b1_ref[l]
        h1 = jnp.maximum(h1, 0.0)                            # ReLU
        ff = jnp.dot(h1, w2_ref[l], preferred_element_type=jnp.float32) + b2_ref[l]
        x = _layer_norm(y + ff, ln2w_ref[l], ln2b_ref[l])

    o_ref[0] = x.astype(o_ref.dtype)


def trm_encoder_forward(x, pe, params, *, nhead):
    """TrmEncoder forward pass as a single fused Pallas TPU kernel.

    Args:
      x: (B, T, D) float32 input.
      pe: (T, D) sinusoidal positional-encoding table.
      params: dict of stacked per-layer weights (leading axis = num_layers).
    Returns:
      (B, T, D) encoder output.
    """
    B, T, D = x.shape
    num_layers = params["wq"].shape[0]
    weights = [params[name] for name in _LAYER_PARAM_ORDER]

    in_specs = [
        pl.BlockSpec((1, T, D), lambda b: (b, 0, 0)),   # activations: one row / step
        pl.BlockSpec((T, D), lambda b: (0, 0)),         # PE table (constant block)
    ]
    # Stacked weights: full blocks with a constant index map, so they are
    # copied to VMEM once and stay resident across the batch grid.
    for w in weights:
        in_specs.append(pl.BlockSpec(w.shape, lambda b, n=w.ndim: (0,) * n))

    return pl.pallas_call(
        functools.partial(_trm_encoder_kernel, nhead=nhead,
                          num_layers=num_layers),
        out_shape=jax.ShapeDtypeStruct((B, T, D), x.dtype),
        grid=(B,),
        in_specs=in_specs,
        out_specs=pl.BlockSpec((1, T, D), lambda b: (b, 0, 0)),
        compiler_params=pltpu.CompilerParams(
            dimension_semantics=("parallel",),   # batch rows shard across TCs on v7x
        ),
    )(x, pe, *weights)


# --------------------------------------------------------------------------
# Host-side parameter / PE construction and pure-JAX reference
# --------------------------------------------------------------------------
def make_positional_encoding(seq_len, d_model):
    pos = jnp.arange(seq_len, dtype=jnp.float32)[:, None]
    inv = jnp.power(10000.0,
                    jnp.arange(0, d_model, 2, dtype=jnp.float32) / d_model)
    ang = pos / inv                                   # (seq_len, d_model // 2)
    pe = jnp.zeros((seq_len, d_model), jnp.float32)
    pe = pe.at[:, 0::2].set(jnp.sin(ang))
    pe = pe.at[:, 1::2].set(jnp.cos(ang))
    return pe


def init_trm_encoder_params(key, d_model, hidden_size, num_layers):
    def linear(k, fan_in, fan_out):
        kw, kb = jax.random.split(k)
        w = jax.random.normal(kw, (num_layers, fan_in, fan_out),
                              jnp.float32) / (fan_in ** 0.5)
        b = 0.1 * jax.random.normal(kb, (num_layers, 1, fan_out), jnp.float32)
        return w, b

    ks = jax.random.split(key, 10)
    wq, bq = linear(ks[0], d_model, d_model)
    wk, bk = linear(ks[1], d_model, d_model)
    wv, bv = linear(ks[2], d_model, d_model)
    wo, bo = linear(ks[3], d_model, d_model)
    w1, b1 = linear(ks[4], d_model, hidden_size)
    w2, b2 = linear(ks[5], hidden_size, d_model)
    ln = lambda k: 0.1 * jax.random.normal(k, (num_layers, 1, d_model), jnp.float32)
    return dict(
        wq=wq, bq=bq, wk=wk, bk=bk, wv=wv, bv=bv, wo=wo, bo=bo,
        ln1_w=1.0 + ln(ks[6]), ln1_b=ln(ks[7]),
        w1=w1, b1=b1, w2=w2, b2=b2,
        ln2_w=1.0 + ln(ks[8]), ln2_b=ln(ks[9]),
    )


def trm_encoder_reference(x, pe, params, *, nhead):
    """Pure-JAX reference (inference mode, dropout disabled)."""
    hp = jax.lax.Precision.HIGHEST
    num_layers = params["wq"].shape[0]
    B, T, D = x.shape
    dh = D // nhead
    x = x + pe[None]
    for l in range(num_layers):
        mm = lambda a, w: jnp.einsum("btd,de->bte", a, w, precision=hp)
        q = mm(x, params["wq"][l]) + params["bq"][l]
        k = mm(x, params["wk"][l]) + params["bk"][l]
        v = mm(x, params["wv"][l]) + params["bv"][l]
        q = q.reshape(B, T, nhead, dh).transpose(0, 2, 1, 3)
        k = k.reshape(B, T, nhead, dh).transpose(0, 2, 1, 3)
        v = v.reshape(B, T, nhead, dh).transpose(0, 2, 1, 3)
        s = jnp.einsum("bhqd,bhkd->bhqk", q, k, precision=hp) / (dh ** 0.5)
        a = jax.nn.softmax(s, axis=-1)
        o = jnp.einsum("bhqk,bhkd->bhqd", a, v, precision=hp)
        o = o.transpose(0, 2, 1, 3).reshape(B, T, D)
        attn = mm(o, params["wo"][l]) + params["bo"][l]
        y = _layer_norm(x + attn, params["ln1_w"][l], params["ln1_b"][l])
        h1 = jax.nn.relu(
            jnp.einsum("btd,dh->bth", y, params["w1"][l], precision=hp)
            + params["b1"][l])
        ff = jnp.einsum("bth,hd->btd", h1, params["w2"][l], precision=hp) \
            + params["b2"][l]
        x = _layer_norm(y + ff, params["ln2_w"][l], params["ln2_b"][l])
    return x


if __name__ == "__main__":
    # Small but lane-dense config: d_model multiple of 128 per perf feedback.
    B, T = 2, 8
    d_model, nhead, hidden_size, num_layers = 128, 4, 256, 2

    key = jax.random.PRNGKey(0)
    kx, kp = jax.random.split(key)
    x = jax.random.normal(kx, (B, T, d_model), dtype=jnp.float32)
    pe = make_positional_encoding(T, d_model)
    params = init_trm_encoder_params(kp, d_model, hidden_size, num_layers)

    out = jax.block_until_ready(trm_encoder_forward(x, pe, params, nhead=nhead))
    ref = jax.block_until_ready(trm_encoder_reference(x, pe, params, nhead=nhead))

    assert out.shape == (B, T, d_model) and out.dtype == x.dtype
    assert bool(jnp.all(jnp.isfinite(out)))
    err = float(jnp.max(jnp.abs(out - ref)))
    assert err < 5e-2, f"max abs error vs reference too large: {err}"
    print("KERNEL_OK")
</pallas_src>

<mosaic_0001>
module attributes {stable_mosaic.version = 11 : i64} {
  func.func @_trm_encoder_kernel(%arg0: i32, %arg1: memref<1x8x128xf32, #tpu.memory_space<vmem>>, %arg2: memref<8x128xf32, #tpu.memory_space<vmem>>, %arg3: memref<2x128x128xf32, #tpu.memory_space<vmem>>, %arg4: memref<2x1x128xf32, #tpu.memory_space<vmem>>, %arg5: memref<2x128x128xf32, #tpu.memory_space<vmem>>, %arg6: memref<2x1x128xf32, #tpu.memory_space<vmem>>, %arg7: memref<2x128x128xf32, #tpu.memory_space<vmem>>, %arg8: memref<2x1x128xf32, #tpu.memory_space<vmem>>, %arg9: memref<2x128x128xf32, #tpu.memory_space<vmem>>, %arg10: memref<2x1x128xf32, #tpu.memory_space<vmem>>, %arg11: memref<2x1x128xf32, #tpu.memory_space<vmem>>, %arg12: memref<2x1x128xf32, #tpu.memory_space<vmem>>, %arg13: memref<2x128x256xf32, #tpu.memory_space<vmem>>, %arg14: memref<2x1x256xf32, #tpu.memory_space<vmem>>, %arg15: memref<2x256x128xf32, #tpu.memory_space<vmem>>, %arg16: memref<2x1x128xf32, #tpu.memory_space<vmem>>, %arg17: memref<2x1x128xf32, #tpu.memory_space<vmem>>, %arg18: memref<2x1x128xf32, #tpu.memory_space<vmem>>, %arg19: memref<1x8x128xf32, #tpu.memory_space<vmem>>) attributes {dimension_semantics = [#tpu.dimension_semantics<parallel>], iteration_bounds = array<i64: 2>, scalar_prefetch = 0 : i64, scratch_operands = 0 : i64, tpu.core_type = #tpu.core_type<tc>, window_params = [{transform_indices = @transform_0, window_bounds = array<i64: 1, 8, 128>}, {pipeline_mode = #tpu.pipeline_mode<synchronous>, transform_indices = @transform_1, window_bounds = array<i64: 8, 128>}, {pipeline_mode = #tpu.pipeline_mode<synchronous>, transform_indices = @transform_2, window_bounds = array<i64: 2, 128, 128>}, {pipeline_mode = #tpu.pipeline_mode<synchronous>, transform_indices = @transform_3, window_bounds = array<i64: 2, 1, 128>}, {pipeline_mode = #tpu.pipeline_mode<synchronous>, transform_indices = @transform_4, window_bounds = array<i64: 2, 128, 128>}, {pipeline_mode = #tpu.pipeline_mode<synchronous>, transform_indices = @transform_5, window_bounds = array<i64: 2, 1, 128>}, {pipeline_mode = #tpu.pipeline_mode<synchronous>, transform_indices = @transform_6, window_bounds = array<i64: 2, 128, 128>}, {pipeline_mode = #tpu.pipeline_mode<synchronous>, transform_indices = @transform_7, window_bounds = array<i64: 2, 1, 128>}, {pipeline_mode = #tpu.pipeline_mode<synchronous>, transform_indices = @transform_8, window_bounds = array<i64: 2, 128, 128>}, {pipeline_mode = #tpu.pipeline_mode<synchronous>, transform_indices = @transform_9, window_bounds = array<i64: 2, 1, 128>}, {pipeline_mode = #tpu.pipeline_mode<synchronous>, transform_indices = @transform_10, window_bounds = array<i64: 2, 1, 128>}, {pipeline_mode = #tpu.pipeline_mode<synchronous>, transform_indices = @transform_11, window_bounds = array<i64: 2, 1, 128>}, {pipeline_mode = #tpu.pipeline_mode<synchronous>, transform_indices = @transform_12, window_bounds = array<i64: 2, 128, 256>}, {pipeline_mode = #tpu.pipeline_mode<synchronous>, transform_indices = @transform_13, window_bounds = array<i64: 2, 1, 256>}, {pipeline_mode = #tpu.pipeline_mode<synchronous>, transform_indices = @transform_14, window_bounds = array<i64: 2, 256, 128>}, {pipeline_mode = #tpu.pipeline_mode<synchronous>, transform_indices = @transform_15, window_bounds = array<i64: 2, 1, 128>}, {pipeline_mode = #tpu.pipeline_mode<synchronous>, transform_indices = @transform_16, window_bounds = array<i64: 2, 1, 128>}, {pipeline_mode = #tpu.pipeline_mode<synchronous>, transform_indices = @transform_17, window_bounds = array<i64: 2, 1, 128>}, {transform_indices = @transform_18, window_bounds = array<i64: 1, 8, 128>}]} {
    %c0 = arith.constant 0 : index
    %c0_0 = arith.constant 0 : index
    %c0_1 = arith.constant 0 : index
    %0 = vector.load %arg1[%c0, %c0_0, %c0_1] : memref<1x8x128xf32, #tpu.memory_space<vmem>>, vector<1x8x128xf32>
    %1 = vector.shape_cast %0 : vector<1x8x128xf32> to vector<8x128xf32>
    %c0_2 = arith.constant 0 : index
    %c0_3 = arith.constant 0 : index
    %2 = vector.load %arg2[%c0_2, %c0_3] : memref<8x128xf32, #tpu.memory_space<vmem>>, vector<8x128xf32>
    %3 = arith.addf %1, %2 : vector<8x128xf32>
    %c0_4 = arith.constant 0 : index
    %c0_5 = arith.constant 0 : index
    %c0_6 = arith.constant 0 : index
    %4 = vector.load %arg3[%c0_4, %c0_5, %c0_6] : memref<2x128x128xf32, #tpu.memory_space<vmem>>, vector<1x128x128xf32>
    %5 = vector.shape_cast %4 : vector<1x128x128xf32> to vector<128x128xf32>
    %c0_7 = arith.constant 0 : index
    %c0_8 = arith.constant 0 : index
    %c0_9 = arith.constant 0 : index
    %6 = vector.load %arg5[%c0_7, %c0_8, %c0_9] : memref<2x128x128xf32, #tpu.memory_space<vmem>>, vector<1x128x128xf32>
    %7 = vector.shape_cast %6 : vector<1x128x128xf32> to vector<128x128xf32>
    %c0_10 = arith.constant 0 : index
    %c0_11 = arith.constant 0 : index
    %c0_12 = arith.constant 0 : index
    %8 = vector.load %arg7[%c0_10, %c0_11, %c0_12] : memref<2x128x128xf32, #tpu.memory_space<vmem>>, vector<1x128x128xf32>
    %9 = vector.shape_cast %8 : vector<1x128x128xf32> to vector<128x128xf32>
    %c0_13 = arith.constant 0 : index
    %c0_14 = arith.constant 0 : index
    %c0_15 = arith.constant 0 : index
    %10 = vector.load %arg9[%c0_13, %c0_14, %c0_15] : memref<2x128x128xf32, #tpu.memory_space<vmem>>, vector<1x128x128xf32>
    %11 = vector.shape_cast %10 : vector<1x128x128xf32> to vector<128x128xf32>
    %c0_16 = arith.constant 0 : index
    %c0_17 = arith.constant 0 : index
    %c0_18 = arith.constant 0 : index
    %12 = vector.load %arg4[%c0_16, %c0_17, %c0_18] : memref<2x1x128xf32, #tpu.memory_space<vmem>>, vector<1x1x128xf32>
    %13 = vector.shape_cast %12 : vector<1x1x128xf32> to vector<1x128xf32>
    %c0_19 = arith.constant 0 : index
    %c0_20 = arith.constant 0 : index
    %c0_21 = arith.constant 0 : index
    %14 = vector.load %arg6[%c0_19, %c0_20, %c0_21] : memref<2x1x128xf32, #tpu.memory_space<vmem>>, vector<1x1x128xf32>
    %15 = vector.shape_cast %14 : vector<1x1x128xf32> to vector<1x128xf32>
    %c0_22 = arith.constant 0 : index
    %c0_23 = arith.constant 0 : index
    %c0_24 = arith.constant 0 : index
    %16 = vector.load %arg8[%c0_22, %c0_23, %c0_24] : memref<2x1x128xf32, #tpu.memory_space<vmem>>, vector<1x1x128xf32>
    %17 = vector.shape_cast %16 : vector<1x1x128xf32> to vector<1x128xf32>
    %c0_25 = arith.constant 0 : index
    %c0_26 = arith.constant 0 : index
    %c0_27 = arith.constant 0 : index
    %18 = vector.load %arg10[%c0_25, %c0_26, %c0_27] : memref<2x1x128xf32, #tpu.memory_space<vmem>>, vector<1x1x128xf32>
    %19 = vector.shape_cast %18 : vector<1x1x128xf32> to vector<1x128xf32>
    %cst = arith.constant dense<0.000000e+00> : vector<8x128xf32>
    %20 = tpu.matmul %3, %5, %cst {dimension_numbers = #tpu.dot_dimension_numbers<[1], [0], [0], [1], [0, 0, 1, 1], [], []>} : vector<8x128xf32>, vector<128x128xf32>, vector<8x128xf32> -> vector<8x128xf32>
    %21 = vector.broadcast %13 : vector<1x128xf32> to vector<8x128xf32>
    %22 = arith.addf %20, %21 : vector<8x128xf32>
    %cst_28 = arith.constant dense<0.000000e+00> : vector<8x128xf32>
    %23 = tpu.matmul %3, %7, %cst_28 {dimension_numbers = #tpu.dot_dimension_numbers<[1], [0], [0], [1], [0, 0, 1, 1], [], []>} : vector<8x128xf32>, vector<128x128xf32>, vector<8x128xf32> -> vector<8x128xf32>
    %24 = vector.broadcast %15 : vector<1x128xf32> to vector<8x128xf32>
    %25 = arith.addf %23, %24 : vector<8x128xf32>
    %cst_29 = arith.constant dense<0.000000e+00> : vector<8x128xf32>
    %26 = tpu.matmul %3, %9, %cst_29 {dimension_numbers = #tpu.dot_dimension_numbers<[1], [0], [0], [1], [0, 0, 1, 1], [], []>} : vector<8x128xf32>, vector<128x128xf32>, vector<8x128xf32> -> vector<8x128xf32>
    %27 = vector.broadcast %17 : vector<1x128xf32> to vector<8x128xf32>
    %28 = arith.addf %26, %27 : vector<8x128xf32>
    %cst_30 = arith.constant 0.000000e+00 : f32
    %29 = vector.broadcast %cst_30 : f32 to vector<8x128xf32>
    %30 = vector.extract_strided_slice %22 {offsets = [0, 0], sizes = [8, 32], strides = [1, 1]} : vector<8x128xf32> to vector<8x32xf32>
    %31 = vector.extract_strided_slice %25 {offsets = [0, 0], sizes = [8, 32], strides = [1, 1]} : vector<8x128xf32> to vector<8x32xf32>
    %32 = vector.extract_strided_slice %28 {offsets = [0, 0], sizes = [8, 32], strides = [1, 1]} : vector<8x128xf32> to vector<8x32xf32>
    %cst_31 = arith.constant dense<0.000000e+00> : vector<8x8xf32>
    %33 = tpu.matmul %30, %31, %cst_31 {dimension_numbers = #tpu.dot_dimension_numbers<[1], [1], [0], [0], [0, 0, 1, 0], [], []>} : vector<8x32xf32>, vector<8x32xf32>, vector<8x8xf32> -> vector<8x8xf32>
    %cst_32 = arith.constant 0.176776692 : f32
    %34 = vector.broadcast %cst_32 : f32 to vector<8x8xf32>
    %35 = arith.mulf %33, %34 : vector<8x8xf32>
    %cst_33 = arith.constant dense<0xFF800000> : vector<8xf32>
    %36 = vector.multi_reduction <maximumf>, %35, %cst_33 [1] : vector<8x8xf32> to vector<8xf32>
    %37 = vector.shape_cast %36 : vector<8xf32> to vector<8x1xf32>
    %38 = vector.broadcast %37 : vector<8x1xf32> to vector<8x8xf32>
    %39 = arith.subf %35, %38 : vector<8x8xf32>
    %40 = math.exp %39 : vector<8x8xf32>
    %cst_34 = arith.constant dense<0.000000e+00> : vector<8xf32>
    %41 = vector.multi_reduction <add>, %40, %cst_34 [1] : vector<8x8xf32> to vector<8xf32>
    %42 = vector.shape_cast %41 : vector<8xf32> to vector<8x1xf32>
    %43 = vector.broadcast %42 : vector<8x1xf32> to vector<8x8xf32>
    %44 = arith.divf %40, %43 : vector<8x8xf32>
    %cst_35 = arith.constant dense<0.000000e+00> : vector<8x32xf32>
    %45 = tpu.matmul %44, %32, %cst_35 {dimension_numbers = #tpu.dot_dimension_numbers<[1], [0], [0], [1], [0, 0, 1, 1], [], []>} : vector<8x8xf32>, vector<8x32xf32>, vector<8x32xf32> -> vector<8x32xf32>
    %46 = vector.extract_strided_slice %11 {offsets = [0, 0], sizes = [32, 128], strides = [1, 1]} : vector<128x128xf32> to vector<32x128xf32>
    %cst_36 = arith.constant dense<0.000000e+00> : vector<8x128xf32>
    %47 = tpu.matmul %45, %46, %cst_36 {dimension_numbers = #tpu.dot_dimension_numbers<[1], [0], [0], [1], [0, 0, 1, 1], [], []>} : vector<8x32xf32>, vector<32x128xf32>, vector<8x128xf32> -> vector<8x128xf32>
    %48 = arith.addf %29, %47 : vector<8x128xf32>
    %49 = vector.extract_strided_slice %22 {offsets = [0, 32], sizes = [8, 32], strides = [1, 1]} : vector<8x128xf32> to vector<8x32xf32>
    %50 = vector.extract_strided_slice %25 {offsets = [0, 32], sizes = [8, 32], strides = [1, 1]} : vector<8x128xf32> to vector<8x32xf32>
    %51 = vector.extract_strided_slice %28 {offsets = [0, 32], sizes = [8, 32], strides = [1, 1]} : vector<8x128xf32> to vector<8x32xf32>
    %cst_37 = arith.constant dense<0.000000e+00> : vector<8x8xf32>
    %52 = tpu.matmul %49, %50, %cst_37 {dimension_numbers = #tpu.dot_dimension_numbers<[1], [1], [0], [0], [0, 0, 1, 0], [], []>} : vector<8x32xf32>, vector<8x32xf32>, vector<8x8xf32> -> vector<8x8xf32>
    %cst_38 = arith.constant 0.176776692 : f32
    %53 = vector.broadcast %cst_38 : f32 to vector<8x8xf32>
    %54 = arith.mulf %52, %53 : vector<8x8xf32>
    %cst_39 = arith.constant dense<0xFF800000> : vector<8xf32>
    %55 = vector.multi_reduction <maximumf>, %54, %cst_39 [1] : vector<8x8xf32> to vector<8xf32>
    %56 = vector.shape_cast %55 : vector<8xf32> to vector<8x1xf32>
    %57 = vector.broadcast %56 : vector<8x1xf32> to vector<8x8xf32>
    %58 = arith.subf %54, %57 : vector<8x8xf32>
    %59 = math.exp %58 : vector<8x8xf32>
    %cst_40 = arith.constant dense<0.000000e+00> : vector<8xf32>
    %60 = vector.multi_reduction <add>, %59, %cst_40 [1] : vector<8x8xf32> to vector<8xf32>
    %61 = vector.shape_cast %60 : vector<8xf32> to vector<8x1xf32>
    %62 = vector.broadcast %61 : vector<8x1xf32> to vector<8x8xf32>
    %63 = arith.divf %59, %62 : vector<8x8xf32>
    %cst_41 = arith.constant dense<0.000000e+00> : vector<8x32xf32>
    %64 = tpu.matmul %63, %51, %cst_41 {dimension_numbers = #tpu.dot_dimension_numbers<[1], [0], [0], [1], [0, 0, 1, 1], [], []>} : vector<8x8xf32>, vector<8x32xf32>, vector<8x32xf32> -> vector<8x32xf32>
    %65 = vector.extract_strided_slice %11 {offsets = [32, 0], sizes = [32, 128], strides = [1, 1]} : vector<128x128xf32> to vector<32x128xf32>
    %cst_42 = arith.constant dense<0.000000e+00> : vector<8x128xf32>
    %66 = tpu.matmul %64, %65, %cst_42 {dimension_numbers = #tpu.dot_dimension_numbers<[1], [0], [0], [1], [0, 0, 1, 1], [], []>} : vector<8x32xf32>, vector<32x128xf32>, vector<8x128xf32> -> vector<8x128xf32>
    %67 = arith.addf %48, %66 : vector<8x128xf32>
    %68 = vector.extract_strided_slice %22 {offsets = [0, 64], sizes = [8, 32], strides = [1, 1]} : vector<8x128xf32> to vector<8x32xf32>
    %69 = vector.extract_strided_slice %25 {offsets = [0, 64], sizes = [8, 32], strides = [1, 1]} : vector<8x128xf32> to vector<8x32xf32>
    %70 = vector.extract_strided_slice %28 {offsets = [0, 64], sizes = [8, 32], strides = [1, 1]} : vector<8x128xf32> to vector<8x32xf32>
    %cst_43 = arith.constant dense<0.000000e+00> : vector<8x8xf32>
    %71 = tpu.matmul %68, %69, %cst_43 {dimension_numbers = #tpu.dot_dimension_numbers<[1], [1], [0], [0], [0, 0, 1, 0], [], []>} : vector<8x32xf32>, vector<8x32xf32>, vector<8x8xf32> -> vector<8x8xf32>
    %cst_44 = arith.constant 0.176776692 : f32
    %72 = vector.broadcast %cst_44 : f32 to vector<8x8xf32>
    %73 = arith.mulf %71, %72 : vector<8x8xf32>
    %cst_45 = arith.constant dense<0xFF800000> : vector<8xf32>
    %74 = vector.multi_reduction <maximumf>, %73, %cst_45 [1] : vector<8x8xf32> to vector<8xf32>
    %75 = vector.shape_cast %74 : vector<8xf32> to vector<8x1xf32>
    %76 = vector.broadcast %75 : vector<8x1xf32> to vector<8x8xf32>
    %77 = arith.subf %73, %76 : vector<8x8xf32>
    %78 = math.exp %77 : vector<8x8xf32>
    %cst_46 = arith.constant dense<0.000000e+00> : vector<8xf32>
    %79 = vector.multi_reduction <add>, %78, %cst_46 [1] : vector<8x8xf32> to vector<8xf32>
    %80 = vector.shape_cast %79 : vector<8xf32> to vector<8x1xf32>
    %81 = vector.broadcast %80 : vector<8x1xf32> to vector<8x8xf32>
    %82 = arith.divf %78, %81 : vector<8x8xf32>
    %cst_47 = arith.constant dense<0.000000e+00> : vector<8x32xf32>
    %83 = tpu.matmul %82, %70, %cst_47 {dimension_numbers = #tpu.dot_dimension_numbers<[1], [0], [0], [1], [0, 0, 1, 1], [], []>} : vector<8x8xf32>, vector<8x32xf32>, vector<8x32xf32> -> vector<8x32xf32>
    %84 = vector.extract_strided_slice %11 {offsets = [64, 0], sizes = [32, 128], strides = [1, 1]} : vector<128x128xf32> to vector<32x128xf32>
    %cst_48 = arith.constant dense<0.000000e+00> : vector<8x128xf32>
    %85 = tpu.matmul %83, %84, %cst_48 {dimension_numbers = #tpu.dot_dimension_numbers<[1], [0], [0], [1], [0, 0, 1, 1], [], []>} : vector<8x32xf32>, vector<32x128xf32>, vector<8x128xf32> -> vector<8x128xf32>
    %86 = arith.addf %67, %85 : vector<8x128xf32>
    %87 = vector.extract_strided_slice %22 {offsets = [0, 96], sizes = [8, 32], strides = [1, 1]} : vector<8x128xf32> to vector<8x32xf32>
    %88 = vector.extract_strided_slice %25 {offsets = [0, 96], sizes = [8, 32], strides = [1, 1]} : vector<8x128xf32> to vector<8x32xf32>
    %89 = vector.extract_strided_slice %28 {offsets = [0, 96], sizes = [8, 32], strides = [1, 1]} : vector<8x128xf32> to vector<8x32xf32>
    %cst_49 = arith.constant dense<0.000000e+00> : vector<8x8xf32>
    %90 = tpu.matmul %87, %88, %cst_49 {dimension_numbers = #tpu.dot_dimension_numbers<[1], [1], [0], [0], [0, 0, 1, 0], [], []>} : vector<8x32xf32>, vector<8x32xf32>, vector<8x8xf32> -> vector<8x8xf32>
    %cst_50 = arith.constant 0.176776692 : f32
    %91 = vector.broadcast %cst_50 : f32 to vector<8x8xf32>
    %92 = arith.mulf %90, %91 : vector<8x8xf32>
    %cst_51 = arith.constant dense<0xFF800000> : vector<8xf32>
    %93 = vector.multi_reduction <maximumf>, %92, %cst_51 [1] : vector<8x8xf32> to vector<8xf32>
    %94 = vector.shape_cast %93 : vector<8xf32> to vector<8x1xf32>
    %95 = vector.broadcast %94 : vector<8x1xf32> to vector<8x8xf32>
    %96 = arith.subf %92, %95 : vector<8x8xf32>
    %97 = math.exp %96 : vector<8x8xf32>
    %cst_52 = arith.constant dense<0.000000e+00> : vector<8xf32>
    %98 = vector.multi_reduction <add>, %97, %cst_52 [1] : vector<8x8xf32> to vector<8xf32>
    %99 = vector.shape_cast %98 : vector<8xf32> to vector<8x1xf32>
    %100 = vector.broadcast %99 : vector<8x1xf32> to vector<8x8xf32>
    %101 = arith.divf %97, %100 : vector<8x8xf32>
    %cst_53 = arith.constant dense<0.000000e+00> : vector<8x32xf32>
    %102 = tpu.matmul %101, %89, %cst_53 {dimension_numbers = #tpu.dot_dimension_numbers<[1], [0], [0], [1], [0, 0, 1, 1], [], []>} : vector<8x8xf32>, vector<8x32xf32>, vector<8x32xf32> -> vector<8x32xf32>
    %103 = vector.extract_strided_slice %11 {offsets = [96, 0], sizes = [32, 128], strides = [1, 1]} : vector<128x128xf32> to vector<32x128xf32>
    %cst_54 = arith.constant dense<0.000000e+00> : vector<8x128xf32>
    %104 = tpu.matmul %102, %103, %cst_54 {dimension_numbers = #tpu.dot_dimension_numbers<[1], [0], [0], [1], [0, 0, 1, 1], [], []>} : vector<8x32xf32>, vector<32x128xf32>, vector<8x128xf32> -> vector<8x128xf32>
    %105 = arith.addf %86, %104 : vector<8x128xf32>
    %106 = vector.broadcast %19 : vector<1x128xf32> to vector<8x128xf32>
    %107 = arith.addf %105, %106 : vector<8x128xf32>
    %108 = arith.addf %3, %107 : vector<8x128xf32>
    %c0_55 = arith.constant 0 : index
    %c0_56 = arith.constant 0 : index
    %c0_57 = arith.constant 0 : index
    %109 = vector.load %arg11[%c0_55, %c0_56, %c0_57] : memref<2x1x128xf32, #tpu.memory_space<vmem>>, vector<1x1x128xf32>
    %110 = vector.shape_cast %109 : vector<1x1x128xf32> to vector<1x128xf32>
    %c0_58 = arith.constant 0 : index
    %c0_59 = arith.constant 0 : index
    %c0_60 = arith.constant 0 : index
    %111 = vector.load %arg12[%c0_58, %c0_59, %c0_60] : memref<2x1x128xf32, #tpu.memory_space<vmem>>, vector<1x1x128xf32>
    %112 = vector.shape_cast %111 : vector<1x1x128xf32> to vector<1x128xf32>
    %cst_61 = arith.constant dense<0.000000e+00> : vector<8xf32>
    %113 = vector.multi_reduction <add>, %108, %cst_61 [1] : vector<8x128xf32> to vector<8xf32>
    %114 = vector.shape_cast %113 : vector<8xf32> to vector<8x1xf32>
    %cst_62 = arith.constant 1.280000e+02 : f32
    %115 = vector.broadcast %cst_62 : f32 to vector<8x1xf32>
    %116 = arith.divf %114, %115 : vector<8x1xf32>
    %117 = vector.broadcast %116 : vector<8x1xf32> to vector<8x128xf32>
    %118 = arith.subf %108, %117 : vector<8x128xf32>
    %119 = arith.mulf %118, %118 : vector<8x128xf32>
    %cst_63 = arith.constant dense<0.000000e+00> : vector<8xf32>
    %120 = vector.multi_reduction <add>, %119, %cst_63 [1] : vector<8x128xf32> to vector<8xf32>
    %121 = vector.shape_cast %120 : vector<8xf32> to vector<8x1xf32>
    %cst_64 = arith.constant 1.280000e+02 : f32
    %122 = vector.broadcast %cst_64 : f32 to vector<8x1xf32>
    %123 = arith.divf %121, %122 : vector<8x1xf32>
    %cst_65 = arith.constant 9.99999974E-6 : f32
    %124 = vector.broadcast %cst_65 : f32 to vector<8x1xf32>
    %125 = arith.addf %123, %124 : vector<8x1xf32>
    %126 = math.rsqrt %125 : vector<8x1xf32>
    %127 = vector.broadcast %126 : vector<8x1xf32> to vector<8x128xf32>
    %128 = arith.mulf %118, %127 : vector<8x128xf32>
    %129 = vector.broadcast %110 : vector<1x128xf32> to vector<8x128xf32>
    %130 = arith.mulf %128, %129 : vector<8x128xf32>
    %131 = vector.broadcast %112 : vector<1x128xf32> to vector<8x128xf32>
    %132 = arith.addf %130, %131 : vector<8x128xf32>
    %c0_66 = arith.constant 0 : index
    %c0_67 = arith.constant 0 : index
    %c0_68 = arith.constant 0 : index
    %133 = vector.load %arg13[%c0_66, %c0_67, %c0_68] : memref<2x128x256xf32, #tpu.memory_space<vmem>>, vector<1x128x256xf32>
    %134 = vector.shape_cast %133 : vector<1x128x256xf32> to vector<128x256xf32>
    %cst_69 = arith.constant dense<0.000000e+00> : vector<8x256xf32>
    %135 = tpu.matmul %132, %134, %cst_69 {dimension_numbers = #tpu.dot_dimension_numbers<[1], [0], [0], [1], [0, 0, 1, 1], [], []>} : vector<8x128xf32>, vector<128x256xf32>, vector<8x256xf32> -> vector<8x256xf32>
    %c0_70 = arith.constant 0 : index
    %c0_71 = arith.constant 0 : index
    %c0_72 = arith.constant 0 : index
    %136 = vector.load %arg14[%c0_70, %c0_71, %c0_72] : memref<2x1x256xf32, #tpu.memory_space<vmem>>, vector<1x1x256xf32>
    %137 = vector.shape_cast %136 : vector<1x1x256xf32> to vector<1x256xf32>
    %138 = vector.broadcast %137 : vector<1x256xf32> to vector<8x256xf32>
    %139 = arith.addf %135, %138 : vector<8x256xf32>
    %cst_73 = arith.constant 0.000000e+00 : f32
    %140 = vector.broadcast %cst_73 : f32 to vector<8x256xf32>
    %141 = arith.maximumf %139, %140 : vector<8x256xf32>
    %c0_74 = arith.constant 0 : index
    %c0_75 = arith.constant 0 : index
    %c0_76 = arith.constant 0 : index
    %142 = vector.load %arg15[%c0_74, %c0_75, %c0_76] : memref<2x256x128xf32, #tpu.memory_space<vmem>>, vector<1x256x128xf32>
    %143 = vector.shape_cast %142 : vector<1x256x128xf32> to vector<256x128xf32>
    %cst_77 = arith.constant dense<0.000000e+00> : vector<8x128xf32>
    %144 = tpu.matmul %141, %143, %cst_77 {dimension_numbers = #tpu.dot_dimension_numbers<[1], [0], [0], [1], [0, 0, 1, 1], [], []>} : vector<8x256xf32>, vector<256x128xf32>, vector<8x128xf32> -> vector<8x128xf32>
    %c0_78 = arith.constant 0 : index
    %c0_79 = arith.constant 0 : index
    %c0_80 = arith.constant 0 : index
    %145 = vector.load %arg16[%c0_78, %c0_79, %c0_80] : memref<2x1x128xf32, #tpu.memory_space<vmem>>, vector<1x1x128xf32>
    %146 = vector.shape_cast %145 : vector<1x1x128xf32> to vector<1x128xf32>
    %147 = vector.broadcast %146 : vector<1x128xf32> to vector<8x128xf32>
    %148 = arith.addf %144, %147 : vector<8x128xf32>
    %149 = arith.addf %132, %148 : vector<8x128xf32>
    %c0_81 = arith.constant 0 : index
    %c0_82 = arith.constant 0 : index
    %c0_83 = arith.constant 0 : index
    %150 = vector.load %arg17[%c0_81, %c0_82, %c0_83] : memref<2x1x128xf32, #tpu.memory_space<vmem>>, vector<1x1x128xf32>
    %151 = vector.shape_cast %150 : vector<1x1x128xf32> to vector<1x128xf32>
    %c0_84 = arith.constant 0 : index
    %c0_85 = arith.constant 0 : index
    %c0_86 = arith.constant 0 : index
    %152 = vector.load %arg18[%c0_84, %c0_85, %c0_86] : memref<2x1x128xf32, #tpu.memory_space<vmem>>, vector<1x1x128xf32>
    %153 = vector.shape_cast %152 : vector<1x1x128xf32> to vector<1x128xf32>
    %cst_87 = arith.constant dense<0.000000e+00> : vector<8xf32>
    %154 = vector.multi_reduction <add>, %149, %cst_87 [1] : vector<8x128xf32> to vector<8xf32>
    %155 = vector.shape_cast %154 : vector<8xf32> to vector<8x1xf32>
    %cst_88 = arith.constant 1.280000e+02 : f32
    %156 = vector.broadcast %cst_88 : f32 to vector<8x1xf32>
    %157 = arith.divf %155, %156 : vector<8x1xf32>
    %158 = vector.broadcast %157 : vector<8x1xf32> to vector<8x128xf32>
    %159 = arith.subf %149, %158 : vector<8x128xf32>
    %160 = arith.mulf %159, %159 : vector<8x128xf32>
    %cst_89 = arith.constant dense<0.000000e+00> : vector<8xf32>
    %161 = vector.multi_reduction <add>, %160, %cst_89 [1] : vector<8x128xf32> to vector<8xf32>
    %162 = vector.shape_cast %161 : vector<8xf32> to vector<8x1xf32>
    %cst_90 = arith.constant 1.280000e+02 : f32
    %163 = vector.broadcast %cst_90 : f32 to vector<8x1xf32>
    %164 = arith.divf %162, %163 : vector<8x1xf32>
    %cst_91 = arith.constant 9.99999974E-6 : f32
    %165 = vector.broadcast %cst_91 : f32 to vector<8x1xf32>
    %166 = arith.addf %164, %165 : vector<8x1xf32>
    %167 = math.rsqrt %166 : vector<8x1xf32>
    %168 = vector.broadcast %167 : vector<8x1xf32> to vector<8x128xf32>
    %169 = arith.mulf %159, %168 : vector<8x128xf32>
    %170 = vector.broadcast %151 : vector<1x128xf32> to vector<8x128xf32>
    %171 = arith.mulf %169, %170 : vector<8x128xf32>
    %172 = vector.broadcast %153 : vector<1x128xf32> to vector<8x128xf32>
    %173 = arith.addf %171, %172 : vector<8x128xf32>
    %c1 = arith.constant 1 : index
    %c0_92 = arith.constant 0 : index
    %c0_93 = arith.constant 0 : index
    %174 = vector.load %arg3[%c1, %c0_92, %c0_93] : memref<2x128x128xf32, #tpu.memory_space<vmem>>, vector<1x128x128xf32>
    %175 = vector.shape_cast %174 : vector<1x128x128xf32> to vector<128x128xf32>
    %c1_94 = arith.constant 1 : index
    %c0_95 = arith.constant 0 : index
    %c0_96 = arith.constant 0 : index
    %176 = vector.load %arg5[%c1_94, %c0_95, %c0_96] : memref<2x128x128xf32, #tpu.memory_space<vmem>>, vector<1x128x128xf32>
    %177 = vector.shape_cast %176 : vector<1x128x128xf32> to vector<128x128xf32>
    %c1_97 = arith.constant 1 : index
    %c0_98 = arith.constant 0 : index
    %c0_99 = arith.constant 0 : index
    %178 = vector.load %arg7[%c1_97, %c0_98, %c0_99] : memref<2x128x128xf32, #tpu.memory_space<vmem>>, vector<1x128x128xf32>
    %179 = vector.shape_cast %178 : vector<1x128x128xf32> to vector<128x128xf32>
    %c1_100 = arith.constant 1 : index
    %c0_101 = arith.constant 0 : index
    %c0_102 = arith.constant 0 : index
    %180 = vector.load %arg9[%c1_100, %c0_101, %c0_102] : memref<2x128x128xf32, #tpu.memory_space<vmem>>, vector<1x128x128xf32>
    %181 = vector.shape_cast %180 : vector<1x128x128xf32> to vector<128x128xf32>
    %c1_103 = arith.constant 1 : index
    %c0_104 = arith.constant 0 : index
    %c0_105 = arith.constant 0 : index
    %182 = vector.load %arg4[%c1_103, %c0_104, %c0_105] : memref<2x1x128xf32, #tpu.memory_space<vmem>>, vector<1x1x128xf32>
    %183 = vector.shape_cast %182 : vector<1x1x128xf32> to vector<1x128xf32>
    %c1_106 = arith.constant 1 : index
    %c0_107 = arith.constant 0 : index
    %c0_108 = arith.constant 0 : index
    %184 = vector.load %arg6[%c1_106, %c0_107, %c0_108] : memref<2x1x128xf32, #tpu.memory_space<vmem>>, vector<1x1x128xf32>
    %185 = vector.shape_cast %184 : vector<1x1x128xf32> to vector<1x128xf32>
    %c1_109 = arith.constant 1 : index
    %c0_110 = arith.constant 0 : index
    %c0_111 = arith.constant 0 : index
    %186 = vector.load %arg8[%c1_109, %c0_110, %c0_111] : memref<2x1x128xf32, #tpu.memory_space<vmem>>, vector<1x1x128xf32>
    %187 = vector.shape_cast %186 : vector<1x1x128xf32> to vector<1x128xf32>
    %c1_112 = arith.constant 1 : index
    %c0_113 = arith.constant 0 : index
    %c0_114 = arith.constant 0 : index
    %188 = vector.load %arg10[%c1_112, %c0_113, %c0_114] : memref<2x1x128xf32, #tpu.memory_space<vmem>>, vector<1x1x128xf32>
    %189 = vector.shape_cast %188 : vector<1x1x128xf32> to vector<1x128xf32>
    %cst_115 = arith.constant dense<0.000000e+00> : vector<8x128xf32>
    %190 = tpu.matmul %173, %175, %cst_115 {dimension_numbers = #tpu.dot_dimension_numbers<[1], [0], [0], [1], [0, 0, 1, 1], [], []>} : vector<8x128xf32>, vector<128x128xf32>, vector<8x128xf32> -> vector<8x128xf32>
    %191 = vector.broadcast %183 : vector<1x128xf32> to vector<8x128xf32>
    %192 = arith.addf %190, %191 : vector<8x128xf32>
    %cst_116 = arith.constant dense<0.000000e+00> : vector<8x128xf32>
    %193 = tpu.matmul %173, %177, %cst_116 {dimension_numbers = #tpu.dot_dimension_numbers<[1], [0], [0], [1], [0, 0, 1, 1], [], []>} : vector<8x128xf32>, vector<128x128xf32>, vector<8x128xf32> -> vector<8x128xf32>
    %194 = vector.broadcast %185 : vector<1x128xf32> to vector<8x128xf32>
    %195 = arith.addf %193, %194 : vector<8x128xf32>
    %cst_117 = arith.constant dense<0.000000e+00> : vector<8x128xf32>
    %196 = tpu.matmul %173, %179, %cst_117 {dimension_numbers = #tpu.dot_dimension_numbers<[1], [0], [0], [1], [0, 0, 1, 1], [], []>} : vector<8x128xf32>, vector<128x128xf32>, vector<8x128xf32> -> vector<8x128xf32>
    %197 = vector.broadcast %187 : vector<1x128xf32> to vector<8x128xf32>
    %198 = arith.addf %196, %197 : vector<8x128xf32>
    %cst_118 = arith.constant 0.000000e+00 : f32
    %199 = vector.broadcast %cst_118 : f32 to vector<8x128xf32>
    %200 = vector.extract_strided_slice %192 {offsets = [0, 0], sizes = [8, 32], strides = [1, 1]} : vector<8x128xf32> to vector<8x32xf32>
    %201 = vector.extract_strided_slice %195 {offsets = [0, 0], sizes = [8, 32], strides = [1, 1]} : vector<8x128xf32> to vector<8x32xf32>
    %202 = vector.extract_strided_slice %198 {offsets = [0, 0], sizes = [8, 32], strides = [1, 1]} : vector<8x128xf32> to vector<8x32xf32>
    %cst_119 = arith.constant dense<0.000000e+00> : vector<8x8xf32>
    %203 = tpu.matmul %200, %201, %cst_119 {dimension_numbers = #tpu.dot_dimension_numbers<[1], [1], [0], [0], [0, 0, 1, 0], [], []>} : vector<8x32xf32>, vector<8x32xf32>, vector<8x8xf32> -> vector<8x8xf32>
    %cst_120 = arith.constant 0.176776692 : f32
    %204 = vector.broadcast %cst_120 : f32 to vector<8x8xf32>
    %205 = arith.mulf %203, %204 : vector<8x8xf32>
    %cst_121 = arith.constant dense<0xFF800000> : vector<8xf32>
    %206 = vector.multi_reduction <maximumf>, %205, %cst_121 [1] : vector<8x8xf32> to vector<8xf32>
    %207 = vector.shape_cast %206 : vector<8xf32> to vector<8x1xf32>
    %208 = vector.broadcast %207 : vector<8x1xf32> to vector<8x8xf32>
    %209 = arith.subf %205, %208 : vector<8x8xf32>
    %210 = math.exp %209 : vector<8x8xf32>
    %cst_122 = arith.constant dense<0.000000e+00> : vector<8xf32>
    %211 = vector.multi_reduction <add>, %210, %cst_122 [1] : vector<8x8xf32> to vector<8xf32>
    %212 = vector.shape_cast %211 : vector<8xf32> to vector<8x1xf32>
    %213 = vector.broadcast %212 : vector<8x1xf32> to vector<8x8xf32>
    %214 = arith.divf %210, %213 : vector<8x8xf32>
    %cst_123 = arith.constant dense<0.000000e+00> : vector<8x32xf32>
    %215 = tpu.matmul %214, %202, %cst_123 {dimension_numbers = #tpu.dot_dimension_numbers<[1], [0], [0], [1], [0, 0, 1, 1], [], []>} : vector<8x8xf32>, vector<8x32xf32>, vector<8x32xf32> -> vector<8x32xf32>
    %216 = vector.extract_strided_slice %181 {offsets = [0, 0], sizes = [32, 128], strides = [1, 1]} : vector<128x128xf32> to vector<32x128xf32>
    %cst_124 = arith.constant dense<0.000000e+00> : vector<8x128xf32>
    %217 = tpu.matmul %215, %216, %cst_124 {dimension_numbers = #tpu.dot_dimension_numbers<[1], [0], [0], [1], [0, 0, 1, 1], [], []>} : vector<8x32xf32>, vector<32x128xf32>, vector<8x128xf32> -> vector<8x128xf32>
    %218 = arith.addf %199, %217 : vector<8x128xf32>
    %219 = vector.extract_strided_slice %192 {offsets = [0, 32], sizes = [8, 32], strides = [1, 1]} : vector<8x128xf32> to vector<8x32xf32>
    %220 = vector.extract_strided_slice %195 {offsets = [0, 32], sizes = [8, 32], strides = [1, 1]} : vector<8x128xf32> to vector<8x32xf32>
    %221 = vector.extract_strided_slice %198 {offsets = [0, 32], sizes = [8, 32], strides = [1, 1]} : vector<8x128xf32> to vector<8x32xf32>
    %cst_125 = arith.constant dense<0.000000e+00> : vector<8x8xf32>
    %222 = tpu.matmul %219, %220, %cst_125 {dimension_numbers = #tpu.dot_dimension_numbers<[1], [1], [0], [0], [0, 0, 1, 0], [], []>} : vector<8x32xf32>, vector<8x32xf32>, vector<8x8xf32> -> vector<8x8xf32>
    %cst_126 = arith.constant 0.176776692 : f32
    %223 = vector.broadcast %cst_126 : f32 to vector<8x8xf32>
    %224 = arith.mulf %222, %223 : vector<8x8xf32>
    %cst_127 = arith.constant dense<0xFF800000> : vector<8xf32>
    %225 = vector.multi_reduction <maximumf>, %224, %cst_127 [1] : vector<8x8xf32> to vector<8xf32>
    %226 = vector.shape_cast %225 : vector<8xf32> to vector<8x1xf32>
    %227 = vector.broadcast %226 : vector<8x1xf32> to vector<8x8xf32>
    %228 = arith.subf %224, %227 : vector<8x8xf32>
    %229 = math.exp %228 : vector<8x8xf32>
    %cst_128 = arith.constant dense<0.000000e+00> : vector<8xf32>
    %230 = vector.multi_reduction <add>, %229, %cst_128 [1] : vector<8x8xf32> to vector<8xf32>
    %231 = vector.shape_cast %230 : vector<8xf32> to vector<8x1xf32>
    %232 = vector.broadcast %231 : vector<8x1xf32> to vector<8x8xf32>
    %233 = arith.divf %229, %232 : vector<8x8xf32>
    %cst_129 = arith.constant dense<0.000000e+00> : vector<8x32xf32>
    %234 = tpu.matmul %233, %221, %cst_129 {dimension_numbers = #tpu.dot_dimension_numbers<[1], [0], [0], [1], [0, 0, 1, 1], [], []>} : vector<8x8xf32>, vector<8x32xf32>, vector<8x32xf32> -> vector<8x32xf32>
    %235 = vector.extract_strided_slice %181 {offsets = [32, 0], sizes = [32, 128], strides = [1, 1]} : vector<128x128xf32> to vector<32x128xf32>
    %cst_130 = arith.constant dense<0.000000e+00> : vector<8x128xf32>
    %236 = tpu.matmul %234, %235, %cst_130 {dimension_numbers = #tpu.dot_dimension_numbers<[1], [0], [0], [1], [0, 0, 1, 1], [], []>} : vector<8x32xf32>, vector<32x128xf32>, vector<8x128xf32> -> vector<8x128xf32>
    %237 = arith.addf %218, %236 : vector<8x128xf32>
    %238 = vector.extract_strided_slice %192 {offsets = [0, 64], sizes = [8, 32], strides = [1, 1]} : vector<8x128xf32> to vector<8x32xf32>
    %239 = vector.extract_strided_slice %195 {offsets = [0, 64], sizes = [8, 32], strides = [1, 1]} : vector<8x128xf32> to vector<8x32xf32>
    %240 = vector.extract_strided_slice %198 {offsets = [0, 64], sizes = [8, 32], strides = [1, 1]} : vector<8x128xf32> to vector<8x32xf32>
    %cst_131 = arith.constant dense<0.000000e+00> : vector<8x8xf32>
    %241 = tpu.matmul %238, %239, %cst_131 {dimension_numbers = #tpu.dot_dimension_numbers<[1], [1], [0], [0], [0, 0, 1, 0], [], []>} : vector<8x32xf32>, vector<8x32xf32>, vector<8x8xf32> -> vector<8x8xf32>
    %cst_132 = arith.constant 0.176776692 : f32
    %242 = vector.broadcast %cst_132 : f32 to vector<8x8xf32>
    %243 = arith.mulf %241, %242 : vector<8x8xf32>
    %cst_133 = arith.constant dense<0xFF800000> : vector<8xf32>
    %244 = vector.multi_reduction <maximumf>, %243, %cst_133 [1] : vector<8x8xf32> to vector<8xf32>
    %245 = vector.shape_cast %244 : vector<8xf32> to vector<8x1xf32>
    %246 = vector.broadcast %245 : vector<8x1xf32> to vector<8x8xf32>
    %247 = arith.subf %243, %246 : vector<8x8xf32>
    %248 = math.exp %247 : vector<8x8xf32>
    %cst_134 = arith.constant dense<0.000000e+00> : vector<8xf32>
    %249 = vector.multi_reduction <add>, %248, %cst_134 [1] : vector<8x8xf32> to vector<8xf32>
    %250 = vector.shape_cast %249 : vector<8xf32> to vector<8x1xf32>
    %251 = vector.broadcast %250 : vector<8x1xf32> to vector<8x8xf32>
    %252 = arith.divf %248, %251 : vector<8x8xf32>
    %cst_135 = arith.constant dense<0.000000e+00> : vector<8x32xf32>
    %253 = tpu.matmul %252, %240, %cst_135 {dimension_numbers = #tpu.dot_dimension_numbers<[1], [0], [0], [1], [0, 0, 1, 1], [], []>} : vector<8x8xf32>, vector<8x32xf32>, vector<8x32xf32> -> vector<8x32xf32>
    %254 = vector.extract_strided_slice %181 {offsets = [64, 0], sizes = [32, 128], strides = [1, 1]} : vector<128x128xf32> to vector<32x128xf32>
    %cst_136 = arith.constant dense<0.000000e+00> : vector<8x128xf32>
    %255 = tpu.matmul %253, %254, %cst_136 {dimension_numbers = #tpu.dot_dimension_numbers<[1], [0], [0], [1], [0, 0, 1, 1], [], []>} : vector<8x32xf32>, vector<32x128xf32>, vector<8x128xf32> -> vector<8x128xf32>
    %256 = arith.addf %237, %255 : vector<8x128xf32>
    %257 = vector.extract_strided_slice %192 {offsets = [0, 96], sizes = [8, 32], strides = [1, 1]} : vector<8x128xf32> to vector<8x32xf32>
    %258 = vector.extract_strided_slice %195 {offsets = [0, 96], sizes = [8, 32], strides = [1, 1]} : vector<8x128xf32> to vector<8x32xf32>
    %259 = vector.extract_strided_slice %198 {offsets = [0, 96], sizes = [8, 32], strides = [1, 1]} : vector<8x128xf32> to vector<8x32xf32>
    %cst_137 = arith.constant dense<0.000000e+00> : vector<8x8xf32>
    %260 = tpu.matmul %257, %258, %cst_137 {dimension_numbers = #tpu.dot_dimension_numbers<[1], [1], [0], [0], [0, 0, 1, 0], [], []>} : vector<8x32xf32>, vector<8x32xf32>, vector<8x8xf32> -> vector<8x8xf32>
    %cst_138 = arith.constant 0.176776692 : f32
    %261 = vector.broadcast %cst_138 : f32 to vector<8x8xf32>
    %262 = arith.mulf %260, %261 : vector<8x8xf32>
    %cst_139 = arith.constant dense<0xFF800000> : vector<8xf32>
    %263 = vector.multi_reduction <maximumf>, %262, %cst_139 [1] : vector<8x8xf32> to vector<8xf32>
    %264 = vector.shape_cast %263 : vector<8xf32> to vector<8x1xf32>
    %265 = vector.broadcast %264 : vector<8x1xf32> to vector<8x8xf32>
    %266 = arith.subf %262, %265 : vector<8x8xf32>
    %267 = math.exp %266 : vector<8x8xf32>
    %cst_140 = arith.constant dense<0.000000e+00> : vector<8xf32>
    %268 = vector.multi_reduction <add>, %267, %cst_140 [1] : vector<8x8xf32> to vector<8xf32>
    %269 = vector.shape_cast %268 : vector<8xf32> to vector<8x1xf32>
    %270 = vector.broadcast %269 : vector<8x1xf32> to vector<8x8xf32>
    %271 = arith.divf %267, %270 : vector<8x8xf32>
    %cst_141 = arith.constant dense<0.000000e+00> : vector<8x32xf32>
    %272 = tpu.matmul %271, %259, %cst_141 {dimension_numbers = #tpu.dot_dimension_numbers<[1], [0], [0], [1], [0, 0, 1, 1], [], []>} : vector<8x8xf32>, vector<8x32xf32>, vector<8x32xf32> -> vector<8x32xf32>
    %273 = vector.extract_strided_slice %181 {offsets = [96, 0], sizes = [32, 128], strides = [1, 1]} : vector<128x128xf32> to vector<32x128xf32>
    %cst_142 = arith.constant dense<0.000000e+00> : vector<8x128xf32>
    %274 = tpu.matmul %272, %273, %cst_142 {dimension_numbers = #tpu.dot_dimension_numbers<[1], [0], [0], [1], [0, 0, 1, 1], [], []>} : vector<8x32xf32>, vector<32x128xf32>, vector<8x128xf32> -> vector<8x128xf32>
    %275 = arith.addf %256, %274 : vector<8x128xf32>
    %276 = vector.broadcast %189 : vector<1x128xf32> to vector<8x128xf32>
    %277 = arith.addf %275, %276 : vector<8x128xf32>
    %278 = arith.addf %173, %277 : vector<8x128xf32>
    %c1_143 = arith.constant 1 : index
    %c0_144 = arith.constant 0 : index
    %c0_145 = arith.constant 0 : index
    %279 = vector.load %arg11[%c1_143, %c0_144, %c0_145] : memref<2x1x128xf32, #tpu.memory_space<vmem>>, vector<1x1x128xf32>
    %280 = vector.shape_cast %279 : vector<1x1x128xf32> to vector<1x128xf32>
    %c1_146 = arith.constant 1 : index
    %c0_147 = arith.constant 0 : index
    %c0_148 = arith.constant 0 : index
    %281 = vector.load %arg12[%c1_146, %c0_147, %c0_148] : memref<2x1x128xf32, #tpu.memory_space<vmem>>, vector<1x1x128xf32>
    %282 = vector.shape_cast %281 : vector<1x1x128xf32> to vector<1x128xf32>
    %cst_149 = arith.constant dense<0.000000e+00> : vector<8xf32>
    %283 = vector.multi_reduction <add>, %278, %cst_149 [1] : vector<8x128xf32> to vector<8xf32>
    %284 = vector.shape_cast %283 : vector<8xf32> to vector<8x1xf32>
    %cst_150 = arith.constant 1.280000e+02 : f32
    %285 = vector.broadcast %cst_150 : f32 to vector<8x1xf32>
    %286 = arith.divf %284, %285 : vector<8x1xf32>
    %287 = vector.broadcast %286 : vector<8x1xf32> to vector<8x128xf32>
    %288 = arith.subf %278, %287 : vector<8x128xf32>
    %289 = arith.mulf %288, %288 : vector<8x128xf32>
    %cst_151 = arith.constant dense<0.000000e+00> : vector<8xf32>
    %290 = vector.multi_reduction <add>, %289, %cst_151 [1] : vector<8x128xf32> to vector<8xf32>
    %291 = vector.shape_cast %290 : vector<8xf32> to vector<8x1xf32>
    %cst_152 = arith.constant 1.280000e+02 : f32
    %292 = vector.broadcast %cst_152 : f32 to vector<8x1xf32>
    %293 = arith.divf %291, %292 : vector<8x1xf32>
    %cst_153 = arith.constant 9.99999974E-6 : f32
    %294 = vector.broadcast %cst_153 : f32 to vector<8x1xf32>
    %295 = arith.addf %293, %294 : vector<8x1xf32>
    %296 = math.rsqrt %295 : vector<8x1xf32>
    %297 = vector.broadcast %296 : vector<8x1xf32> to vector<8x128xf32>
    %298 = arith.mulf %288, %297 : vector<8x128xf32>
    %299 = vector.broadcast %280 : vector<1x128xf32> to vector<8x128xf32>
    %300 = arith.mulf %298, %299 : vector<8x128xf32>
    %301 = vector.broadcast %282 : vector<1x128xf32> to vector<8x128xf32>
    %302 = arith.addf %300, %301 : vector<8x128xf32>
    %c1_154 = arith.constant 1 : index
    %c0_155 = arith.constant 0 : index
    %c0_156 = arith.constant 0 : index
    %303 = vector.load %arg13[%c1_154, %c0_155, %c0_156] : memref<2x128x256xf32, #tpu.memory_space<vmem>>, vector<1x128x256xf32>
    %304 = vector.shape_cast %303 : vector<1x128x256xf32> to vector<128x256xf32>
    %cst_157 = arith.constant dense<0.000000e+00> : vector<8x256xf32>
    %305 = tpu.matmul %302, %304, %cst_157 {dimension_numbers = #tpu.dot_dimension_numbers<[1], [0], [0], [1], [0, 0, 1, 1], [], []>} : vector<8x128xf32>, vector<128x256xf32>, vector<8x256xf32> -> vector<8x256xf32>
    %c1_158 = arith.constant 1 : index
    %c0_159 = arith.constant 0 : index
    %c0_160 = arith.constant 0 : index
    %306 = vector.load %arg14[%c1_158, %c0_159, %c0_160] : memref<2x1x256xf32, #tpu.memory_space<vmem>>, vector<1x1x256xf32>
    %307 = vector.shape_cast %306 : vector<1x1x256xf32> to vector<1x256xf32>
    %308 = vector.broadcast %307 : vector<1x256xf32> to vector<8x256xf32>
    %309 = arith.addf %305, %308 : vector<8x256xf32>
    %cst_161 = arith.constant 0.000000e+00 : f32
    %310 = vector.broadcast %cst_161 : f32 to vector<8x256xf32>
    %311 = arith.maximumf %309, %310 : vector<8x256xf32>
    %c1_162 = arith.constant 1 : index
    %c0_163 = arith.constant 0 : index
    %c0_164 = arith.constant 0 : index
    %312 = vector.load %arg15[%c1_162, %c0_163, %c0_164] : memref<2x256x128xf32, #tpu.memory_space<vmem>>, vector<1x256x128xf32>
    %313 = vector.shape_cast %312 : vector<1x256x128xf32> to vector<256x128xf32>
    %cst_165 = arith.constant dense<0.000000e+00> : vector<8x128xf32>
    %314 = tpu.matmul %311, %313, %cst_165 {dimension_numbers = #tpu.dot_dimension_numbers<[1], [0], [0], [1], [0, 0, 1, 1], [], []>} : vector<8x256xf32>, vector<256x128xf32>, vector<8x128xf32> -> vector<8x128xf32>
    %c1_166 = arith.constant 1 : index
    %c0_167 = arith.constant 0 : index
    %c0_168 = arith.constant 0 : index
    %315 = vector.load %arg16[%c1_166, %c0_167, %c0_168] : memref<2x1x128xf32, #tpu.memory_space<vmem>>, vector<1x1x128xf32>
    %316 = vector.shape_cast %315 : vector<1x1x128xf32> to vector<1x128xf32>
    %317 = vector.broadcast %316 : vector<1x128xf32> to vector<8x128xf32>
    %318 = arith.addf %314, %317 : vector<8x128xf32>
    %319 = arith.addf %302, %318 : vector<8x128xf32>
    %c1_169 = arith.constant 1 : index
    %c0_170 = arith.constant 0 : index
    %c0_171 = arith.constant 0 : index
    %320 = vector.load %arg17[%c1_169, %c0_170, %c0_171] : memref<2x1x128xf32, #tpu.memory_space<vmem>>, vector<1x1x128xf32>
    %321 = vector.shape_cast %320 : vector<1x1x128xf32> to vector<1x128xf32>
    %c1_172 = arith.constant 1 : index
    %c0_173 = arith.constant 0 : index
    %c0_174 = arith.constant 0 : index
    %322 = vector.load %arg18[%c1_172, %c0_173, %c0_174] : memref<2x1x128xf32, #tpu.memory_space<vmem>>, vector<1x1x128xf32>
    %323 = vector.shape_cast %322 : vector<1x1x128xf32> to vector<1x128xf32>
    %cst_175 = arith.constant dense<0.000000e+00> : vector<8xf32>
    %324 = vector.multi_reduction <add>, %319, %cst_175 [1] : vector<8x128xf32> to vector<8xf32>
    %325 = vector.shape_cast %324 : vector<8xf32> to vector<8x1xf32>
    %cst_176 = arith.constant 1.280000e+02 : f32
    %326 = vector.broadcast %cst_176 : f32 to vector<8x1xf32>
    %327 = arith.divf %325, %326 : vector<8x1xf32>
    %328 = vector.broadcast %327 : vector<8x1xf32> to vector<8x128xf32>
    %329 = arith.subf %319, %328 : vector<8x128xf32>
    %330 = arith.mulf %329, %329 : vector<8x128xf32>
    %cst_177 = arith.constant dense<0.000000e+00> : vector<8xf32>
    %331 = vector.multi_reduction <add>, %330, %cst_177 [1] : vector<8x128xf32> to vector<8xf32>
    %332 = vector.shape_cast %331 : vector<8xf32> to vector<8x1xf32>
    %cst_178 = arith.constant 1.280000e+02 : f32
    %333 = vector.broadcast %cst_178 : f32 to vector<8x1xf32>
    %334 = arith.divf %332, %333 : vector<8x1xf32>
    %cst_179 = arith.constant 9.99999974E-6 : f32
    %335 = vector.broadcast %cst_179 : f32 to vector<8x1xf32>
    %336 = arith.addf %334, %335 : vector<8x1xf32>
    %337 = math.rsqrt %336 : vector<8x1xf32>
    %338 = vector.broadcast %337 : vector<8x1xf32> to vector<8x128xf32>
    %339 = arith.mulf %329, %338 : vector<8x128xf32>
    %340 = vector.broadcast %321 : vector<1x128xf32> to vector<8x128xf32>
    %341 = arith.mulf %339, %340 : vector<8x128xf32>
    %342 = vector.broadcast %323 : vector<1x128xf32> to vector<8x128xf32>
    %343 = arith.addf %341, %342 : vector<8x128xf32>
    %c0_180 = arith.constant 0 : index
    %c0_181 = arith.constant 0 : index
    %c0_182 = arith.constant 0 : index
    %344 = vector.load %arg19[%c0_180, %c0_181, %c0_182] : memref<1x8x128xf32, #tpu.memory_space<vmem>>, vector<1x8x128xf32>
    %345 = vector.shape_cast %344 : vector<1x8x128xf32> to vector<8x128xf32>
    %346 = vector.shape_cast %343 : vector<8x128xf32> to vector<1x8x128xf32>
    tpu.vector_store %arg19[%c0_180, %c0_181, %c0_182], %346 {strides = array<i32>} : memref<1x8x128xf32, #tpu.memory_space<vmem>>, vector<1x8x128xf32>,
    return
  }
  func.func @transform_0(%arg0: i32) -> (i32, i32, i32) {
    %c0_i32 = arith.constant 0 : i32
    %c0_i32_0 = arith.constant 0 : i32
    %c0_i32_1 = arith.constant 0 : i32
    return %arg0, %c0_i32, %c0_i32_0 : i32, i32, i32
  }
  func.func @transform_1(%arg0: i32) -> (i32, i32) {
    %c0_i32 = arith.constant 0 : i32
    %c0_i32_0 = arith.constant 0 : i32
    %c0_i32_1 = arith.constant 0 : i32
    return %c0_i32, %c0_i32_0 : i32, i32
  }
  func.func @transform_2(%arg0: i32) -> (i32, i32, i32) {
    %c0_i32 = arith.constant 0 : i32
    %c0_i32_0 = arith.constant 0 : i32
    %c0_i32_1 = arith.constant 0 : i32
    %c0_i32_2 = arith.constant 0 : i32
    return %c0_i32, %c0_i32_0, %c0_i32_1 : i32, i32, i32
  }
  func.func @transform_3(%arg0: i32) -> (i32, i32, i32) {
    %c0_i32 = arith.constant 0 : i32
    %c0_i32_0 = arith.constant 0 : i32
    %c0_i32_1 = arith.constant 0 : i32
    %c0_i32_2 = arith.constant 0 : i32
    return %c0_i32, %c0_i32_0, %c0_i32_1 : i32, i32, i32
  }
  func.func @transform_4(%arg0: i32) -> (i32, i32, i32) {
    %c0_i32 = arith.constant 0 : i32
    %c0_i32_0 = arith.constant 0 : i32
    %c0_i32_1 = arith.constant 0 : i32
    %c0_i32_2 = arith.constant 0 : i32
    return %c0_i32, %c0_i32_0, %c0_i32_1 : i32, i32, i32
  }
  func.func @transform_5(%arg0: i32) -> (i32, i32, i32) {
    %c0_i32 = arith.constant 0 : i32
    %c0_i32_0 = arith.constant 0 : i32
    %c0_i32_1 = arith.constant 0 : i32
    %c0_i32_2 = arith.constant 0 : i32
    return %c0_i32, %c0_i32_0, %c0_i32_1 : i32, i32, i32
  }
  func.func @transform_6(%arg0: i32) -> (i32, i32, i32) {
    %c0_i32 = arith.constant 0 : i32
    %c0_i32_0 = arith.constant 0 : i32
    %c0_i32_1 = arith.constant 0 : i32
    %c0_i32_2 = arith.constant 0 : i32
    return %c0_i32, %c0_i32_0, %c0_i32_1 : i32, i32, i32
  }
  func.func @transform_7(%arg0: i32) -> (i32, i32, i32) {
    %c0_i32 = arith.constant 0 : i32
    %c0_i32_0 = arith.constant 0 : i32
    %c0_i32_1 = arith.constant 0 : i32
    %c0_i32_2 = arith.constant 0 : i32
    return %c0_i32, %c0_i32_0, %c0_i32_1 : i32, i32, i32
  }
  func.func @transform_8(%arg0: i32) -> (i32, i32, i32) {
    %c0_i32 = arith.constant 0 : i32
    %c0_i32_0 = arith.constant 0 : i32
    %c0_i32_1 = arith.constant 0 : i32
    %c0_i32_2 = arith.constant 0 : i32
    return %c0_i32, %c0_i32_0, %c0_i32_1 : i32, i32, i32
  }
  func.func @transform_9(%arg0: i32) -> (i32, i32, i32) {
    %c0_i32 = arith.constant 0 : i32
    %c0_i32_0 = arith.constant 0 : i32
    %c0_i32_1 = arith.constant 0 : i32
    %c0_i32_2 = arith.constant 0 : i32
    return %c0_i32, %c0_i32_0, %c0_i32_1 : i32, i32, i32
  }
  func.func @transform_10(%arg0: i32) -> (i32, i32, i32) {
    %c0_i32 = arith.constant 0 : i32
    %c0_i32_0 = arith.constant 0 : i32
    %c0_i32_1 = arith.constant 0 : i32
    %c0_i32_2 = arith.constant 0 : i32
    return %c0_i32, %c0_i32_0, %c0_i32_1 : i32, i32, i32
  }
  func.func @transform_11(%arg0: i32) -> (i32, i32, i32) {
    %c0_i32 = arith.constant 0 : i32
    %c0_i32_0 = arith.constant 0 : i32
    %c0_i32_1 = arith.constant 0 : i32
    %c0_i32_2 = arith.constant 0 : i32
    return %c0_i32, %c0_i32_0, %c0_i32_1 : i32, i32, i32
  }
  func.func @transform_12(%arg0: i32) -> (i32, i32, i32) {
    %c0_i32 = arith.constant 0 : i32
    %c0_i32_0 = arith.constant 0 : i32
    %c0_i32_1 = arith.constant 0 : i32
    %c0_i32_2 = arith.constant 0 : i32
    return %c0_i32, %c0_i32_0, %c0_i32_1 : i32, i32, i32
  }
  func.func @transform_13(%arg0: i32) -> (i32, i32, i32) {
    %c0_i32 = arith.constant 0 : i32
    %c0_i32_0 = arith.constant 0 : i32
    %c0_i32_1 = arith.constant 0 : i32
    %c0_i32_2 = arith.constant 0 : i32
    return %c0_i32, %c0_i32_0, %c0_i32_1 : i32, i32, i32
  }
  func.func @transform_14(%arg0: i32) -> (i32, i32, i32) {
    %c0_i32 = arith.constant 0 : i32
    %c0_i32_0 = arith.constant 0 : i32
    %c0_i32_1 = arith.constant 0 : i32
    %c0_i32_2 = arith.constant 0 : i32
    return %c0_i32, %c0_i32_0, %c0_i32_1 : i32, i32, i32
  }
  func.func @transform_15(%arg0: i32) -> (i32, i32, i32) {
    %c0_i32 = arith.constant 0 : i32
    %c0_i32_0 = arith.constant 0 : i32
    %c0_i32_1 = arith.constant 0 : i32
    %c0_i32_2 = arith.constant 0 : i32
    return %c0_i32, %c0_i32_0, %c0_i32_1 : i32, i32, i32
  }
  func.func @transform_16(%arg0: i32) -> (i32, i32, i32) {
    %c0_i32 = arith.constant 0 : i32
    %c0_i32_0 = arith.constant 0 : i32
    %c0_i32_1 = arith.constant 0 : i32
    %c0_i32_2 = arith.constant 0 : i32
    return %c0_i32, %c0_i32_0, %c0_i32_1 : i32, i32, i32
  }
  func.func @transform_17(%arg0: i32) -> (i32, i32, i32) {
    %c0_i32 = arith.constant 0 : i32
    %c0_i32_0 = arith.constant 0 : i32
    %c0_i32_1 = arith.constant 0 : i32
    %c0_i32_2 = arith.constant 0 : i32
    return %c0_i32, %c0_i32_0, %c0_i32_1 : i32, i32, i32
  }
  func.func @transform_18(%arg0: i32) -> (i32, i32, i32) {
    %c0_i32 = arith.constant 0 : i32
    %c0_i32_0 = arith.constant 0 : i32
    %c0_i32_1 = arith.constant 0 : i32
    return %arg0, %c0_i32, %c0_i32_0 : i32, i32, i32
  }
}

</mosaic_0001>

<llo_original>
// kernel: tpu_custom_call.1
$region0: #{tpu_custom_call.1}
  #allocation0 [shape = 'u32[]', space=smem, size = 0x4, offset = 0x4, fixed_abs, tag = 'smem constant byte address 0x4 - core index']
  #allocation1 [shape = 'u32[144,128]{1,0:T(1,128)}', space=vmem, size = 0x12000, scoped, tag = 'internal scratch']
  %s0 = inlined_call_operand.hbm [shape: f32[2,8,128], index: 0, kind: input, shape index: {}]
  %s1 = inlined_call_operand.hbm [shape: f32[8,128], index: 1, kind: input, shape index: {}]
  %s2 = inlined_call_operand.hbm [shape: f32[2,128,128], index: 2, kind: input, shape index: {}]
  %s3 = inlined_call_operand.vmem [shape: f32[2,1,128], index: 3, kind: input, shape index: {}]
  %s4 = inlined_call_operand.hbm [shape: f32[2,128,128], index: 4, kind: input, shape index: {}]
  %s5 = inlined_call_operand.vmem [shape: f32[2,1,128], index: 5, kind: input, shape index: {}]
  %s6 = inlined_call_operand.hbm [shape: f32[2,128,128], index: 6, kind: input, shape index: {}]
  %s7 = inlined_call_operand.vmem [shape: f32[2,1,128], index: 7, kind: input, shape index: {}]
  %s8 = inlined_call_operand.hbm [shape: f32[2,128,128], index: 8, kind: input, shape index: {}]
  %s9 = inlined_call_operand.vmem [shape: f32[2,1,128], index: 9, kind: input, shape index: {}]
  %s10 = inlined_call_operand.vmem [shape: f32[2,1,128], index: 10, kind: input, shape index: {}]
  %s11 = inlined_call_operand.vmem [shape: f32[2,1,128], index: 11, kind: input, shape index: {}]
  %s12 = inlined_call_operand.hbm [shape: f32[2,128,256], index: 12, kind: input, shape index: {}]
  %s13 = inlined_call_operand.vmem [shape: f32[2,1,256], index: 13, kind: input, shape index: {}]
  %s14 = inlined_call_operand.hbm [shape: f32[2,256,128], index: 14, kind: input, shape index: {}]
  %s15 = inlined_call_operand.vmem [shape: f32[2,1,128], index: 15, kind: input, shape index: {}]
  %s16 = inlined_call_operand.vmem [shape: f32[2,1,128], index: 16, kind: input, shape index: {}]
  %s17 = inlined_call_operand.vmem [shape: f32[2,1,128], index: 17, kind: input, shape index: {}]
  %s18 = inlined_call_operand.hbm [shape: f32[2,8,128], index: 18, kind: output, shape index: {}]
  %s19 = sld [smem:[#allocation0]]
  $region137: #{tpu_custom_call.1} parent=0
    _
  %s21 = ssub.s32 1, %s19
  %s22 = scalar_select 0, %s21, %s19
  $region1: #{tpu_custom_call.1} parent=0
    #allocation2 [shape = 'u8[8192]{0}', space=vmem, size = 0x2000, scoped, tag = 'input window, operand 0']
    #allocation3 [shape = 's32[2]{0}', space=sflag, size = 0x8, scoped, tag = 'scoped memory for tpu_custom_call.1']
    #allocation4 [shape = 's32[2]{0}', space=sflag, size = 0x8, scoped, tag = 'scoped memory for tpu_custom_call.1']
    #allocation5 [shape = 'u8[4096]{0}', space=vmem, size = 0x1000, scoped, tag = 'input window, operand 1, single buffered']
    #allocation6 [shape = 's32[1]{0}', space=sflag, size = 0x4, scoped, tag = 'scoped memory for tpu_custom_call.1']
    #allocation7 [shape = 'u8[131072]{0}', space=vmem, size = 0x20000, scoped, tag = 'input window, operand 2, single buffered']
    #allocation8 [shape = 'u8[131072]{0}', space=vmem, size = 0x20000, scoped, tag = 'input window, operand 4, single buffered']
    #allocation9 [shape = 's32[1]{0}', space=sflag, size = 0x4, scoped, tag = 'scoped memory for tpu_custom_call.1']
    #allocation10 [shape = 'u8[131072]{0}', space=vmem, size = 0x20000, scoped, tag = 'input window, operand 6, single buffered']
    #allocation11 [shape = 'u8[131072]{0}', space=vmem, size = 0x20000, scoped, tag = 'input window, operand 8, single buffered']
    #allocation12 [shape = 's32[1]{0}', space=sflag, size = 0x4, scoped, tag = 'scoped memory for tpu_custom_call.1']
    #allocation13 [shape = 'u8[262144]{0}', space=vmem, size = 0x40000, scoped, tag = 'input window, operand 12, single buffered']
    #allocation14 [shape = 'u8[262144]{0}', space=vmem, size = 0x40000, scoped, tag = 'input window, operand 14, single buffered']
    #allocation15 [shape = 's32[1]{0}', space=sflag, size = 0x4, scoped, tag = 'scoped memory for tpu_custom_call.1']
    #allocation16 [shape = 'u8[8192]{0}', space=vmem, size = 0x2000, scoped, tag = 'output window, operand 0']
    %23 = vsyncpa [#allocation3], 0
    %s24 = scalar_lea.sflag [#allocation3], 1
    %25 = vsyncpa %s24, 0
    %26 = vsyncpa [#allocation6], 0
    %27 = vsyncpa [#allocation9], 0
    %28 = vsyncpa [#allocation12], 0
    %29 = vsyncpa [#allocation15], 0
    %30 = vsyncpa [#allocation4], 0
    %s31 = scalar_lea.sflag [#allocation4], 1
    %32 = vsyncpa %s31, 0
    loop: start=0, step=1, limit=4
    $region2: #{tpu_custom_call.1} parent=1 // loop_pre_header
      _
    $region3: #{tpu_custom_call.1} parent=1 // loop_header
      %s34 = sphi 0, %s38
      %p35 = scmp.ge.s32.totalorder %s34, 4
      %s44 = sphi 0, %s46
      %s47 = sphi 0, %s44
      %s48 = sphi 0, %s47
      %s64 = sphi 0, %s48
      %s68 = sphi 0, %s68
      %s70 = sphi 0, %s68
      %s71 = sphi 0, %s70
      %s85 = sphi 0, %s71
      %s89 = sphi 0, %s89
      %s91 = sphi 0, %s89
      %s92 = sphi 0, %s91
      %s106 = sphi 0, %s92
      %s110 = sphi 0, %s110
      %s112 = sphi 0, %s110
      %s113 = sphi 0, %s112
      %s127 = sphi 0, %s113
      %s131 = sphi 0, %s131
      %s133 = sphi 0, %s131
      %s134 = sphi 0, %s133
      %s148 = sphi 0, %s134
      %s152 = sphi 0, %s152
      %s154 = sphi 0, %s152
      %s155 = sphi 0, %s154
      %s169 = sphi 0, %s155
      %s173 = sphi 0, %s173
      %s175 = sphi 0, %s173
      %s176 = sphi 0, %s175
      %s190 = sphi 0, %s176
      %s194 = sphi 0, %s194
      %s196 = sphi 0, %s194
      %s197 = sphi 0, %s196
      %s211 = sphi 0, %s197
      %s215 = sphi 0, %s215
      %s217 = sphi 0, %s215
      %s218 = sphi 0, %s217
      %s232 = sphi 0, %s218
      %s236 = sphi 0, %s236
      %s238 = sphi 0, %s236
      %s239 = sphi 0, %s238
      %s253 = sphi 0, %s239
      %s257 = sphi 0, %s257
      %s259 = sphi 0, %s257
      %s260 = sphi 0, %s259
      %s274 = sphi 0, %s260
      %s278 = sphi 0, %s278
      %s280 = sphi 0, %s278
      %s281 = sphi 0, %s280
      %s295 = sphi 0, %s281
      %s299 = sphi 0, %s299
      %s301 = sphi 0, %s299
      %s302 = sphi 0, %s301
      %s316 = sphi 0, %s302
      %s320 = sphi 0, %s320
      %s322 = sphi 0, %s320
      %s323 = sphi 0, %s322
      %s337 = sphi 0, %s323
      %s341 = sphi 0, %s341
      %s343 = sphi 0, %s341
      %s344 = sphi 0, %s343
      %s358 = sphi 0, %s344
      %s362 = sphi 0, %s362
      %s364 = sphi 0, %s362
      %s365 = sphi 0, %s364
      %s379 = sphi 0, %s365
      %s383 = sphi 0, %s383
      %s385 = sphi 0, %s383
      %s386 = sphi 0, %s385
      %s400 = sphi 0, %s386
      %s404 = sphi 0, %s404
      %s406 = sphi 0, %s404
      %s407 = sphi 0, %s406
      %s421 = sphi 0, %s407
      %s427 = sphi 0, %s429
      %s430 = sphi 0, %s427
      %s431 = sphi 0, %s430
      %s447 = sphi 0, %s431
    $region4: #{tpu_custom_call.1} parent=1 // loop_header_branch
      %37 = sbr.rel (%p35) target = $region8
    $region5: #{tpu_custom_call.1} parent=1 // loop_body
      %s39 = ssub.s32 %s34, 1
      %s40 = ssub.s32 %s34, 2
      %s41 = sadd.s32 %s34, 1
      %s42 = ssub.s32 %s34, %s41
      %p43 = scmp.eq.s32.totalorder %s42, 0
      %s45 = sadd.s32 %s44, 1
      %s46 = scalar_select %p43, %s44, %s45
      %p49 = pneg %p43
      %p50 = scmp.eq.s32.totalorder %s34, 1
      %p51 = por %p49, %p50
      %p52 = scmp.ne.s32.totalorder %s44, %s47
      %p53 = scmp.eq.s32.totalorder %s34, 0
      %p54 = por %p52, %p53
      %p55 = scmp.ne.s32.totalorder %s44, %s47
      %p56 = scmp.eq.s32.totalorder %s39, 1
      %p57 = por %p55, %p56
      %p58 = scmp.ne.s32.totalorder %s47, %s48
      %p59 = scmp.eq.s32.totalorder %s39, 0
      %p60 = por %p58, %p59
      %p61 = scmp.ne.s32.totalorder %s47, %s48
      %p62 = scmp.eq.s32.totalorder %s40, 1
      %p63 = por %p61, %p62
      %p65 = scmp.ne.s32.totalorder %s48, %s64
      %p66 = scmp.eq.s32.totalorder %s40, 0
      %p67 = por %p65, %p66
      %s69 = sadd.s32 %s68, 1
      %p72 = scmp.eq.s32.totalorder %s34, 1
      %p73 = scmp.ne.s32.totalorder %s68, %s70
      %p74 = scmp.eq.s32.totalorder %s34, 0
      %p75 = por %p73, %p74
      %p76 = scmp.ne.s32.totalorder %s68, %s70
      %p77 = scmp.eq.s32.totalorder %s39, 1
      %p78 = por %p76, %p77
      %p79 = scmp.ne.s32.totalorder %s70, %s71
      %p80 = scmp.eq.s32.totalorder %s39, 0
      %p81 = por %p79, %p80
      %p82 = scmp.ne.s32.totalorder %s70, %s71
      %p83 = scmp.eq.s32.totalorder %s40, 1
      %p84 = por %p82, %p83
      %p86 = scmp.ne.s32.totalorder %s71, %s85
      %p87 = scmp.eq.s32.totalorder %s40, 0
      %p88 = por %p86, %p87
      %s90 = sadd.s32 %s89, 1
      %p93 = scmp.eq.s32.totalorder %s34, 1
      %p94 = scmp.ne.s32.totalorder %s89, %s91
      %p95 = scmp.eq.s32.totalorder %s34, 0
      %p96 = por %p94, %p95
      %p97 = scmp.ne.s32.totalorder %s89, %s91
      %p98 = scmp.eq.s32.totalorder %s39, 1
      %p99 = por %p97, %p98
      %p100 = scmp.ne.s32.totalorder %s91, %s92
      %p101 = scmp.eq.s32.totalorder %s39, 0
      %p102 = por %p100, %p101
      %p103 = scmp.ne.s32.totalorder %s91, %s92
      %p104 = scmp.eq.s32.totalorder %s40, 1
      %p105 = por %p103, %p104
      %p107 = scmp.ne.s32.totalorder %s92, %s106
      %p108 = scmp.eq.s32.totalorder %s40, 0
      %p109 = por %p107, %p108
      %s111 = sadd.s32 %s110, 1
      %p114 = scmp.eq.s32.totalorder %s34, 1
      %p115 = scmp.ne.s32.totalorder %s110, %s112
      %p116 = scmp.eq.s32.totalorder %s34, 0
      %p117 = por %p115, %p116
      %p118 = scmp.ne.s32.totalorder %s110, %s112
      %p119 = scmp.eq.s32.totalorder %s39, 1
      %p120 = por %p118, %p119
      %p121 = scmp.ne.s32.totalorder %s112, %s113
      %p122 = scmp.eq.s32.totalorder %s39, 0
      %p123 = por %p121, %p122
      %p124 = scmp.ne.s32.totalorder %s112, %s113
      %p125 = scmp.eq.s32.totalorder %s40, 1
      %p126 = por %p124, %p125
      %p128 = scmp.ne.s32.totalorder %s113, %s127
      %p129 = scmp.eq.s32.totalorder %s40, 0
      %p130 = por %p128, %p129
      %s132 = sadd.s32 %s131, 1
      %p135 = scmp.eq.s32.totalorder %s34, 1
      %p136 = scmp.ne.s32.totalorder %s131, %s133
      %p137 = scmp.eq.s32.totalorder %s34, 0
      %p138 = por %p136, %p137
      %p139 = scmp.ne.s32.totalorder %s131, %s133
      %p140 = scmp.eq.s32.totalorder %s39, 1
      %p141 = por %p139, %p140
      %p142 = scmp.ne.s32.totalorder %s133, %s134
      %p143 = scmp.eq.s32.totalorder %s39, 0
      %p144 = por %p142, %p143
      %p145 = scmp.ne.s32.totalorder %s133, %s134
      %p146 = scmp.eq.s32.totalorder %s40, 1
      %p147 = por %p145, %p146
      %p149 = scmp.ne.s32.totalorder %s134, %s148
      %p150 = scmp.eq.s32.totalorder %s40, 0
      %p151 = por %p149, %p150
      %s153 = sadd.s32 %s152, 1
      %p156 = scmp.eq.s32.totalorder %s34, 1
      %p157 = scmp.ne.s32.totalorder %s152, %s154
      %p158 = scmp.eq.s32.totalorder %s34, 0
      %p159 = por %p157, %p158
      %p160 = scmp.ne.s32.totalorder %s152, %s154
      %p161 = scmp.eq.s32.totalorder %s39, 1
      %p162 = por %p160, %p161
      %p163 = scmp.ne.s32.totalorder %s154, %s155
      %p164 = scmp.eq.s32.totalorder %s39, 0
      %p165 = por %p163, %p164
      %p166 = scmp.ne.s32.totalorder %s154, %s155
      %p167 = scmp.eq.s32.totalorder %s40, 1
      %p168 = por %p166, %p167
      %p170 = scmp.ne.s32.totalorder %s155, %s169
      %p171 = scmp.eq.s32.totalorder %s40, 0
      %p172 = por %p170, %p171
      %s174 = sadd.s32 %s173, 1
      %p177 = scmp.eq.s32.totalorder %s34, 1
      %p178 = scmp.ne.s32.totalorder %s173, %s175
      %p179 = scmp.eq.s32.totalorder %s34, 0
      %p180 = por %p178, %p179
      %p181 = scmp.ne.s32.totalorder %s173, %s175
      %p182 = scmp.eq.s32.totalorder %s39, 1
      %p183 = por %p181, %p182
      %p184 = scmp.ne.s32.totalorder %s175, %s176
      %p185 = scmp.eq.s32.totalorder %s39, 0
      %p186 = por %p184, %p185
      %p187 = scmp.ne.s32.totalorder %s175, %s176
      %p188 = scmp.eq.s32.totalorder %s40, 1
      %p189 = por %p187, %p188
      %p191 = scmp.ne.s32.totalorder %s176, %s190
      %p192 = scmp.eq.s32.totalorder %s40, 0
      %p193 = por %p191, %p192
      %s195 = sadd.s32 %s194, 1
      %p198 = scmp.eq.s32.totalorder %s34, 1
      %p199 = scmp.ne.s32.totalorder %s194, %s196
      %p200 = scmp.eq.s32.totalorder %s34, 0
      %p201 = por %p199, %p200
      %p202 = scmp.ne.s32.totalorder %s194, %s196
      %p203 = scmp.eq.s32.totalorder %s39, 1
      %p204 = por %p202, %p203
      %p205 = scmp.ne.s32.totalorder %s196, %s197
      %p206 = scmp.eq.s32.totalorder %s39, 0
      %p207 = por %p205, %p206
      %p208 = scmp.ne.s32.totalorder %s196, %s197
      %p209 = scmp.eq.s32.totalorder %s40, 1
      %p210 = por %p208, %p209
      %p212 = scmp.ne.s32.totalorder %s197, %s211
      %p213 = scmp.eq.s32.totalorder %s40, 0
      %p214 = por %p212, %p213
      %s216 = sadd.s32 %s215, 1
      %p219 = scmp.eq.s32.totalorder %s34, 1
      %p220 = scmp.ne.s32.totalorder %s215, %s217
      %p221 = scmp.eq.s32.totalorder %s34, 0
      %p222 = por %p220, %p221
      %p223 = scmp.ne.s32.totalorder %s215, %s217
      %p224 = scmp.eq.s32.totalorder %s39, 1
      %p225 = por %p223, %p224
      %p226 = scmp.ne.s32.totalorder %s217, %s218
      %p227 = scmp.eq.s32.totalorder %s39, 0
      %p228 = por %p226, %p227
      %p229 = scmp.ne.s32.totalorder %s217, %s218
      %p230 = scmp.eq.s32.totalorder %s40, 1
      %p231 = por %p229, %p230
      %p233 = scmp.ne.s32.totalorder %s218, %s232
      %p234 = scmp.eq.s32.totalorder %s40, 0
      %p235 = por %p233, %p234
      %s237 = sadd.s32 %s236, 1
      %p240 = scmp.eq.s32.totalorder %s34, 1
      %p241 = scmp.ne.s32.totalorder %s236, %s238
      %p242 = scmp.eq.s32.totalorder %s34, 0
      %p243 = por %p241, %p242
      %p244 = scmp.ne.s32.totalorder %s236, %s238
      %p245 = scmp.eq.s32.totalorder %s39, 1
      %p246 = por %p244, %p245
      %p247 = scmp.ne.s32.totalorder %s238, %s239
      %p248 = scmp.eq.s32.totalorder %s39, 0
      %p249 = por %p247, %p248
      %p250 = scmp.ne.s32.totalorder %s238, %s239
      %p251 = scmp.eq.s32.totalorder %s40, 1
      %p252 = por %p250, %p251
      %p254 = scmp.ne.s32.totalorder %s239, %s253
      %p255 = scmp.eq.s32.totalorder %s40, 0
      %p256 = por %p254, %p255
      %s258 = sadd.s32 %s257, 1
      %p261 = scmp.eq.s32.totalorder %s34, 1
      %p262 = scmp.ne.s32.totalorder %s257, %s259
      %p263 = scmp.eq.s32.totalorder %s34, 0
      %p264 = por %p262, %p263
      %p265 = scmp.ne.s32.totalorder %s257, %s259
      %p266 = scmp.eq.s32.totalorder %s39, 1
      %p267 = por %p265, %p266
      %p268 = scmp.ne.s32.totalorder %s259, %s260
      %p269 = scmp.eq.s32.totalorder %s39, 0
      %p270 = por %p268, %p269
      %p271 = scmp.ne.s32.totalorder %s259, %s260
      %p272 = scmp.eq.s32.totalorder %s40, 1
      %p273 = por %p271, %p272
      %p275 = scmp.ne.s32.totalorder %s260, %s274
      %p276 = scmp.eq.s32.totalorder %s40, 0
      %p277 = por %p275, %p276
      %s279 = sadd.s32 %s278, 1
      %p282 = scmp.eq.s32.totalorder %s34, 1
      %p283 = scmp.ne.s32.totalorder %s278, %s280
      %p284 = scmp.eq.s32.totalorder %s34, 0
      %p285 = por %p283, %p284
      %p286 = scmp.ne.s32.totalorder %s278, %s280
      %p287 = scmp.eq.s32.totalorder %s39, 1
      %p288 = por %p286, %p287
      %p289 = scmp.ne.s32.totalorder %s280, %s281
      %p290 = scmp.eq.s32.totalorder %s39, 0
      %p291 = por %p289, %p290
      %p292 = scmp.ne.s32.totalorder %s280, %s281
      %p293 = scmp.eq.s32.totalorder %s40, 1
      %p294 = por %p292, %p293
      %p296 = scmp.ne.s32.totalorder %s281, %s295
      %p297 = scmp.eq.s32.totalorder %s40, 0
      %p298 = por %p296, %p297
      %s300 = sadd.s32 %s299, 1
      %p303 = scmp.eq.s32.totalorder %s34, 1
      %p304 = scmp.ne.s32.totalorder %s299, %s301
      %p305 = scmp.eq.s32.totalorder %s34, 0
      %p306 = por %p304, %p305
      %p307 = scmp.ne.s32.totalorder %s299, %s301
      %p308 = scmp.eq.s32.totalorder %s39, 1
      %p309 = por %p307, %p308
      %p310 = scmp.ne.s32.totalorder %s301, %s302
      %p311 = scmp.eq.s32.totalorder %s39, 0
      %p312 = por %p310, %p311
      %p313 = scmp.ne.s32.totalorder %s301, %s302
      %p314 = scmp.eq.s32.totalorder %s40, 1
      %p315 = por %p313, %p314
      %p317 = scmp.ne.s32.totalorder %s302, %s316
      %p318 = scmp.eq.s32.totalorder %s40, 0
      %p319 = por %p317, %p318
      %s321 = sadd.s32 %s320, 1
      %p324 = scmp.eq.s32.totalorder %s34, 1
      %p325 = scmp.ne.s32.totalorder %s320, %s322
      %p326 = scmp.eq.s32.totalorder %s34, 0
      %p327 = por %p325, %p326
      %p328 = scmp.ne.s32.totalorder %s320, %s322
      %p329 = scmp.eq.s32.totalorder %s39, 1
      %p330 = por %p328, %p329
      %p331 = scmp.ne.s32.totalorder %s322, %s323
      %p332 = scmp.eq.s32.totalorder %s39, 0
      %p333 = por %p331, %p332
      %p334 = scmp.ne.s32.totalorder %s322, %s323
      %p335 = scmp.eq.s32.totalorder %s40, 1
      %p336 = por %p334, %p335
      %p338 = scmp.ne.s32.totalorder %s323, %s337
      %p339 = scmp.eq.s32.totalorder %s40, 0
      %p340 = por %p338, %p339
      %s342 = sadd.s32 %s341, 1
      %p345 = scmp.eq.s32.totalorder %s34, 1
      %p346 = scmp.ne.s32.totalorder %s341, %s343
      %p347 = scmp.eq.s32.totalorder %s34, 0
      %p348 = por %p346, %p347
      %p349 = scmp.ne.s32.totalorder %s341, %s343
      %p350 = scmp.eq.s32.totalorder %s39, 1
      %p351 = por %p349, %p350
      %p352 = scmp.ne.s32.totalorder %s343, %s344
      %p353 = scmp.eq.s32.totalorder %s39, 0
      %p354 = por %p352, %p353
      %p355 = scmp.ne.s32.totalorder %s343, %s344
      %p356 = scmp.eq.s32.totalorder %s40, 1
      %p357 = por %p355, %p356
      %p359 = scmp.ne.s32.totalorder %s344, %s358
      %p360 = scmp.eq.s32.totalorder %s40, 0
      %p361 = por %p359, %p360
      %s363 = sadd.s32 %s362, 1
      %p366 = scmp.eq.s32.totalorder %s34, 1
      %p367 = scmp.ne.s32.totalorder %s362, %s364
      %p368 = scmp.eq.s32.totalorder %s34, 0
      %p369 = por %p367, %p368
      %p370 = scmp.ne.s32.totalorder %s362, %s364
      %p371 = scmp.eq.s32.totalorder %s39, 1
      %p372 = por %p370, %p371
      %p373 = scmp.ne.s32.totalorder %s364, %s365
      %p374 = scmp.eq.s32.totalorder %s39, 0
      %p375 = por %p373, %p374
      %p376 = scmp.ne.s32.totalorder %s364, %s365
      %p377 = scmp.eq.s32.totalorder %s40, 1
      %p378 = por %p376, %p377
      %p380 = scmp.ne.s32.totalorder %s365, %s379
      %p381 = scmp.eq.s32.totalorder %s40, 0
      %p382 = por %p380, %p381
      %s384 = sadd.s32 %s383, 1
      %p387 = scmp.eq.s32.totalorder %s34, 1
      %p388 = scmp.ne.s32.totalorder %s383, %s385
      %p389 = scmp.eq.s32.totalorder %s34, 0
      %p390 = por %p388, %p389
      %p391 = scmp.ne.s32.totalorder %s383, %s385
      %p392 = scmp.eq.s32.totalorder %s39, 1
      %p393 = por %p391, %p392
      %p394 = scmp.ne.s32.totalorder %s385, %s386
      %p395 = scmp.eq.s32.totalorder %s39, 0
      %p396 = por %p394, %p395
      %p397 = scmp.ne.s32.totalorder %s385, %s386
      %p398 = scmp.eq.s32.totalorder %s40, 1
      %p399 = por %p397, %p398
      %p401 = scmp.ne.s32.totalorder %s386, %s400
      %p402 = scmp.eq.s32.totalorder %s40, 0
      %p403 = por %p401, %p402
      %s405 = sadd.s32 %s404, 1
      %p408 = scmp.eq.s32.totalorder %s34, 1
      %p409 = scmp.ne.s32.totalorder %s404, %s406
      %p410 = scmp.eq.s32.totalorder %s34, 0
      %p411 = por %p409, %p410
      %p412 = scmp.ne.s32.totalorder %s404, %s406
      %p413 = scmp.eq.s32.totalorder %s39, 1
      %p414 = por %p412, %p413
      %p415 = scmp.ne.s32.totalorder %s406, %s407
      %p416 = scmp.eq.s32.totalorder %s39, 0
      %p417 = por %p415, %p416
      %p418 = scmp.ne.s32.totalorder %s406, %s407
      %p419 = scmp.eq.s32.totalorder %s40, 1
      %p420 = por %p418, %p419
      %p422 = scmp.ne.s32.totalorder %s407, %s421
      %p423 = scmp.eq.s32.totalorder %s40, 0
      %p424 = por %p422, %p423
      %s425 = ssub.s32 %s34, %s41
      %p426 = scmp.eq.s32.totalorder %s425, 0
      %s428 = sadd.s32 %s427, 1
      %s429 = scalar_select %p426, %s427, %s428
      %p432 = pneg %p426
      %p433 = scmp.eq.s32.totalorder %s34, 1
      %p434 = por %p432, %p433
      %p435 = scmp.ne.s32.totalorder %s427, %s430
      %p436 = scmp.eq.s32.totalorder %s34, 0
      %p437 = por %p435, %p436
      %p438 = scmp.ne.s32.totalorder %s427, %s430
      %p439 = scmp.eq.s32.totalorder %s39, 1
      %p440 = por %p438, %p439
      %p441 = scmp.ne.s32.totalorder %s430, %s431
      %p442 = scmp.eq.s32.totalorder %s39, 0
      %p443 = por %p441, %p442
      %p444 = scmp.ne.s32.totalorder %s430, %s431
      %p445 = scmp.eq.s32.totalorder %s40, 1
      %p446 = por %p444, %p445
      %p448 = scmp.ne.s32.totalorder %s431, %s447
      %p449 = scmp.eq.s32.totalorder %s40, 0
      %p450 = por %p448, %p449
      %p451 = scmp.le.s32.totalorder 1, %s34
      %p452 = scmp.lt.s32.totalorder %s34, 3
      %p453 = pnand %p451, %p452
      %p454 = pneg %p453
      // Predicated region
      $region9: #{tpu_custom_call.1} parent=5 // pred_check
        _
      $region10: #{tpu_custom_call.1} parent=5 // pred_check_branch
        %456 = sbr.rel (%p453) target = $region12
      $region11: #{tpu_custom_call.1} parent=5 // pred_region
        %s457 = ssub.s32 %s34, 1
        // Predicated region
        $region13: #{tpu_custom_call.1} parent=11 // pred_check
          %p458 = pneg %p81
        $region14: #{tpu_custom_call.1} parent=11 // pred_check_branch
          %460 = sbr.rel (%p458) target = $region16
        $region15: #{tpu_custom_call.1} parent=11 // pred_region
          %s462 = ssub.s32 128, 128
          %463 = vsyncadd [#allocation6], %s462
          %s465 = sshll.u32 [#allocation5], 4
          %s466 = int_to_ptr.vmem [resolvable:$true] %s465
          %468 = dma.hbm_to_vmem [thread:$0]  %s1, 128, %s466, [#allocation6]
        $region16: #{tpu_custom_call.1} parent=11 // pred_fallthru
          _
        // Predicated region
        $region17: #{tpu_custom_call.1} parent=11 // pred_check
          %p469 = pneg %p102
        $region18: #{tpu_custom_call.1} parent=11 // pred_check_branch
          %471 = sbr.rel (%p469) target = $region20
        $region19: #{tpu_custom_call.1} parent=11 // pred_region
          %s473 = ssub.s32 4096, 4096
          %474 = vsyncadd [#allocation6], %s473
          %s475 = sshll.u32 [#allocation7], 4
          %s476 = int_to_ptr.vmem [resolvable:$true] %s475
          %481 = dma.hbm_to_vmem [thread:$0]  %s2, 4096, %s476, [#allocation6], 128, 128, 8
        $region20: #{tpu_custom_call.1} parent=11 // pred_fallthru
          _
        // Predicated region
        $region21: #{tpu_custom_call.1} parent=11 // pred_check
          %p482 = pneg %p123
        $region22: #{tpu_custom_call.1} parent=11 // pred_check_branch
          %484 = sbr.rel (%p482) target = $region24
        $region23: #{tpu_custom_call.1} parent=11 // pred_region
          _
        $region24: #{tpu_custom_call.1} parent=11 // pred_fallthru
          _
        // Predicated region
        $region25: #{tpu_custom_call.1} parent=11 // pred_check
          %p485 = pneg %p144
        $region26: #{tpu_custom_call.1} parent=11 // pred_check_branch
          %487 = sbr.rel (%p485) target = $region28
        $region27: #{tpu_custom_call.1} parent=11 // pred_region
          %s489 = ssub.s32 4096, 4096
          %490 = vsyncadd [#allocation9], %s489
          %s491 = sshll.u32 [#allocation8], 4
          %s492 = int_to_ptr.vmem [resolvable:$true] %s491
          %497 = dma.hbm_to_vmem [thread:$0]  %s4, 4096, %s492, [#allocation9], 128, 128, 8
        $region28: #{tpu_custom_call.1} parent=11 // pred_fallthru
          _
        // Predicated region
        $region29: #{tpu_custom_call.1} parent=11 // pred_check
          %p498 = pneg %p165
        $region30: #{tpu_custom_call.1} parent=11 // pred_check_branch
          %500 = sbr.rel (%p498) target = $region32
        $region31: #{tpu_custom_call.1} parent=11 // pred_region
          _
        $region32: #{tpu_custom_call.1} parent=11 // pred_fallthru
          _
        // Predicated region
        $region33: #{tpu_custom_call.1} parent=11 // pred_check
          %p501 = pneg %p186
        $region34: #{tpu_custom_call.1} parent=11 // pred_check_branch
          %503 = sbr.rel (%p501) target = $region36
        $region35: #{tpu_custom_call.1} parent=11 // pred_region
          %s505 = ssub.s32 4096, 4096
          %506 = vsyncadd [#allocation9], %s505
          %s507 = sshll.u32 [#allocation10], 4
          %s508 = int_to_ptr.vmem [resolvable:$true] %s507
          %513 = dma.hbm_to_vmem [thread:$0]  %s6, 4096, %s508, [#allocation9], 128, 128, 8
        $region36: #{tpu_custom_call.1} parent=11 // pred_fallthru
          _
        // Predicated region
        $region37: #{tpu_custom_call.1} parent=11 // pred_check
          %p514 = pneg %p207
        $region38: #{tpu_custom_call.1} parent=11 // pred_check_branch
          %516 = sbr.rel (%p514) target = $region40
        $region39: #{tpu_custom_call.1} parent=11 // pred_region
          _
        $region40: #{tpu_custom_call.1} parent=11 // pred_fallthru
          _
        // Predicated region
        $region41: #{tpu_custom_call.1} parent=11 // pred_check
          %p517 = pneg %p228
        $region42: #{tpu_custom_call.1} parent=11 // pred_check_branch
          %519 = sbr.rel (%p517) target = $region44
        $region43: #{tpu_custom_call.1} parent=11 // pred_region
          %s521 = ssub.s32 4096, 4096
          %522 = vsyncadd [#allocation12], %s521
          %s523 = sshll.u32 [#allocation11], 4
          %s524 = int_to_ptr.vmem [resolvable:$true] %s523
          %529 = dma.hbm_to_vmem [thread:$0]  %s8, 4096, %s524, [#allocation12], 128, 128, 8
        $region44: #{tpu_custom_call.1} parent=11 // pred_fallthru
          _
        // Predicated region
        $region45: #{tpu_custom_call.1} parent=11 // pred_check
          %p530 = pneg %p249
        $region46: #{tpu_custom_call.1} parent=11 // pred_check_branch
          %532 = sbr.rel (%p530) target = $region48
        $region47: #{tpu_custom_call.1} parent=11 // pred_region
          _
        $region48: #{tpu_custom_call.1} parent=11 // pred_fallthru
          _
        // Predicated region
        $region49: #{tpu_custom_call.1} parent=11 // pred_check
          %p533 = pneg %p270
        $region50: #{tpu_custom_call.1} parent=11 // pred_check_branch
          %535 = sbr.rel (%p533) target = $region52
        $region51: #{tpu_custom_call.1} parent=11 // pred_region
          _
        $region52: #{tpu_custom_call.1} parent=11 // pred_fallthru
          _
        // Predicated region
        $region53: #{tpu_custom_call.1} parent=11 // pred_check
          %p536 = pneg %p291
        $region54: #{tpu_custom_call.1} parent=11 // pred_check_branch
          %538 = sbr.rel (%p536) target = $region56
        $region55: #{tpu_custom_call.1} parent=11 // pred_region
          _
        $region56: #{tpu_custom_call.1} parent=11 // pred_fallthru
          _
        // Predicated region
        $region57: #{tpu_custom_call.1} parent=11 // pred_check
          %p539 = pneg %p312
        $region58: #{tpu_custom_call.1} parent=11 // pred_check_branch
          %541 = sbr.rel (%p539) target = $region60
        $region59: #{tpu_custom_call.1} parent=11 // pred_region
          %s543 = ssub.s32 8192, 8192
          %544 = vsyncadd [#allocation12], %s543
          %s545 = sshll.u32 [#allocation13], 4
          %s546 = int_to_ptr.vmem [resolvable:$true] %s545
          %551 = dma.hbm_to_vmem [thread:$0]  %s12, 8192, %s546, [#allocation12], 256, 256, 16
        $region60: #{tpu_custom_call.1} parent=11 // pred_fallthru
          _
        // Predicated region
        $region61: #{tpu_custom_call.1} parent=11 // pred_check
          %p552 = pneg %p333
        $region62: #{tpu_custom_call.1} parent=11 // pred_check_branch
          %554 = sbr.rel (%p552) target = $region64
        $region63: #{tpu_custom_call.1} parent=11 // pred_region
          _
        $region64: #{tpu_custom_call.1} parent=11 // pred_fallthru
          _
        // Predicated region
        $region65: #{tpu_custom_call.1} parent=11 // pred_check
          %p555 = pneg %p354
        $region66: #{tpu_custom_call.1} parent=11 // pred_check_branch
          %557 = sbr.rel (%p555) target = $region68
        $region67: #{tpu_custom_call.1} parent=11 // pred_region
          %s559 = ssub.s32 8192, 8192
          %560 = vsyncadd [#allocation15], %s559
          %s561 = sshll.u32 [#allocation14], 4
          %s562 = int_to_ptr.vmem [resolvable:$true] %s561
          %567 = dma.hbm_to_vmem [thread:$0]  %s14, 8192, %s562, [#allocation15], 128, 128, 8
        $region68: #{tpu_custom_call.1} parent=11 // pred_fallthru
          _
        // Predicated region
        $region69: #{tpu_custom_call.1} parent=11 // pred_check
          %p568 = pneg %p375
        $region70: #{tpu_custom_call.1} parent=11 // pred_check_branch
          %570 = sbr.rel (%p568) target = $region72
        $region71: #{tpu_custom_call.1} parent=11 // pred_region
          _
        $region72: #{tpu_custom_call.1} parent=11 // pred_fallthru
          _
        // Predicated region
        $region73: #{tpu_custom_call.1} parent=11 // pred_check
          %p571 = pneg %p396
        $region74: #{tpu_custom_call.1} parent=11 // pred_check_branch
          %573 = sbr.rel (%p571) target = $region76
        $region75: #{tpu_custom_call.1} parent=11 // pred_region
          _
        $region76: #{tpu_custom_call.1} parent=11 // pred_fallthru
          _
        // Predicated region
        $region77: #{tpu_custom_call.1} parent=11 // pred_check
          %p574 = pneg %p417
        $region78: #{tpu_custom_call.1} parent=11 // pred_check_branch
          %576 = sbr.rel (%p574) target = $region80
        $region79: #{tpu_custom_call.1} parent=11 // pred_region
          _
        $region80: #{tpu_custom_call.1} parent=11 // pred_fallthru
          _
      $region12: #{tpu_custom_call.1} parent=5 // pred_fallthru
        _
      %p577 = scmp.lt.s32.totalorder %s34, 2
      // Predicated region
      $region81: #{tpu_custom_call.1} parent=5 // pred_check
        %p578 = pneg %p577
      $region82: #{tpu_custom_call.1} parent=5 // pred_check_branch
        %580 = sbr.rel (%p578) target = $region84
      $region83: #{tpu_custom_call.1} parent=5 // pred_region
        // Predicated region
        $region85: #{tpu_custom_call.1} parent=83 // pred_check
          %p581 = pneg %p54
        $region86: #{tpu_custom_call.1} parent=83 // pred_check_branch
          %583 = sbr.rel (%p581) target = $region88
        $region87: #{tpu_custom_call.1} parent=83 // pred_region
          %s584 = sand.u32 %s44, 1
          %s585 = scalar_lea.sflag [#allocation3], %s584
          %s586 = sand.u32 %s44, 1
          %s587 = smul.addr %s586, 8
          %s588 = scalar_lea.vmem [#allocation2], %s587
          %s590 = ssub.s32 128, 128
          %591 = vsyncadd %s585, %s590
          %s592 = smul.addr %s34, 128
          %s593 = scalar_lea.hbm %s0, %s592
          %s595 = sshll.u32 %s588, 4
          %s596 = int_to_ptr.vmem [resolvable:$true] %s595
          %598 = dma.hbm_to_vmem [thread:$0]  %s593, 128, %s596, %s585
        $region88: #{tpu_custom_call.1} parent=83 // pred_fallthru
          _
      $region84: #{tpu_custom_call.1} parent=5 // pred_fallthru
        _
      %p599 = scmp.le.s32.totalorder 1, %s34
      %p600 = scmp.lt.s32.totalorder %s34, 3
      %p601 = pnand %p599, %p600
      %p602 = pneg %p601
      // Predicated region
      $region89: #{tpu_custom_call.1} parent=5 // pred_check
        _
      $region90: #{tpu_custom_call.1} parent=5 // pred_check_branch
        %604 = sbr.rel (%p601) target = $region92
      $region91: #{tpu_custom_call.1} parent=5 // pred_region
        %s605 = ssub.s32 %s34, 1
        %s606 = sand.u32 %s47, 1
        %s607 = scalar_lea.sflag [#allocation3], %s606
        %s608 = sand.u32 %s47, 1
        %s609 = smul.addr %s608, 8
        %s610 = scalar_lea.vmem [#allocation2], %s609
        // Predicated region
        $region93: #{tpu_custom_call.1} parent=91 // pred_check
          %p611 = pneg %p60
        $region94: #{tpu_custom_call.1} parent=91 // pred_check_branch
          %613 = sbr.rel (%p611) target = $region96
        $region95: #{tpu_custom_call.1} parent=91 // pred_region
          %614 = dma.done %s607, 128
        $region96: #{tpu_custom_call.1} parent=91 // pred_fallthru
          _
        // Predicated region
        $region97: #{tpu_custom_call.1} parent=91 // pred_check
          %p615 = pneg %p81
        $region98: #{tpu_custom_call.1} parent=91 // pred_check_branch
          %617 = sbr.rel (%p615) target = $region100
        $region99: #{tpu_custom_call.1} parent=91 // pred_region
          %618 = dma.done [#allocation6], 128
        $region100: #{tpu_custom_call.1} parent=91 // pred_fallthru
          _
        // Predicated region
        $region101: #{tpu_custom_call.1} parent=91 // pred_check
          %p619 = pneg %p102
        $region102: #{tpu_custom_call.1} parent=91 // pred_check_branch
          %621 = sbr.rel (%p619) target = $region104
        $region103: #{tpu_custom_call.1} parent=91 // pred_region
          %622 = dma.done [#allocation6], 4096
        $region104: #{tpu_custom_call.1} parent=91 // pred_fallthru
          _
        // Predicated region
        $region105: #{tpu_custom_call.1} parent=91 // pred_check
          %p623 = pneg %p144
        $region106: #{tpu_custom_call.1} parent=91 // pred_check_branch
          %625 = sbr.rel (%p623) target = $region108
        $region107: #{tpu_custom_call.1} parent=91 // pred_region
          %626 = dma.done [#allocation9], 4096
        $region108: #{tpu_custom_call.1} parent=91 // pred_fallthru
          _
        // Predicated region
        $region109: #{tpu_custom_call.1} parent=91 // pred_check
          %p627 = pneg %p186
        $region110: #{tpu_custom_call.1} parent=91 // pred_check_branch
          %629 = sbr.rel (%p627) target = $region112
        $region111: #{tpu_custom_call.1} parent=91 // pred_region
          %630 = dma.done [#allocation9], 4096
        $region112: #{tpu_custom_call.1} parent=91 // pred_fallthru
          _
        // Predicated region
        $region113: #{tpu_custom_call.1} parent=91 // pred_check
          %p631 = pneg %p228
        $region114: #{tpu_custom_call.1} parent=91 // pred_check_branch
          %633 = sbr.rel (%p631) target = $region116
        $region115: #{tpu_custom_call.1} parent=91 // pred_region
          %634 = dma.done [#allocation12], 4096
        $region116: #{tpu_custom_call.1} parent=91 // pred_fallthru
          _
        // Predicated region
        $region117: #{tpu_custom_call.1} parent=91 // pred_check
          %p635 = pneg %p312
        $region118: #{tpu_custom_call.1} parent=91 // pred_check_branch
          %637 = sbr.rel (%p635) target = $region120
        $region119: #{tpu_custom_call.1} parent=91 // pred_region
          %638 = dma.done [#allocation12], 8192
        $region120: #{tpu_custom_call.1} parent=91 // pred_fallthru
          _
        // Predicated region
        $region121: #{tpu_custom_call.1} parent=91 // pred_check
          %p639 = pneg %p354
        $region122: #{tpu_custom_call.1} parent=91 // pred_check_branch
          %641 = sbr.rel (%p639) target = $region124
        $region123: #{tpu_custom_call.1} parent=91 // pred_region
          %642 = dma.done [#allocation15], 8192
        $region124: #{tpu_custom_call.1} parent=91 // pred_fallthru
          _
        %s643 = sand.u32 %s47, 1
        %s644 = scalar_lea.sflag [#allocation3], %s643
        %s645 = sand.u32 %s47, 1
        %s646 = smul.addr %s645, 8
        %s647 = scalar_lea.vmem [#allocation2], %s646
        %p648 = pneg %p60
        %p649 = pneg %p57
        %p650 = pneg %p81
        %p651 = pneg %p78
        %p652 = pneg %p102
        %p653 = pneg %p99
        %p654 = pneg %p123
        %p655 = pneg %p120
        %p656 = pneg %p144
        %p657 = pneg %p141
        %p658 = pneg %p165
        %p659 = pneg %p162
        %p660 = pneg %p186
        %p661 = pneg %p183
        %p662 = pneg %p207
        %p663 = pneg %p204
        %p664 = pneg %p228
        %p665 = pneg %p225
        %p666 = pneg %p249
        %p667 = pneg %p246
        %p668 = pneg %p270
        %p669 = pneg %p267
        %p670 = pneg %p291
        %p671 = pneg %p288
        %p672 = pneg %p312
        %p673 = pneg %p309
        %p674 = pneg %p333
        %p675 = pneg %p330
        %p676 = pneg %p354
        %p677 = pneg %p351
        %p678 = pneg %p375
        %p679 = pneg %p372
        %p680 = pneg %p396
        %p681 = pneg %p393
        %p682 = pneg %p417
        %p683 = pneg %p414
        %p684 = pneg %p443
        %p685 = pneg %p440
        %s686 = sand.u32 %s430, 1
        %s687 = scalar_lea.sflag [#allocation4], %s686
        %s688 = sand.u32 %s430, 1
        %s689 = smul.addr %s688, 8
        %s690 = scalar_lea.vmem [#allocation16], %s689
        %v691 = vld [vmem:[%s610] sm:$0xff]
        %v692 = vld [vmem:[#allocation5] sm:$0xff]
        %v693 = vadd.f32 %v691, %v692
        %v694 = vld [vmem:[#allocation7] sm:$0xff]
        %v695 = vld [vmem:[#allocation7 + $0x8] sm:$0xff]
        %v696 = vld [vmem:[#allocation7 + $0x10] sm:$0xff]
        %v697 = vld [vmem:[#allocation7 + $0x18] sm:$0xff]
        %v698 = vld [vmem:[#allocation7 + $0x20] sm:$0xff]
        %v699 = vld [vmem:[#allocation7 + $0x28] sm:$0xff]
        %v700 = vld [vmem:[#allocation7 + $0x30] sm:$0xff]
        %v701 = vld [vmem:[#allocation7 + $0x38] sm:$0xff]
        %v702 = vld [vmem:[#allocation7 + $0x40] sm:$0xff]
        %v703 = vld [vmem:[#allocation7 + $0x48] sm:$0xff]
        %v704 = vld [vmem:[#allocation7 + $0x50] sm:$0xff]
        %v705 = vld [vmem:[#allocation7 + $0x58] sm:$0xff]
        %v706 = vld [vmem:[#allocation7 + $0x60] sm:$0xff]
        %v707 = vld [vmem:[#allocation7 + $0x68] sm:$0xff]
        %v708 = vld [vmem:[#allocation7 + $0x70] sm:$0xff]
        %v709 = vld [vmem:[#allocation7 + $0x78] sm:$0xff]
        %v710 = vld [vmem:[#allocation8] sm:$0xff]
        %v711 = vld [vmem:[#allocation8 + $0x8] sm:$0xff]
        %v712 = vld [vmem:[#allocation8 + $0x10] sm:$0xff]
        %v713 = vld [vmem:[#allocation8 + $0x18] sm:$0xff]
        %v714 = vld [vmem:[#allocation8 + $0x20] sm:$0xff]
        %v715 = vld [vmem:[#allocation8 + $0x28] sm:$0xff]
        %v716 = vld [vmem:[#allocation8 + $0x30] sm:$0xff]
        %v717 = vld [vmem:[#allocation8 + $0x38] sm:$0xff]
        %v718 = vld [vmem:[#allocation8 + $0x40] sm:$0xff]
        %v719 = vld [vmem:[#allocation8 + $0x48] sm:$0xff]
        %v720 = vld [vmem:[#allocation8 + $0x50] sm:$0xff]
        %v721 = vld [vmem:[#allocation8 + $0x58] sm:$0xff]
        %v722 = vld [vmem:[#allocation8 + $0x60] sm:$0xff]
        %v723 = vld [vmem:[#allocation8 + $0x68] sm:$0xff]
        %v724 = vld [vmem:[#allocation8 + $0x70] sm:$0xff]
        %v725 = vld [vmem:[#allocation8 + $0x78] sm:$0xff]
        %v726 = vld [vmem:[#allocation10] sm:$0xff]
        %v727 = vld [vmem:[#allocation10 + $0x8] sm:$0xff]
        %v728 = vld [vmem:[#allocation10 + $0x10] sm:$0xff]
        %v729 = vld [vmem:[#allocation10 + $0x18] sm:$0xff]
        %v730 = vld [vmem:[#allocation10 + $0x20] sm:$0xff]
        %v731 = vld [vmem:[#allocation10 + $0x28] sm:$0xff]
        %v732 = vld [vmem:[#allocation10 + $0x30] sm:$0xff]
        %v733 = vld [vmem:[#allocation10 + $0x38] sm:$0xff]
        %v734 = vld [vmem:[#allocation10 + $0x40] sm:$0xff]
        %v735 = vld [vmem:[#allocation10 + $0x48] sm:$0xff]
        %v736 = vld [vmem:[#allocation10 + $0x50] sm:$0xff]
        %v737 = vld [vmem:[#allocation10 + $0x58] sm:$0xff]
        %v738 = vld [vmem:[#allocation10 + $0x60] sm:$0xff]
        %v739 = vld [vmem:[#allocation10 + $0x68] sm:$0xff]
        %v740 = vld [vmem:[#allocation10 + $0x70] sm:$0xff]
        %v741 = vld [vmem:[#allocation10 + $0x78] sm:$0xff]
        %v742 = vld [vmem:[#allocation11] sm:$0xff]
        %v743 = vld [vmem:[#allocation11 + $0x8] sm:$0xff]
        %v744 = vld [vmem:[#allocation11 + $0x10] sm:$0xff]
        %v745 = vld [vmem:[#allocation11 + $0x18] sm:$0xff]
        %v746 = vld [vmem:[#allocation11 + $0x20] sm:$0xff]
        %v747 = vld [vmem:[#allocation11 + $0x28] sm:$0xff]
        %v748 = vld [vmem:[#allocation11 + $0x30] sm:$0xff]
        %v749 = vld [vmem:[#allocation11 + $0x38] sm:$0xff]
        %v750 = vld [vmem:[#allocation11 + $0x40] sm:$0xff]
        %v751 = vld [vmem:[#allocation11 + $0x48] sm:$0xff]
        %v752 = vld [vmem:[#allocation11 + $0x50] sm:$0xff]
        %v753 = vld [vmem:[#allocation11 + $0x58] sm:$0xff]
        %v754 = vld [vmem:[#allocation11 + $0x60] sm:$0xff]
        %v755 = vld [vmem:[#allocation11 + $0x68] sm:$0xff]
        %v756 = vld [vmem:[#allocation11 + $0x70] sm:$0xff]
        %v757 = vld [vmem:[#allocation11 + $0x78] sm:$0xff]
        %v758 = vld [vmem:[%s3] sm:$0x1]
        %v759 = vld [vmem:[%s5] sm:$0x1]
        %v760 = vld [vmem:[%s7] sm:$0x1]
        %v761 = vld [vmem:[%s9] sm:$0x1]
        %v763 = vlaneseq
        %v764 = vshrl.u32 %v763, 7
        %v765 = vsub.s32 0, %v764
        %v766 = vrot.slane %v758, %v765
        %768 = vmatprep.subr.mxu0 0.0
        %769 = vmatpush1.msra.mxu0 %v709
        %770 = vmatprep.subr.mxu0 0.0
        %771 = vmatpush1.msra.mxu0 %v708
        %772 = vmatprep.subr.mxu0 0.0
        %773 = vmatpush1.msra.mxu0 %v707
        %774 = vmatprep.subr.mxu0 0.0
        %775 = vmatpush1.msra.mxu0 %v706
        %776 = vmatprep.subr.mxu0 0.0
        %777 = vmatpush1.msra.mxu0 %v705
        %778 = vmatprep.subr.mxu0 0.0
        %779 = vmatpush1.msra.mxu0 %v704
        %780 = vmatprep.subr.mxu0 0.0
        %781 = vmatpush1.msra.mxu0 %v703
        %782 = vmatprep.subr.mxu0 0.0
        %783 = vmatpush1.msra.mxu0 %v702
        %784 = vmatprep.subr.mxu0 0.0
        %785 = vmatpush1.msra.mxu0 %v701
        %786 = vmatprep.subr.mxu0 0.0
        %787 = vmatpush1.msra.mxu0 %v700
        %788 = vmatprep.subr.mxu0 0.0
        %789 = vmatpush1.msra.mxu0 %v699
        %790 = vmatprep.subr.mxu0 0.0
        %791 = vmatpush1.msra.mxu0 %v698
        %792 = vmatprep.subr.mxu0 0.0
        %793 = vmatpush1.msra.mxu0 %v697
        %794 = vmatprep.subr.mxu0 0.0
        %795 = vmatpush1.msra.mxu0 %v696
        %796 = vmatprep.subr.mxu0 0.0
        %797 = vmatpush1.msra.mxu0 %v695
        %798 = vmatprep.subr.mxu0 0.0
        %799 = vmatpush1.msra.mxu0 %v694
        %800 = vmatprep.subr.mxu0 0.0
        %801 = vmatpush2.msra.mxu0 0.0
        %802 = vmatprep.subr.mxu0 0.0
        %803 = vmatpush2.msra.mxu0 0.0
        %804 = vmatprep.subr.mxu0 0.0
        %805 = vmatpush2.msra.mxu0 0.0
        %806 = vmatprep.subr.mxu0 0.0
        %807 = vmatpush2.msra.mxu0 0.0
        %808 = vmatprep.subr.mxu0 0.0
        %809 = vmatpush2.msra.mxu0 0.0
        %810 = vmatprep.subr.mxu0 0.0
        %811 = vmatpush2.msra.mxu0 0.0
        %812 = vmatprep.subr.mxu0 0.0
        %813 = vmatpush2.msra.mxu0 0.0
        %814 = vmatprep.subr.mxu0 0.0
        %815 = vmatpush2.msra.mxu0 0.0
        %816 = vmatprep.subr.mxu0 0.0
        %817 = vmatpush2.msra.mxu0 0.0
        %818 = vmatprep.subr.mxu0 0.0
        %819 = vmatpush2.msra.mxu0 0.0
        %820 = vmatprep.subr.mxu0 0.0
        %821 = vmatpush2.msra.mxu0 0.0
        %822 = vmatprep.subr.mxu0 0.0
        %823 = vmatpush2.msra.mxu0 0.0
        %824 = vmatprep.subr.mxu0 0.0
        %825 = vmatpush2.msra.mxu0 0.0
        %826 = vmatprep.subr.mxu0 0.0
        %827 = vmatpush2.msra.mxu0 0.0
        %828 = vmatprep.subr.mxu0 0.0
        %829 = vmatpush2.msra.mxu0 0.0
        %830 = vmatprep.subr.mxu0 0.0
        %831 = vmatpush2.msra.mxu0 0.0
        %832 = vmatprep.mubr.f32.mxu0 0.0
        %833 = vmatmul.mubr.f32.gmra.mxu0 %v693
        %v834 = vpop.f32.mrf.mxu0
        %v835 = vadd.f32 %v766, %v834
        %v836 = vpop.f32.mrf.mxu0
        %837 = vdwg.mxu0
        %v839 = vlaneseq
        %v840 = vshrl.u32 %v839, 7
        %v841 = vsub.s32 0, %v840
        %v842 = vrot.slane %v759, %v841
        %844 = vmatprep.subr.mxu0 0.0
        %845 = vmatpush1.msra.mxu0 %v725
        %846 = vmatprep.subr.mxu0 0.0
        %847 = vmatpush1.msra.mxu0 %v724
        %848 = vmatprep.subr.mxu0 0.0
        %849 = vmatpush1.msra.mxu0 %v723
        %850 = vmatprep.subr.mxu0 0.0
        %851 = vmatpush1.msra.mxu0 %v722
        %852 = vmatprep.subr.mxu0 0.0
        %853 = vmatpush1.msra.mxu0 %v721
        %854 = vmatprep.subr.mxu0 0.0
        %855 = vmatpush1.msra.mxu0 %v720
        %856 = vmatprep.subr.mxu0 0.0
        %857 = vmatpush1.msra.mxu0 %v719
        %858 = vmatprep.subr.mxu0 0.0
        %859 = vmatpush1.msra.mxu0 %v718
        %860 = vmatprep.subr.mxu0 0.0
        %861 = vmatpush1.msra.mxu0 %v717
        %862 = vmatprep.subr.mxu0 0.0
        %863 = vmatpush1.msra.mxu0 %v716
        %864 = vmatprep.subr.mxu0 0.0
        %865 = vmatpush1.msra.mxu0 %v715
        %866 = vmatprep.subr.mxu0 0.0
        %867 = vmatpush1.msra.mxu0 %v714
        %868 = vmatprep.subr.mxu0 0.0
        %869 = vmatpush1.msra.mxu0 %v713
        %870 = vmatprep.subr.mxu0 0.0
        %871 = vmatpush1.msra.mxu0 %v712
        %872 = vmatprep.subr.mxu0 0.0
        %873 = vmatpush1.msra.mxu0 %v711
        %874 = vmatprep.subr.mxu0 0.0
        %875 = vmatpush1.msra.mxu0 %v710
        %876 = vmatprep.subr.mxu0 0.0
        %877 = vmatpush2.msra.mxu0 0.0
        %878 = vmatprep.subr.mxu0 0.0
        %879 = vmatpush2.msra.mxu0 0.0
        %880 = vmatprep.subr.mxu0 0.0
        %881 = vmatpush2.msra.mxu0 0.0
        %882 = vmatprep.subr.mxu0 0.0
        %883 = vmatpush2.msra.mxu0 0.0
        %884 = vmatprep.subr.mxu0 0.0
        %885 = vmatpush2.msra.mxu0 0.0
        %886 = vmatprep.subr.mxu0 0.0
        %887 = vmatpush2.msra.mxu0 0.0
        %888 = vmatprep.subr.mxu0 0.0
        %889 = vmatpush2.msra.mxu0 0.0
        %890 = vmatprep.subr.mxu0 0.0
        %891 = vmatpush2.msra.mxu0 0.0
        %892 = vmatprep.subr.mxu0 0.0
        %893 = vmatpush2.msra.mxu0 0.0
        %894 = vmatprep.subr.mxu0 0.0
        %895 = vmatpush2.msra.mxu0 0.0
        %896 = vmatprep.subr.mxu0 0.0
        %897 = vmatpush2.msra.mxu0 0.0
        %898 = vmatprep.subr.mxu0 0.0
        %899 = vmatpush2.msra.mxu0 0.0
        %900 = vmatprep.subr.mxu0 0.0
        %901 = vmatpush2.msra.mxu0 0.0
        %902 = vmatprep.subr.mxu0 0.0
        %903 = vmatpush2.msra.mxu0 0.0
        %904 = vmatprep.subr.mxu0 0.0
        %905 = vmatpush2.msra.mxu0 0.0
        %906 = vmatprep.subr.mxu0 0.0
        %907 = vmatpush2.msra.mxu0 0.0
        %908 = vmatprep.mubr.f32.mxu0 0.0
        %909 = vmatmul.mubr.f32.gmra.mxu0 %v693
        %v910 = vpop.f32.mrf.mxu0
        %v911 = vadd.f32 %v842, %v910
        %v912 = vpop.f32.mrf.mxu0
        %913 = vdwg.mxu0
        %v915 = vlaneseq
        %v916 = vshrl.u32 %v915, 7
        %v917 = vsub.s32 0, %v916
        %v918 = vrot.slane %v760, %v917
        %920 = vmatprep.subr.mxu0 0.0
        %921 = vmatpush1.msra.mxu0 %v741
        %922 = vmatprep.subr.mxu0 0.0
        %923 = vmatpush1.msra.mxu0 %v740
        %924 = vmatprep.subr.mxu0 0.0
        %925 = vmatpush1.msra.mxu0 %v739
        %926 = vmatprep.subr.mxu0 0.0
        %927 = vmatpush1.msra.mxu0 %v738
        %928 = vmatprep.subr.mxu0 0.0
        %929 = vmatpush1.msra.mxu0 %v737
        %930 = vmatprep.subr.mxu0 0.0
        %931 = vmatpush1.msra.mxu0 %v736
        %932 = vmatprep.subr.mxu0 0.0
        %933 = vmatpush1.msra.mxu0 %v735
        %934 = vmatprep.subr.mxu0 0.0
        %935 = vmatpush1.msra.mxu0 %v734
        %936 = vmatprep.subr.mxu0 0.0
        %937 = vmatpush1.msra.mxu0 %v733
        %938 = vmatprep.subr.mxu0 0.0
        %939 = vmatpush1.msra.mxu0 %v732
        %940 = vmatprep.subr.mxu0 0.0
        %941 = vmatpush1.msra.mxu0 %v731
        %942 = vmatprep.subr.mxu0 0.0
        %943 = vmatpush1.msra.mxu0 %v730
        %944 = vmatprep.subr.mxu0 0.0
        %945 = vmatpush1.msra.mxu0 %v729
        %946 = vmatprep.subr.mxu0 0.0
        %947 = vmatpush1.msra.mxu0 %v728
        %948 = vmatprep.subr.mxu0 0.0
        %949 = vmatpush1.msra.mxu0 %v727
        %950 = vmatprep.subr.mxu0 0.0
        %951 = vmatpush1.msra.mxu0 %v726
        %952 = vmatprep.subr.mxu0 0.0
        %953 = vmatpush2.msra.mxu0 0.0
        %954 = vmatprep.subr.mxu0 0.0
        %955 = vmatpush2.msra.mxu0 0.0
        %956 = vmatprep.subr.mxu0 0.0
        %957 = vmatpush2.msra.mxu0 0.0
        %958 = vmatprep.subr.mxu0 0.0
        %959 = vmatpush2.msra.mxu0 0.0
        %960 = vmatprep.subr.mxu0 0.0
        %961 = vmatpush2.msra.mxu0 0.0
        %962 = vmatprep.subr.mxu0 0.0
        %963 = vmatpush2.msra.mxu0 0.0
        %964 = vmatprep.subr.mxu0 0.0
        %965 = vmatpush2.msra.mxu0 0.0
        %966 = vmatprep.subr.mxu0 0.0
        %967 = vmatpush2.msra.mxu0 0.0
        %968 = vmatprep.subr.mxu0 0.0
        %969 = vmatpush2.msra.mxu0 0.0
        %970 = vmatprep.subr.mxu0 0.0
        %971 = vmatpush2.msra.mxu0 0.0
        %972 = vmatprep.subr.mxu0 0.0
        %973 = vmatpush2.msra.mxu0 0.0
        %974 = vmatprep.subr.mxu0 0.0
        %975 = vmatpush2.msra.mxu0 0.0
        %976 = vmatprep.subr.mxu0 0.0
        %977 = vmatpush2.msra.mxu0 0.0
        %978 = vmatprep.subr.mxu0 0.0
        %979 = vmatpush2.msra.mxu0 0.0
        %980 = vmatprep.subr.mxu0 0.0
        %981 = vmatpush2.msra.mxu0 0.0
        %982 = vmatprep.subr.mxu0 0.0
        %983 = vmatpush2.msra.mxu0 0.0
        %984 = vmatprep.mubr.f32.mxu0 0.0
        %985 = vmatmul.mubr.f32.gmra.mxu0 %v693
        %v986 = vpop.f32.mrf.mxu0
        %v987 = vadd.f32 %v918, %v986
        %v988 = vpop.f32.mrf.mxu0
        %989 = vdwg.mxu0
        %vm990 = vcmask 261120
        %v992 = vsel %vm990, %v835, 0
        %v995 = vsel %vm990, %v911, 0
        %997 = vmatprep.subr.mxu0 0.0
        %998 = vmatpush1.xpose.msra.mxu0 0.0
        %999 = vmatprep.subr.mxu0 0.0
        %1000 = vmatpush1.xpose.msra.mxu0 0.0
        %1001 = vmatprep.subr.mxu0 0.0
        %1002 = vmatpush1.xpose.msra.mxu0 0.0
        %1003 = vmatprep.subr.mxu0 0.0
        %1004 = vmatpush1.xpose.msra.mxu0 0.0
        %1005 = vmatprep.subr.mxu0 0.0
        %1006 = vmatpush1.xpose.msra.mxu0 0.0
        %1007 = vmatprep.subr.mxu0 0.0
        %1008 = vmatpush1.xpose.msra.mxu0 0.0
        %1009 = vmatprep.subr.mxu0 0.0
        %1010 = vmatpush1.xpose.msra.mxu0 0.0
        %1011 = vmatprep.subr.mxu0 0.0
        %1012 = vmatpush1.xpose.msra.mxu0 0.0
        %1013 = vmatprep.subr.mxu0 0.0
        %1014 = vmatpush1.xpose.msra.mxu0 0.0
        %1015 = vmatprep.subr.mxu0 0.0
        %1016 = vmatpush1.xpose.msra.mxu0 0.0
        %1017 = vmatprep.subr.mxu0 0.0
        %1018 = vmatpush1.xpose.msra.mxu0 0.0
        %1019 = vmatprep.subr.mxu0 0.0
        %1020 = vmatpush1.xpose.msra.mxu0 0.0
        %1021 = vmatprep.subr.mxu0 0.0
        %1022 = vmatpush1.xpose.msra.mxu0 0.0
        %1023 = vmatprep.subr.mxu0 0.0
        %1024 = vmatpush1.xpose.msra.mxu0 0.0
        %1025 = vmatprep.subr.mxu0 0.0
        %1026 = vmatpush1.xpose.msra.mxu0 0.0
        %1027 = vmatprep.subr.mxu0 0.0
        %1028 = vmatpush1.xpose.msra.mxu0 %v995
        %1029 = vmatprep.subr.mxu0 0.0
        %1030 = vmatpush2.xpose.msra.mxu0 0.0
        %1031 = vmatprep.subr.mxu0 0.0
        %1032 = vmatpush2.xpose.msra.mxu0 0.0
        %1033 = vmatprep.subr.mxu0 0.0
        %1034 = vmatpush2.xpose.msra.mxu0 0.0
        %1035 = vmatprep.subr.mxu0 0.0
        %1036 = vmatpush2.xpose.msra.mxu0 0.0
        %1037 = vmatprep.subr.mxu0 0.0
        %1038 = vmatpush2.xpose.msra.mxu0 0.0
        %1039 = vmatprep.subr.mxu0 0.0
        %1040 = vmatpush2.xpose.msra.mxu0 0.0
        %1041 = vmatprep.subr.mxu0 0.0
        %1042 = vmatpush2.xpose.msra.mxu0 0.0
        %1043 = vmatprep.subr.mxu0 0.0
        %1044 = vmatpush2.xpose.msra.mxu0 0.0
        %1045 = vmatprep.subr.mxu0 0.0
        %1046 = vmatpush2.xpose.msra.mxu0 0.0
        %1047 = vmatprep.subr.mxu0 0.0
        %1048 = vmatpush2.xpose.msra.mxu0 0.0
        %1049 = vmatprep.subr.mxu0 0.0
        %1050 = vmatpush2.xpose.msra.mxu0 0.0
        %1051 = vmatprep.subr.mxu0 0.0
        %1052 = vmatpush2.xpose.msra.mxu0 0.0
        %1053 = vmatprep.subr.mxu0 0.0
        %1054 = vmatpush2.xpose.msra.mxu0 0.0
        %1055 = vmatprep.subr.mxu0 0.0
        %1056 = vmatpush2.xpose.msra.mxu0 0.0
        %1057 = vmatprep.subr.mxu0 0.0
        %1058 = vmatpush2.xpose.msra.mxu0 0.0
        %1059 = vmatprep.subr.mxu0 0.0
        %1060 = vmatpush2.xpose.msra.mxu0 0.0
        %1061 = vmatprep.mubr.f32.mxu0 0.0
        %1062 = vmatmul.mubr.f32.gmra.mxu0 %v992
        %v1063 = vpop.f32.mrf.mxu0
        %v1064 = vadd.f32 0.0, %v1063
        %v1065 = vpop.f32.mrf.mxu0
        %1066 = vdwg.mxu0
        %v1067 = vmul.f32 %v1064, 0.17677669
        %vm1068 = vcmask 64512
        %v1069 = vsel %vm1068, %v1067, -inf
        %1070 = vmax.xlane.f32.xlu0 %v1069
        %v1071 = vpop.xlane.xlu0 %1070
        %v1072 = vsub.f32 %v1067, %v1071
        %v1073 = vmul.f32 %v1072, 1.442695
        %v1074 = vpow.pop %v1073
        %v1075 = vsel %vm1068, %v1074, 0.0
        %1076 = vadd.xlane.f32.xlu0 %v1075
        %v1077 = vpop.xlane.xlu0 %1076
        %v1078 = vrcp.pop %v1077
        %v1079 = vmul.f32 %v1074, %v1078
        %v1081 = vsel %vm1068, %v1079, 0
        %1083 = vmatprep.subr.mxu0 0.0
        %1084 = vmatpush1.msra.mxu0 0.0
        %1085 = vmatprep.subr.mxu0 0.0
        %1086 = vmatpush1.msra.mxu0 0.0
        %1087 = vmatprep.subr.mxu0 0.0
        %1088 = vmatpush1.msra.mxu0 0.0
        %1089 = vmatprep.subr.mxu0 0.0
        %1090 = vmatpush1.msra.mxu0 0.0
        %1091 = vmatprep.subr.mxu0 0.0
        %1092 = vmatpush1.msra.mxu0 0.0
        %1093 = vmatprep.subr.mxu0 0.0
        %1094 = vmatpush1.msra.mxu0 0.0
        %1095 = vmatprep.subr.mxu0 0.0
        %1096 = vmatpush1.msra.mxu0 0.0
        %1097 = vmatprep.subr.mxu0 0.0
        %1098 = vmatpush1.msra.mxu0 0.0
        %1099 = vmatprep.subr.mxu0 0.0
        %1100 = vmatpush1.msra.mxu0 0.0
        %1101 = vmatprep.subr.mxu0 0.0
        %1102 = vmatpush1.msra.mxu0 0.0
        %1103 = vmatprep.subr.mxu0 0.0
        %1104 = vmatpush1.msra.mxu0 0.0
        %1105 = vmatprep.subr.mxu0 0.0
        %1106 = vmatpush1.msra.mxu0 0.0
        %1107 = vmatprep.subr.mxu0 0.0
        %1108 = vmatpush1.msra.mxu0 0.0
        %1109 = vmatprep.subr.mxu0 0.0
        %1110 = vmatpush1.msra.mxu0 0.0
        %1111 = vmatprep.subr.mxu0 0.0
        %1112 = vmatpush1.msra.mxu0 0.0
        %1113 = vmatprep.subr.mxu0 0.0
        %1114 = vmatpush1.msra.mxu0 %v987
        %1115 = vmatprep.subr.mxu0 0.0
        %1116 = vmatpush2.msra.mxu0 0.0
        %1117 = vmatprep.subr.mxu0 0.0
        %1118 = vmatpush2.msra.mxu0 0.0
        %1119 = vmatprep.subr.mxu0 0.0
        %1120 = vmatpush2.msra.mxu0 0.0
        %1121 = vmatprep.subr.mxu0 0.0
        %1122 = vmatpush2.msra.mxu0 0.0
        %1123 = vmatprep.subr.mxu0 0.0
        %1124 = vmatpush2.msra.mxu0 0.0
        %1125 = vmatprep.subr.mxu0 0.0
        %1126 = vmatpush2.msra.mxu0 0.0
        %1127 = vmatprep.subr.mxu0 0.0
        %1128 = vmatpush2.msra.mxu0 0.0
        %1129 = vmatprep.subr.mxu0 0.0
        %1130 = vmatpush2.msra.mxu0 0.0
        %1131 = vmatprep.subr.mxu0 0.0
        %1132 = vmatpush2.msra.mxu0 0.0
        %1133 = vmatprep.subr.mxu0 0.0
        %1134 = vmatpush2.msra.mxu0 0.0
        %1135 = vmatprep.subr.mxu0 0.0
        %1136 = vmatpush2.msra.mxu0 0.0
        %1137 = vmatprep.subr.mxu0 0.0
        %1138 = vmatpush2.msra.mxu0 0.0
        %1139 = vmatprep.subr.mxu0 0.0
        %1140 = vmatpush2.msra.mxu0 0.0
        %1141 = vmatprep.subr.mxu0 0.0
        %1142 = vmatpush2.msra.mxu0 0.0
        %1143 = vmatprep.subr.mxu0 0.0
        %1144 = vmatpush2.msra.mxu0 0.0
        %1145 = vmatprep.subr.mxu0 0.0
        %1146 = vmatpush2.msra.mxu0 0.0
        %1147 = vmatprep.mubr.f32.mxu0 0.0
        %1148 = vmatmul.mubr.f32.gmra.mxu0 %v1081
        %v1149 = vpop.f32.mrf.mxu0
        %v1150 = vadd.f32 0.0, %v1149
        %v1151 = vpop.f32.mrf.mxu0
        %1152 = vdwg.mxu0
        %1153 = vrot.lane.b32.xlu0 %v835, 96
        %v1154 = vpop.permute.xlu0 %1153
        %1155 = vrot.lane.b32.xlu0 %v911, 96
        %v1156 = vpop.permute.xlu0 %1155
        %v1157 = vsel %vm990, %v1154, 0
        %v1159 = vsel %vm990, %v1156, 0
        %1161 = vmatprep.subr.mxu0 0.0
        %1162 = vmatpush1.xpose.msra.mxu0 0.0
        %1163 = vmatprep.subr.mxu0 0.0
        %1164 = vmatpush1.xpose.msra.mxu0 0.0
        %1165 = vmatprep.subr.mxu0 0.0
        %1166 = vmatpush1.xpose.msra.mxu0 0.0
        %1167 = vmatprep.subr.mxu0 0.0
        %1168 = vmatpush1.xpose.msra.mxu0 0.0
        %1169 = vmatprep.subr.mxu0 0.0
        %1170 = vmatpush1.xpose.msra.mxu0 0.0
        %1171 = vmatprep.subr.mxu0 0.0
        %1172 = vmatpush1.xpose.msra.mxu0 0.0
        %1173 = vmatprep.subr.mxu0 0.0
        %1174 = vmatpush1.xpose.msra.mxu0 0.0
        %1175 = vmatprep.subr.mxu0 0.0
        %1176 = vmatpush1.xpose.msra.mxu0 0.0
        %1177 = vmatprep.subr.mxu0 0.0
        %1178 = vmatpush1.xpose.msra.mxu0 0.0
        %1179 = vmatprep.subr.mxu0 0.0
        %1180 = vmatpush1.xpose.msra.mxu0 0.0
        %1181 = vmatprep.subr.mxu0 0.0
        %1182 = vmatpush1.xpose.msra.mxu0 0.0
        %1183 = vmatprep.subr.mxu0 0.0
        %1184 = vmatpush1.xpose.msra.mxu0 0.0
        %1185 = vmatprep.subr.mxu0 0.0
        %1186 = vmatpush1.xpose.msra.mxu0 0.0
        %1187 = vmatprep.subr.mxu0 0.0
        %1188 = vmatpush1.xpose.msra.mxu0 0.0
        %1189 = vmatprep.subr.mxu0 0.0
        %1190 = vmatpush1.xpose.msra.mxu0 0.0
        %1191 = vmatprep.subr.mxu0 0.0
        %1192 = vmatpush1.xpose.msra.mxu0 %v1159
        %1193 = vmatprep.subr.mxu0 0.0
        %1194 = vmatpush2.xpose.msra.mxu0 0.0
        %1195 = vmatprep.subr.mxu0 0.0
        %1196 = vmatpush2.xpose.msra.mxu0 0.0
        %1197 = vmatprep.subr.mxu0 0.0
        %1198 = vmatpush2.xpose.msra.mxu0 0.0
        %1199 = vmatprep.subr.mxu0 0.0
        %1200 = vmatpush2.xpose.msra.mxu0 0.0
        %1201 = vmatprep.subr.mxu0 0.0
        %1202 = vmatpush2.xpose.msra.mxu0 0.0
        %1203 = vmatprep.subr.mxu0 0.0
        %1204 = vmatpush2.xpose.msra.mxu0 0.0
        %1205 = vmatprep.subr.mxu0 0.0
        %1206 = vmatpush2.xpose.msra.mxu0 0.0
        %1207 = vmatprep.subr.mxu0 0.0
        %1208 = vmatpush2.xpose.msra.mxu0 0.0
        %1209 = vmatprep.subr.mxu0 0.0
        %1210 = vmatpush2.xpose.msra.mxu0 0.0
        %1211 = vmatprep.subr.mxu0 0.0
        %1212 = vmatpush2.xpose.msra.mxu0 0.0
        %1213 = vmatprep.subr.mxu0 0.0
        %1214 = vmatpush2.xpose.msra.mxu0 0.0
        %1215 = vmatprep.subr.mxu0 0.0
        %1216 = vmatpush2.xpose.msra.mxu0 0.0
        %1217 = vmatprep.subr.mxu0 0.0
        %1218 = vmatpush2.xpose.msra.mxu0 0.0
        %1219 = vmatprep.subr.mxu0 0.0
        %1220 = vmatpush2.xpose.msra.mxu0 0.0
        %1221 = vmatprep.subr.mxu0 0.0
        %1222 = vmatpush2.xpose.msra.mxu0 0.0
        %1223 = vmatprep.subr.mxu0 0.0
        %1224 = vmatpush2.xpose.msra.mxu0 0.0
        %1225 = vmatprep.mubr.f32.mxu0 0.0
        %1226 = vmatmul.mubr.f32.gmra.mxu0 %v1157
        %v1227 = vpop.f32.mrf.mxu0
        %v1228 = vadd.f32 0.0, %v1227
        %v1229 = vpop.f32.mrf.mxu0
        %1230 = vdwg.mxu0
        %v1231 = vmul.f32 %v1228, 0.17677669
        %v1232 = vsel %vm1068, %v1231, -inf
        %1233 = vmax.xlane.f32.xlu0 %v1232
        %v1234 = vpop.xlane.xlu0 %1233
        %v1235 = vsub.f32 %v1231, %v1234
        %v1236 = vmul.f32 %v1235, 1.442695
        %v1237 = vpow.pop %v1236
        %v1238 = vsel %vm1068, %v1237, 0.0
        %1239 = vadd.xlane.f32.xlu0 %v1238
        %v1240 = vpop.xlane.xlu0 %1239
        %v1241 = vrcp.pop %v1240
        %v1242 = vmul.f32 %v1237, %v1241
        %1244 = vrot.lane.b32.xlu0 %v987, 96
        %v1245 = vpop.permute.xlu0 %1244
        %v1248 = vsel %vm1068, %v1242, 0
        %1250 = vmatprep.subr.mxu0 0.0
        %1251 = vmatpush1.msra.mxu0 0.0
        %1252 = vmatprep.subr.mxu0 0.0
        %1253 = vmatpush1.msra.mxu0 0.0
        %1254 = vmatprep.subr.mxu0 0.0
        %1255 = vmatpush1.msra.mxu0 0.0
        %1256 = vmatprep.subr.mxu0 0.0
        %1257 = vmatpush1.msra.mxu0 0.0
        %1258 = vmatprep.subr.mxu0 0.0
        %1259 = vmatpush1.msra.mxu0 0.0
        %1260 = vmatprep.subr.mxu0 0.0
        %1261 = vmatpush1.msra.mxu0 0.0
        %1262 = vmatprep.subr.mxu0 0.0
        %1263 = vmatpush1.msra.mxu0 0.0
        %1264 = vmatprep.subr.mxu0 0.0
        %1265 = vmatpush1.msra.mxu0 0.0
        %1266 = vmatprep.subr.mxu0 0.0
        %1267 = vmatpush1.msra.mxu0 0.0
        %1268 = vmatprep.subr.mxu0 0.0
        %1269 = vmatpush1.msra.mxu0 0.0
        %1270 = vmatprep.subr.mxu0 0.0
        %1271 = vmatpush1.msra.mxu0 0.0
        %1272 = vmatprep.subr.mxu0 0.0
        %1273 = vmatpush1.msra.mxu0 0.0
        %1274 = vmatprep.subr.mxu0 0.0
        %1275 = vmatpush1.msra.mxu0 0.0
        %1276 = vmatprep.subr.mxu0 0.0
        %1277 = vmatpush1.msra.mxu0 0.0
        %1278 = vmatprep.subr.mxu0 0.0
        %1279 = vmatpush1.msra.mxu0 0.0
        %1280 = vmatprep.subr.mxu0 0.0
        %1281 = vmatpush1.msra.mxu0 %v1245
        %1282 = vmatprep.subr.mxu0 0.0
        %1283 = vmatpush2.msra.mxu0 0.0
        %1284 = vmatprep.subr.mxu0 0.0
        %1285 = vmatpush2.msra.mxu0 0.0
        %1286 = vmatprep.subr.mxu0 0.0
        %1287 = vmatpush2.msra.mxu0 0.0
        %1288 = vmatprep.subr.mxu0 0.0
        %1289 = vmatpush2.msra.mxu0 0.0
        %1290 = vmatprep.subr.mxu0 0.0
        %1291 = vmatpush2.msra.mxu0 0.0
        %1292 = vmatprep.subr.mxu0 0.0
        %1293 = vmatpush2.msra.mxu0 0.0
        %1294 = vmatprep.subr.mxu0 0.0
        %1295 = vmatpush2.msra.mxu0 0.0
        %1296 = vmatprep.subr.mxu0 0.0
        %1297 = vmatpush2.msra.mxu0 0.0
        %1298 = vmatprep.subr.mxu0 0.0
        %1299 = vmatpush2.msra.mxu0 0.0
        %1300 = vmatprep.subr.mxu0 0.0
        %1301 = vmatpush2.msra.mxu0 0.0
        %1302 = vmatprep.subr.mxu0 0.0
        %1303 = vmatpush2.msra.mxu0 0.0
        %1304 = vmatprep.subr.mxu0 0.0
        %1305 = vmatpush2.msra.mxu0 0.0
        %1306 = vmatprep.subr.mxu0 0.0
        %1307 = vmatpush2.msra.mxu0 0.0
        %1308 = vmatprep.subr.mxu0 0.0
        %1309 = vmatpush2.msra.mxu0 0.0
        %1310 = vmatprep.subr.mxu0 0.0
        %1311 = vmatpush2.msra.mxu0 0.0
        %1312 = vmatprep.subr.mxu0 0.0
        %1313 = vmatpush2.msra.mxu0 0.0
        %1314 = vmatprep.mubr.f32.mxu0 0.0
        %1315 = vmatmul.mubr.f32.gmra.mxu0 %v1248
        %v1316 = vpop.f32.mrf.mxu0
        %v1317 = vadd.f32 0.0, %v1316
        %v1318 = vpop.f32.mrf.mxu0
        %1319 = vdwg.mxu0
        %v1321 = vsel %vm990, %v1317, 0
        %1323 = vmatprep.subr.mxu0 0.0
        %1324 = vmatpush1.msra.mxu0 0.0
        %1325 = vmatprep.subr.mxu0 0.0
        %1326 = vmatpush1.msra.mxu0 0.0
        %1327 = vmatprep.subr.mxu0 0.0
        %1328 = vmatpush1.msra.mxu0 0.0
        %1329 = vmatprep.subr.mxu0 0.0
        %1330 = vmatpush1.msra.mxu0 0.0
        %1331 = vmatprep.subr.mxu0 0.0
        %1332 = vmatpush1.msra.mxu0 0.0
        %1333 = vmatprep.subr.mxu0 0.0
        %1334 = vmatpush1.msra.mxu0 0.0
        %1335 = vmatprep.subr.mxu0 0.0
        %1336 = vmatpush1.msra.mxu0 0.0
        %1337 = vmatprep.subr.mxu0 0.0
        %1338 = vmatpush1.msra.mxu0 0.0
        %1339 = vmatprep.subr.mxu0 0.0
        %1340 = vmatpush1.msra.mxu0 0.0
        %1341 = vmatprep.subr.mxu0 0.0
        %1342 = vmatpush1.msra.mxu0 0.0
        %1343 = vmatprep.subr.mxu0 0.0
        %1344 = vmatpush1.msra.mxu0 0.0
        %1345 = vmatprep.subr.mxu0 0.0
        %1346 = vmatpush1.msra.mxu0 0.0
        %1347 = vmatprep.subr.mxu0 0.0
        %1348 = vmatpush1.msra.mxu0 %v749
        %1349 = vmatprep.subr.mxu0 0.0
        %1350 = vmatpush1.msra.mxu0 %v748
        %1351 = vmatprep.subr.mxu0 0.0
        %1352 = vmatpush1.msra.mxu0 %v747
        %1353 = vmatprep.subr.mxu0 0.0
        %1354 = vmatpush1.msra.mxu0 %v746
        %1355 = vmatprep.subr.mxu0 0.0
        %1356 = vmatpush2.msra.mxu0 0.0
        %1357 = vmatprep.subr.mxu0 0.0
        %1358 = vmatpush2.msra.mxu0 0.0
        %1359 = vmatprep.subr.mxu0 0.0
        %1360 = vmatpush2.msra.mxu0 0.0
        %1361 = vmatprep.subr.mxu0 0.0
        %1362 = vmatpush2.msra.mxu0 0.0
        %1363 = vmatprep.subr.mxu0 0.0
        %1364 = vmatpush2.msra.mxu0 0.0
        %1365 = vmatprep.subr.mxu0 0.0
        %1366 = vmatpush2.msra.mxu0 0.0
        %1367 = vmatprep.subr.mxu0 0.0
        %1368 = vmatpush2.msra.mxu0 0.0
        %1369 = vmatprep.subr.mxu0 0.0
        %1370 = vmatpush2.msra.mxu0 0.0
        %1371 = vmatprep.subr.mxu0 0.0
        %1372 = vmatpush2.msra.mxu0 0.0
        %1373 = vmatprep.subr.mxu0 0.0
        %1374 = vmatpush2.msra.mxu0 0.0
        %1375 = vmatprep.subr.mxu0 0.0
        %1376 = vmatpush2.msra.mxu0 0.0
        %1377 = vmatprep.subr.mxu0 0.0
        %1378 = vmatpush2.msra.mxu0 0.0
        %1379 = vmatprep.subr.mxu0 0.0
        %1380 = vmatpush2.msra.mxu0 0.0
        %1381 = vmatprep.subr.mxu0 0.0
        %1382 = vmatpush2.msra.mxu0 0.0
        %1383 = vmatprep.subr.mxu0 0.0
        %1384 = vmatpush2.msra.mxu0 0.0
        %1385 = vmatprep.subr.mxu0 0.0
        %1386 = vmatpush2.msra.mxu0 0.0
        %1387 = vmatprep.mubr.f32.mxu0 0.0
        %1388 = vmatmul.mubr.f32.gmra.mxu0 %v1321
        %v1389 = vpop.f32.mrf.mxu0
        %v1390 = vadd.f32 0.0, %v1389
        %v1391 = vpop.f32.mrf.mxu0
        %1392 = vdwg.mxu0
        %v1394 = vsel %vm990, %v1150, 0
        %1396 = vmatprep.subr.mxu0 0.0
        %1397 = vmatpush1.msra.mxu0 0.0
        %1398 = vmatprep.subr.mxu0 0.0
        %1399 = vmatpush1.msra.mxu0 0.0
        %1400 = vmatprep.subr.mxu0 0.0
        %1401 = vmatpush1.msra.mxu0 0.0
        %1402 = vmatprep.subr.mxu0 0.0
        %1403 = vmatpush1.msra.mxu0 0.0
        %1404 = vmatprep.subr.mxu0 0.0
        %1405 = vmatpush1.msra.mxu0 0.0
        %1406 = vmatprep.subr.mxu0 0.0
        %1407 = vmatpush1.msra.mxu0 0.0
        %1408 = vmatprep.subr.mxu0 0.0
        %1409 = vmatpush1.msra.mxu0 0.0
        %1410 = vmatprep.subr.mxu0 0.0
        %1411 = vmatpush1.msra.mxu0 0.0
        %1412 = vmatprep.subr.mxu0 0.0
        %1413 = vmatpush1.msra.mxu0 0.0
        %1414 = vmatprep.subr.mxu0 0.0
        %1415 = vmatpush1.msra.mxu0 0.0
        %1416 = vmatprep.subr.mxu0 0.0
        %1417 = vmatpush1.msra.mxu0 0.0
        %1418 = vmatprep.subr.mxu0 0.0
        %1419 = vmatpush1.msra.mxu0 0.0
        %1420 = vmatprep.subr.mxu0 0.0
        %1421 = vmatpush1.msra.mxu0 %v745
        %1422 = vmatprep.subr.mxu0 0.0
        %1423 = vmatpush1.msra.mxu0 %v744
        %1424 = vmatprep.subr.mxu0 0.0
        %1425 = vmatpush1.msra.mxu0 %v743
        %1426 = vmatprep.subr.mxu0 0.0
        %1427 = vmatpush1.msra.mxu0 %v742
        %1428 = vmatprep.subr.mxu0 0.0
        %1429 = vmatpush2.msra.mxu0 0.0
        %1430 = vmatprep.subr.mxu0 0.0
        %1431 = vmatpush2.msra.mxu0 0.0
        %1432 = vmatprep.subr.mxu0 0.0
        %1433 = vmatpush2.msra.mxu0 0.0
        %1434 = vmatprep.subr.mxu0 0.0
        %1435 = vmatpush2.msra.mxu0 0.0
        %1436 = vmatprep.subr.mxu0 0.0
        %1437 = vmatpush2.msra.mxu0 0.0
        %1438 = vmatprep.subr.mxu0 0.0
        %1439 = vmatpush2.msra.mxu0 0.0
        %1440 = vmatprep.subr.mxu0 0.0
        %1441 = vmatpush2.msra.mxu0 0.0
        %1442 = vmatprep.subr.mxu0 0.0
        %1443 = vmatpush2.msra.mxu0 0.0
        %1444 = vmatprep.subr.mxu0 0.0
        %1445 = vmatpush2.msra.mxu0 0.0
        %1446 = vmatprep.subr.mxu0 0.0
        %1447 = vmatpush2.msra.mxu0 0.0
        %1448 = vmatprep.subr.mxu0 0.0
        %1449 = vmatpush2.msra.mxu0 0.0
        %1450 = vmatprep.subr.mxu0 0.0
        %1451 = vmatpush2.msra.mxu0 0.0
        %1452 = vmatprep.subr.mxu0 0.0
        %1453 = vmatpush2.msra.mxu0 0.0
        %1454 = vmatprep.subr.mxu0 0.0
        %1455 = vmatpush2.msra.mxu0 0.0
        %1456 = vmatprep.subr.mxu0 0.0
        %1457 = vmatpush2.msra.mxu0 0.0
        %1458 = vmatprep.subr.mxu0 0.0
        %1459 = vmatpush2.msra.mxu0 0.0
        %1460 = vmatprep.mubr.f32.mxu0 0.0
        %1461 = vmatmul.mubr.f32.gmra.mxu0 %v1394
        %v1462 = vpop.f32.mrf.mxu0
        %v1463 = vadd.f32 %v1390, %v1462
        %v1464 = vpop.f32.mrf.mxu0
        %1465 = vdwg.mxu0
        %1466 = vrot.lane.b32.xlu0 %v835, 64
        %v1467 = vpop.permute.xlu0 %1466
        %1468 = vrot.lane.b32.xlu0 %v911, 64
        %v1469 = vpop.permute.xlu0 %1468
        %v1470 = vsel %vm990, %v1467, 0
        %v1472 = vsel %vm990, %v1469, 0
        %1474 = vmatprep.subr.mxu0 0.0
        %1475 = vmatpush1.xpose.msra.mxu0 0.0
        %1476 = vmatprep.subr.mxu0 0.0
        %1477 = vmatpush1.xpose.msra.mxu0 0.0
        %1478 = vmatprep.subr.mxu0 0.0
        %1479 = vmatpush1.xpose.msra.mxu0 0.0
        %1480 = vmatprep.subr.mxu0 0.0
        %1481 = vmatpush1.xpose.msra.mxu0 0.0
        %1482 = vmatprep.subr.mxu0 0.0
        %1483 = vmatpush1.xpose.msra.mxu0 0.0
        %1484 = vmatprep.subr.mxu0 0.0
        %1485 = vmatpush1.xpose.msra.mxu0 0.0
        %1486 = vmatprep.subr.mxu0 0.0
        %1487 = vmatpush1.xpose.msra.mxu0 0.0
        %1488 = vmatprep.subr.mxu0 0.0
        %1489 = vmatpush1.xpose.msra.mxu0 0.0
        %1490 = vmatprep.subr.mxu0 0.0
        %1491 = vmatpush1.xpose.msra.mxu0 0.0
        %1492 = vmatprep.subr.mxu0 0.0
        %1493 = vmatpush1.xpose.msra.mxu0 0.0
        %1494 = vmatprep.subr.mxu0 0.0
        %1495 = vmatpush1.xpose.msra.mxu0 0.0
        %1496 = vmatprep.subr.mxu0 0.0
        %1497 = vmatpush1.xpose.msra.mxu0 0.0
        %1498 = vmatprep.subr.mxu0 0.0
        %1499 = vmatpush1.xpose.msra.mxu0 0.0
        %1500 = vmatprep.subr.mxu0 0.0
        %1501 = vmatpush1.xpose.msra.mxu0 0.0
        %1502 = vmatprep.subr.mxu0 0.0
        %1503 = vmatpush1.xpose.msra.mxu0 0.0
        %1504 = vmatprep.subr.mxu0 0.0
        %1505 = vmatpush1.xpose.msra.mxu0 %v1472
        %1506 = vmatprep.subr.mxu0 0.0
        %1507 = vmatpush2.xpose.msra.mxu0 0.0
        %1508 = vmatprep.subr.mxu0 0.0
        %1509 = vmatpush2.xpose.msra.mxu0 0.0
        %1510 = vmatprep.subr.mxu0 0.0
        %1511 = vmatpush2.xpose.msra.mxu0 0.0
        %1512 = vmatprep.subr.mxu0 0.0
        %1513 = vmatpush2.xpose.msra.mxu0 0.0
        %1514 = vmatprep.subr.mxu0 0.0
        %1515 = vmatpush2.xpose.msra.mxu0 0.0
        %1516 = vmatprep.subr.mxu0 0.0
        %1517 = vmatpush2.xpose.msra.mxu0 0.0
        %1518 = vmatprep.subr.mxu0 0.0
        %1519 = vmatpush2.xpose.msra.mxu0 0.0
        %1520 = vmatprep.subr.mxu0 0.0
        %1521 = vmatpush2.xpose.msra.mxu0 0.0
        %1522 = vmatprep.subr.mxu0 0.0
        %1523 = vmatpush2.xpose.msra.mxu0 0.0
        %1524 = vmatprep.subr.mxu0 0.0
        %1525 = vmatpush2.xpose.msra.mxu0 0.0
        %1526 = vmatprep.subr.mxu0 0.0
        %1527 = vmatpush2.xpose.msra.mxu0 0.0
        %1528 = vmatprep.subr.mxu0 0.0
        %1529 = vmatpush2.xpose.msra.mxu0 0.0
        %1530 = vmatprep.subr.mxu0 0.0
        %1531 = vmatpush2.xpose.msra.mxu0 0.0
        %1532 = vmatprep.subr.mxu0 0.0
        %1533 = vmatpush2.xpose.msra.mxu0 0.0
        %1534 = vmatprep.subr.mxu0 0.0
        %1535 = vmatpush2.xpose.msra.mxu0 0.0
        %1536 = vmatprep.subr.mxu0 0.0
        %1537 = vmatpush2.xpose.msra.mxu0 0.0
        %1538 = vmatprep.mubr.f32.mxu0 0.0
        %1539 = vmatmul.mubr.f32.gmra.mxu0 %v1470
        %v1540 = vpop.f32.mrf.mxu0
        %v1541 = vadd.f32 0.0, %v1540
        %v1542 = vpop.f32.mrf.mxu0
        %1543 = vdwg.mxu0
        %v1544 = vmul.f32 %v1541, 0.17677669
        %v1545 = vsel %vm1068, %v1544, -inf
        %1546 = vmax.xlane.f32.xlu0 %v1545
        %v1547 = vpop.xlane.xlu0 %1546
        %v1548 = vsub.f32 %v1544, %v1547
        %v1549 = vmul.f32 %v1548, 1.442695
        %v1550 = vpow.pop %v1549
        %v1551 = vsel %vm1068, %v1550, 0.0
        %1552 = vadd.xlane.f32.xlu0 %v1551
        %v1553 = vpop.xlane.xlu0 %1552
        %v1554 = vrcp.pop %v1553
        %v1555 = vmul.f32 %v1550, %v1554
        %1556 = vrot.lane.b32.xlu0 %v987, 64
        %v1557 = vpop.permute.xlu0 %1556
        %v1560 = vsel %vm1068, %v1555, 0
        %1562 = vmatprep.subr.mxu0 0.0
        %1563 = vmatpush1.msra.mxu0 0.0
        %1564 = vmatprep.subr.mxu0 0.0
        %1565 = vmatpush1.msra.mxu0 0.0
        %1566 = vmatprep.subr.mxu0 0.0
        %1567 = vmatpush1.msra.mxu0 0.0
        %1568 = vmatprep.subr.mxu0 0.0
        %1569 = vmatpush1.msra.mxu0 0.0
        %1570 = vmatprep.subr.mxu0 0.0
        %1571 = vmatpush1.msra.mxu0 0.0
        %1572 = vmatprep.subr.mxu0 0.0
        %1573 = vmatpush1.msra.mxu0 0.0
        %1574 = vmatprep.subr.mxu0 0.0
        %1575 = vmatpush1.msra.mxu0 0.0
        %1576 = vmatprep.subr.mxu0 0.0
        %1577 = vmatpush1.msra.mxu0 0.0
        %1578 = vmatprep.subr.mxu0 0.0
        %1579 = vmatpush1.msra.mxu0 0.0
        %1580 = vmatprep.subr.mxu0 0.0
        %1581 = vmatpush1.msra.mxu0 0.0
        %1582 = vmatprep.subr.mxu0 0.0
        %1583 = vmatpush1.msra.mxu0 0.0
        %1584 = vmatprep.subr.mxu0 0.0
        %1585 = vmatpush1.msra.mxu0 0.0
        %1586 = vmatprep.subr.mxu0 0.0
        %1587 = vmatpush1.msra.mxu0 0.0
        %1588 = vmatprep.subr.mxu0 0.0
        %1589 = vmatpush1.msra.mxu0 0.0
        %1590 = vmatprep.subr.mxu0 0.0
        %1591 = vmatpush1.msra.mxu0 0.0
        %1592 = vmatprep.subr.mxu0 0.0
        %1593 = vmatpush1.msra.mxu0 %v1557
        %1594 = vmatprep.subr.mxu0 0.0
        %1595 = vmatpush2.msra.mxu0 0.0
        %1596 = vmatprep.subr.mxu0 0.0
        %1597 = vmatpush2.msra.mxu0 0.0
        %1598 = vmatprep.subr.mxu0 0.0
        %1599 = vmatpush2.msra.mxu0 0.0
        %1600 = vmatprep.subr.mxu0 0.0
        %1601 = vmatpush2.msra.mxu0 0.0
        %1602 = vmatprep.subr.mxu0 0.0
        %1603 = vmatpush2.msra.mxu0 0.0
        %1604 = vmatprep.subr.mxu0 0.0
        %1605 = vmatpush2.msra.mxu0 0.0
        %1606 = vmatprep.subr.mxu0 0.0
        %1607 = vmatpush2.msra.mxu0 0.0
        %1608 = vmatprep.subr.mxu0 0.0
        %1609 = vmatpush2.msra.mxu0 0.0
        %1610 = vmatprep.subr.mxu0 0.0
        %1611 = vmatpush2.msra.mxu0 0.0
        %1612 = vmatprep.subr.mxu0 0.0
        %1613 = vmatpush2.msra.mxu0 0.0
        %1614 = vmatprep.subr.mxu0 0.0
        %1615 = vmatpush2.msra.mxu0 0.0
        %1616 = vmatprep.subr.mxu0 0.0
        %1617 = vmatpush2.msra.mxu0 0.0
        %1618 = vmatprep.subr.mxu0 0.0
        %1619 = vmatpush2.msra.mxu0 0.0
        %1620 = vmatprep.subr.mxu0 0.0
        %1621 = vmatpush2.msra.mxu0 0.0
        %1622 = vmatprep.subr.mxu0 0.0
        %1623 = vmatpush2.msra.mxu0 0.0
        %1624 = vmatprep.subr.mxu0 0.0
        %1625 = vmatpush2.msra.mxu0 0.0
        %1626 = vmatprep.mubr.f32.mxu0 0.0
        %1627 = vmatmul.mubr.f32.gmra.mxu0 %v1560
        %v1628 = vpop.f32.mrf.mxu0
        %v1629 = vadd.f32 0.0, %v1628
        %v1630 = vpop.f32.mrf.mxu0
        %1631 = vdwg.mxu0
        %v1633 = vsel %vm990, %v1629, 0
        %1635 = vmatprep.subr.mxu0 0.0
        %1636 = vmatpush1.msra.mxu0 0.0
        %1637 = vmatprep.subr.mxu0 0.0
        %1638 = vmatpush1.msra.mxu0 0.0
        %1639 = vmatprep.subr.mxu0 0.0
        %1640 = vmatpush1.msra.mxu0 0.0
        %1641 = vmatprep.subr.mxu0 0.0
        %1642 = vmatpush1.msra.mxu0 0.0
        %1643 = vmatprep.subr.mxu0 0.0
        %1644 = vmatpush1.msra.mxu0 0.0
        %1645 = vmatprep.subr.mxu0 0.0
        %1646 = vmatpush1.msra.mxu0 0.0
        %1647 = vmatprep.subr.mxu0 0.0
        %1648 = vmatpush1.msra.mxu0 0.0
        %1649 = vmatprep.subr.mxu0 0.0
        %1650 = vmatpush1.msra.mxu0 0.0
        %1651 = vmatprep.subr.mxu0 0.0
        %1652 = vmatpush1.msra.mxu0 0.0
        %1653 = vmatprep.subr.mxu0 0.0
        %1654 = vmatpush1.msra.mxu0 0.0
        %1655 = vmatprep.subr.mxu0 0.0
        %1656 = vmatpush1.msra.mxu0 0.0
        %1657 = vmatprep.subr.mxu0 0.0
        %1658 = vmatpush1.msra.mxu0 0.0
        %1659 = vmatprep.subr.mxu0 0.0
        %1660 = vmatpush1.msra.mxu0 %v753
        %1661 = vmatprep.subr.mxu0 0.0
        %1662 = vmatpush1.msra.mxu0 %v752
        %1663 = vmatprep.subr.mxu0 0.0
        %1664 = vmatpush1.msra.mxu0 %v751
        %1665 = vmatprep.subr.mxu0 0.0
        %1666 = vmatpush1.msra.mxu0 %v750
        %1667 = vmatprep.subr.mxu0 0.0
        %1668 = vmatpush2.msra.mxu0 0.0
        %1669 = vmatprep.subr.mxu0 0.0
        %1670 = vmatpush2.msra.mxu0 0.0
        %1671 = vmatprep.subr.mxu0 0.0
        %1672 = vmatpush2.msra.mxu0 0.0
        %1673 = vmatprep.subr.mxu0 0.0
        %1674 = vmatpush2.msra.mxu0 0.0
        %1675 = vmatprep.subr.mxu0 0.0
        %1676 = vmatpush2.msra.mxu0 0.0
        %1677 = vmatprep.subr.mxu0 0.0
        %1678 = vmatpush2.msra.mxu0 0.0
        %1679 = vmatprep.subr.mxu0 0.0
        %1680 = vmatpush2.msra.mxu0 0.0
        %1681 = vmatprep.subr.mxu0 0.0
        %1682 = vmatpush2.msra.mxu0 0.0
        %1683 = vmatprep.subr.mxu0 0.0
        %1684 = vmatpush2.msra.mxu0 0.0
        %1685 = vmatprep.subr.mxu0 0.0
        %1686 = vmatpush2.msra.mxu0 0.0
        %1687 = vmatprep.subr.mxu0 0.0
        %1688 = vmatpush2.msra.mxu0 0.0
        %1689 = vmatprep.subr.mxu0 0.0
        %1690 = vmatpush2.msra.mxu0 0.0
        %1691 = vmatprep.subr.mxu0 0.0
        %1692 = vmatpush2.msra.mxu0 0.0
        %1693 = vmatprep.subr.mxu0 0.0
        %1694 = vmatpush2.msra.mxu0 0.0
        %1695 = vmatprep.subr.mxu0 0.0
        %1696 = vmatpush2.msra.mxu0 0.0
        %1697 = vmatprep.subr.mxu0 0.0
        %1698 = vmatpush2.msra.mxu0 0.0
        %1699 = vmatprep.mubr.f32.mxu0 0.0
        %1700 = vmatmul.mubr.f32.gmra.mxu0 %v1633
        %v1701 = vpop.f32.mrf.mxu0
        %v1702 = vadd.f32 0.0, %v1701
        %v1703 = vpop.f32.mrf.mxu0
        %1704 = vdwg.mxu0
        %v1705 = vadd.f32 %v1463, %v1702
        %1706 = vrot.lane.b32.xlu0 %v835, 32
        %v1707 = vpop.permute.xlu0 %1706
        %1708 = vrot.lane.b32.xlu0 %v911, 32
        %v1709 = vpop.permute.xlu0 %1708
        %v1710 = vsel %vm990, %v1707, 0
        %v1712 = vsel %vm990, %v1709, 0
        %1714 = vmatprep.subr.mxu0 0.0
        %1715 = vmatpush1.xpose.msra.mxu0 0.0
        %1716 = vmatprep.subr.mxu0 0.0
        %1717 = vmatpush1.xpose.msra.mxu0 0.0
        %1718 = vmatprep.subr.mxu0 0.0
        %1719 = vmatpush1.xpose.msra.mxu0 0.0
        %1720 = vmatprep.subr.mxu0 0.0
        %1721 = vmatpush1.xpose.msra.mxu0 0.0
        %1722 = vmatprep.subr.mxu0 0.0
        %1723 = vmatpush1.xpose.msra.mxu0 0.0
        %1724 = vmatprep.subr.mxu0 0.0
        %1725 = vmatpush1.xpose.msra.mxu0 0.0
        %1726 = vmatprep.subr.mxu0 0.0
        %1727 = vmatpush1.xpose.msra.mxu0 0.0
        %1728 = vmatprep.subr.mxu0 0.0
        %1729 = vmatpush1.xpose.msra.mxu0 0.0
        %1730 = vmatprep.subr.mxu0 0.0
        %1731 = vmatpush1.xpose.msra.mxu0 0.0
        %1732 = vmatprep.subr.mxu0 0.0
        %1733 = vmatpush1.xpose.msra.mxu0 0.0
        %1734 = vmatprep.subr.mxu0 0.0
        %1735 = vmatpush1.xpose.msra.mxu0 0.0
        %1736 = vmatprep.subr.mxu0 0.0
        %1737 = vmatpush1.xpose.msra.mxu0 0.0
        %1738 = vmatprep.subr.mxu0 0.0
        %1739 = vmatpush1.xpose.msra.mxu0 0.0
        %1740 = vmatprep.subr.mxu0 0.0
        %1741 = vmatpush1.xpose.msra.mxu0 0.0
        %1742 = vmatprep.subr.mxu0 0.0
        %1743 = vmatpush1.xpose.msra.mxu0 0.0
        %1744 = vmatprep.subr.mxu0 0.0
        %1745 = vmatpush1.xpose.msra.mxu0 %v1712
        %1746 = vmatprep.subr.mxu0 0.0
        %1747 = vmatpush2.xpose.msra.mxu0 0.0
        %1748 = vmatprep.subr.mxu0 0.0
        %1749 = vmatpush2.xpose.msra.mxu0 0.0
        %1750 = vmatprep.subr.mxu0 0.0
        %1751 = vmatpush2.xpose.msra.mxu0 0.0
        %1752 = vmatprep.subr.mxu0 0.0
        %1753 = vmatpush2.xpose.msra.mxu0 0.0
        %1754 = vmatprep.subr.mxu0 0.0
        %1755 = vmatpush2.xpose.msra.mxu0 0.0
        %1756 = vmatprep.subr.mxu0 0.0
        %1757 = vmatpush2.xpose.msra.mxu0 0.0
        %1758 = vmatprep.subr.mxu0 0.0
        %1759 = vmatpush2.xpose.msra.mxu0 0.0
        %1760 = vmatprep.subr.mxu0 0.0
        %1761 = vmatpush2.xpose.msra.mxu0 0.0
        %1762 = vmatprep.subr.mxu0 0.0
        %1763 = vmatpush2.xpose.msra.mxu0 0.0
        %1764 = vmatprep.subr.mxu0 0.0
        %1765 = vmatpush2.xpose.msra.mxu0 0.0
        %1766 = vmatprep.subr.mxu0 0.0
        %1767 = vmatpush2.xpose.msra.mxu0 0.0
        %1768 = vmatprep.subr.mxu0 0.0
        %1769 = vmatpush2.xpose.msra.mxu0 0.0
        %1770 = vmatprep.subr.mxu0 0.0
        %1771 = vmatpush2.xpose.msra.mxu0 0.0
        %1772 = vmatprep.subr.mxu0 0.0
        %1773 = vmatpush2.xpose.msra.mxu0 0.0
        %1774 = vmatprep.subr.mxu0 0.0
        %1775 = vmatpush2.xpose.msra.mxu0 0.0
        %1776 = vmatprep.subr.mxu0 0.0
        %1777 = vmatpush2.xpose.msra.mxu0 0.0
        %1778 = vmatprep.mubr.f32.mxu0 0.0
        %1779 = vmatmul.mubr.f32.gmra.mxu0 %v1710
        %v1780 = vpop.f32.mrf.mxu0
        %v1781 = vadd.f32 0.0, %v1780
        %v1782 = vpop.f32.mrf.mxu0
        %1783 = vdwg.mxu0
        %v1784 = vmul.f32 %v1781, 0.17677669
        %v1785 = vsel %vm1068, %v1784, -inf
        %1786 = vmax.xlane.f32.xlu0 %v1785
        %v1787 = vpop.xlane.xlu0 %1786
        %v1788 = vsub.f32 %v1784, %v1787
        %v1789 = vmul.f32 %v1788, 1.442695
        %v1790 = vpow.pop %v1789
        %v1791 = vsel %vm1068, %v1790, 0.0
        %1792 = vadd.xlane.f32.xlu0 %v1791
        %v1793 = vpop.xlane.xlu0 %1792
        %v1794 = vrcp.pop %v1793
        %v1795 = vmul.f32 %v1790, %v1794
        %1796 = vrot.lane.b32.xlu0 %v987, 32
        %v1797 = vpop.permute.xlu0 %1796
        %v1800 = vsel %vm1068, %v1795, 0
        %1802 = vmatprep.subr.mxu0 0.0
        %1803 = vmatpush1.msra.mxu0 0.0
        %1804 = vmatprep.subr.mxu0 0.0
        %1805 = vmatpush1.msra.mxu0 0.0
        %1806 = vmatprep.subr.mxu0 0.0
        %1807 = vmatpush1.msra.mxu0 0.0
        %1808 = vmatprep.subr.mxu0 0.0
        %1809 = vmatpush1.msra.mxu0 0.0
        %1810 = vmatprep.subr.mxu0 0.0
        %1811 = vmatpush1.msra.mxu0 0.0
        %1812 = vmatprep.subr.mxu0 0.0
        %1813 = vmatpush1.msra.mxu0 0.0
        %1814 = vmatprep.subr.mxu0 0.0
        %1815 = vmatpush1.msra.mxu0 0.0
        %1816 = vmatprep.subr.mxu0 0.0
        %1817 = vmatpush1.msra.mxu0 0.0
        %1818 = vmatprep.subr.mxu0 0.0
        %1819 = vmatpush1.msra.mxu0 0.0
        %1820 = vmatprep.subr.mxu0 0.0
        %1821 = vmatpush1.msra.mxu0 0.0
        %1822 = vmatprep.subr.mxu0 0.0
        %1823 = vmatpush1.msra.mxu0 0.0
        %1824 = vmatprep.subr.mxu0 0.0
        %1825 = vmatpush1.msra.mxu0 0.0
        %1826 = vmatprep.subr.mxu0 0.0
        %1827 = vmatpush1.msra.mxu0 0.0
        %1828 = vmatprep.subr.mxu0 0.0
        %1829 = vmatpush1.msra.mxu0 0.0
        %1830 = vmatprep.subr.mxu0 0.0
        %1831 = vmatpush1.msra.mxu0 0.0
        %1832 = vmatprep.subr.mxu0 0.0
        %1833 = vmatpush1.msra.mxu0 %v1797
        %1834 = vmatprep.subr.mxu0 0.0
        %1835 = vmatpush2.msra.mxu0 0.0
        %1836 = vmatprep.subr.mxu0 0.0
        %1837 = vmatpush2.msra.mxu0 0.0
        %1838 = vmatprep.subr.mxu0 0.0
        %1839 = vmatpush2.msra.mxu0 0.0
        %1840 = vmatprep.subr.mxu0 0.0
        %1841 = vmatpush2.msra.mxu0 0.0
        %1842 = vmatprep.subr.mxu0 0.0
        %1843 = vmatpush2.msra.mxu0 0.0
        %1844 = vmatprep.subr.mxu0 0.0
        %1845 = vmatpush2.msra.mxu0 0.0
        %1846 = vmatprep.subr.mxu0 0.0
        %1847 = vmatpush2.msra.mxu0 0.0
        %1848 = vmatprep.subr.mxu0 0.0
        %1849 = vmatpush2.msra.mxu0 0.0
        %1850 = vmatprep.subr.mxu0 0.0
        %1851 = vmatpush2.msra.mxu0 0.0
        %1852 = vmatprep.subr.mxu0 0.0
        %1853 = vmatpush2.msra.mxu0 0.0
        %1854 = vmatprep.subr.mxu0 0.0
        %1855 = vmatpush2.msra.mxu0 0.0
        %1856 = vmatprep.subr.mxu0 0.0
        %1857 = vmatpush2.msra.mxu0 0.0
        %1858 = vmatprep.subr.mxu0 0.0
        %1859 = vmatpush2.msra.mxu0 0.0
        %1860 = vmatprep.subr.mxu0 0.0
        %1861 = vmatpush2.msra.mxu0 0.0
        %1862 = vmatprep.subr.mxu0 0.0
        %1863 = vmatpush2.msra.mxu0 0.0
        %1864 = vmatprep.subr.mxu0 0.0
        %1865 = vmatpush2.msra.mxu0 0.0
        %1866 = vmatprep.mubr.f32.mxu0 0.0
        %1867 = vmatmul.mubr.f32.gmra.mxu0 %v1800
        %v1868 = vpop.f32.mrf.mxu0
        %v1869 = vadd.f32 0.0, %v1868
        %v1870 = vpop.f32.mrf.mxu0
        %1871 = vdwg.mxu0
        %v1873 = vsel %vm990, %v1869, 0
        %1875 = vmatprep.subr.mxu0 0.0
        %1876 = vmatpush1.msra.mxu0 0.0
        %1877 = vmatprep.subr.mxu0 0.0
        %1878 = vmatpush1.msra.mxu0 0.0
        %1879 = vmatprep.subr.mxu0 0.0
        %1880 = vmatpush1.msra.mxu0 0.0
        %1881 = vmatprep.subr.mxu0 0.0
        %1882 = vmatpush1.msra.mxu0 0.0
        %1883 = vmatprep.subr.mxu0 0.0
        %1884 = vmatpush1.msra.mxu0 0.0
        %1885 = vmatprep.subr.mxu0 0.0
        %1886 = vmatpush1.msra.mxu0 0.0
        %1887 = vmatprep.subr.mxu0 0.0
        %1888 = vmatpush1.msra.mxu0 0.0
        %1889 = vmatprep.subr.mxu0 0.0
        %1890 = vmatpush1.msra.mxu0 0.0
        %1891 = vmatprep.subr.mxu0 0.0
        %1892 = vmatpush1.msra.mxu0 0.0
        %1893 = vmatprep.subr.mxu0 0.0
        %1894 = vmatpush1.msra.mxu0 0.0
        %1895 = vmatprep.subr.mxu0 0.0
        %1896 = vmatpush1.msra.mxu0 0.0
        %1897 = vmatprep.subr.mxu0 0.0
        %1898 = vmatpush1.msra.mxu0 0.0
        %1899 = vmatprep.subr.mxu0 0.0
        %1900 = vmatpush1.msra.mxu0 %v757
        %1901 = vmatprep.subr.mxu0 0.0
        %1902 = vmatpush1.msra.mxu0 %v756
        %1903 = vmatprep.subr.mxu0 0.0
        %1904 = vmatpush1.msra.mxu0 %v755
        %1905 = vmatprep.subr.mxu0 0.0
        %1906 = vmatpush1.msra.mxu0 %v754
        %1907 = vmatprep.subr.mxu0 0.0
        %1908 = vmatpush2.msra.mxu0 0.0
        %1909 = vmatprep.subr.mxu0 0.0
        %1910 = vmatpush2.msra.mxu0 0.0
        %1911 = vmatprep.subr.mxu0 0.0
        %1912 = vmatpush2.msra.mxu0 0.0
        %1913 = vmatprep.subr.mxu0 0.0
        %1914 = vmatpush2.msra.mxu0 0.0
        %1915 = vmatprep.subr.mxu0 0.0
        %1916 = vmatpush2.msra.mxu0 0.0
        %1917 = vmatprep.subr.mxu0 0.0
        %1918 = vmatpush2.msra.mxu0 0.0
        %1919 = vmatprep.subr.mxu0 0.0
        %1920 = vmatpush2.msra.mxu0 0.0
        %1921 = vmatprep.subr.mxu0 0.0
        %1922 = vmatpush2.msra.mxu0 0.0
        %1923 = vmatprep.subr.mxu0 0.0
        %1924 = vmatpush2.msra.mxu0 0.0
        %1925 = vmatprep.subr.mxu0 0.0
        %1926 = vmatpush2.msra.mxu0 0.0
        %1927 = vmatprep.subr.mxu0 0.0
        %1928 = vmatpush2.msra.mxu0 0.0
        %1929 = vmatprep.subr.mxu0 0.0
        %1930 = vmatpush2.msra.mxu0 0.0
        %1931 = vmatprep.subr.mxu0 0.0
        %1932 = vmatpush2.msra.mxu0 0.0
        %1933 = vmatprep.subr.mxu0 0.0
        %1934 = vmatpush2.msra.mxu0 0.0
        %1935 = vmatprep.subr.mxu0 0.0
        %1936 = vmatpush2.msra.mxu0 0.0
        %1937 = vmatprep.subr.mxu0 0.0
        %1938 = vmatpush2.msra.mxu0 0.0
        %1939 = vmatprep.mubr.f32.mxu0 0.0
        %1940 = vmatmul.mubr.f32.gmra.mxu0 %v1873
        %v1941 = vpop.f32.mrf.mxu0
        %v1942 = vadd.f32 0.0, %v1941
        %v1943 = vpop.f32.mrf.mxu0
        %1944 = vdwg.mxu0
        %v1945 = vadd.f32 %v1705, %v1942
        %v1947 = vlaneseq
        %v1948 = vshrl.u32 %v1947, 7
        %v1949 = vsub.s32 0, %v1948
        %v1950 = vrot.slane %v761, %v1949
        %v1952 = vadd.f32 %v1945, %v1950
        %v1953 = vadd.f32 %v693, %v1952
        %v1954 = vld [vmem:[%s10] sm:$0x1]
        %v1955 = vld [vmem:[%s11] sm:$0x1]
        %1956 = vadd.xlane.f32.xlu0 %v1953
        %v1957 = vpop.xlane.xlu0 %1956
        %v1958 = vrcp.pop 128.0
        %v1959 = vmul.f32 %v1957, %v1958
        %v1960 = vsub.f32 %v1953, %v1959
        %v1961 = vmul.f32 %v1960, %v1960
        %1962 = vadd.xlane.f32.xlu0 %v1961
        %v1963 = vpop.xlane.xlu0 %1962
        %v1964 = vmul.f32 %v1963, %v1958
        %v1965 = vadd.f32 %v1964, 1e-05
        %v1966 = vrsqrt.pop %v1965
        %v1967 = vmul.f32 %v1960, %v1966
        %v1969 = vlaneseq
        %v1970 = vshrl.u32 %v1969, 7
        %v1971 = vsub.s32 0, %v1970
        %v1972 = vrot.slane %v1954, %v1971
        %v1974 = vmul.f32 %v1967, %v1972
        %v1976 = vlaneseq
        %v1977 = vshrl.u32 %v1976, 7
        %v1978 = vsub.s32 0, %v1977
        %v1979 = vrot.slane %v1955, %v1978
        %v1981 = vadd.f32 %v1974, %v1979
        %v1982 = vld [vmem:[#allocation13] sm:$0xff]
        %v1983 = vld [vmem:[#allocation13 + $0x8] sm:$0xff]
        %v1984 = vld [vmem:[#allocation13 + $0x10] sm:$0xff]
        %v1985 = vld [vmem:[#allocation13 + $0x18] sm:$0xff]
        %v1986 = vld [vmem:[#allocation13 + $0x20] sm:$0xff]
        %v1987 = vld [vmem:[#allocation13 + $0x28] sm:$0xff]
        %v1988 = vld [vmem:[#allocation13 + $0x30] sm:$0xff]
        %v1989 = vld [vmem:[#allocation13 + $0x38] sm:$0xff]
        %v1990 = vld [vmem:[#allocation13 + $0x40] sm:$0xff]
        %v1991 = vld [vmem:[#allocation13 + $0x48] sm:$0xff]
        %v1992 = vld [vmem:[#allocation13 + $0x50] sm:$0xff]
        %v1993 = vld [vmem:[#allocation13 + $0x58] sm:$0xff]
        %v1994 = vld [vmem:[#allocation13 + $0x60] sm:$0xff]
        %v1995 = vld [vmem:[#allocation13 + $0x68] sm:$0xff]
        %v1996 = vld [vmem:[#allocation13 + $0x70] sm:$0xff]
        %v1997 = vld [vmem:[#allocation13 + $0x78] sm:$0xff]
        %v1998 = vld [vmem:[#allocation13 + $0x80] sm:$0xff]
        %v1999 = vld [vmem:[#allocation13 + $0x88] sm:$0xff]
        %v2000 = vld [vmem:[#allocation13 + $0x90] sm:$0xff]
        %v2001 = vld [vmem:[#allocation13 + $0x98] sm:$0xff]
        %v2002 = vld [vmem:[#allocation13 + $0xa0] sm:$0xff]
        %v2003 = vld [vmem:[#allocation13 + $0xa8] sm:$0xff]
        %v2004 = vld [vmem:[#allocation13 + $0xb0] sm:$0xff]
        %v2005 = vld [vmem:[#allocation13 + $0xb8] sm:$0xff]
        %v2006 = vld [vmem:[#allocation13 + $0xc0] sm:$0xff]
        %v2007 = vld [vmem:[#allocation13 + $0xc8] sm:$0xff]
        %v2008 = vld [vmem:[#allocation13 + $0xd0] sm:$0xff]
        %v2009 = vld [vmem:[#allocation13 + $0xd8] sm:$0xff]
        %v2010 = vld [vmem:[#allocation13 + $0xe0] sm:$0xff]
        %v2011 = vld [vmem:[#allocation13 + $0xe8] sm:$0xff]
        %v2012 = vld [vmem:[#allocation13 + $0xf0] sm:$0xff]
        %v2013 = vld [vmem:[#allocation13 + $0xf8] sm:$0xff]
        %v2014 = vld [vmem:[%s13] sm:$0x3]
        %v2016 = vlaneseq
        %v2017 = vshrl.u32 %v2016, 7
        %v2018 = vsub.s32 0, %v2017
        %v2019 = vrot.slane %v2014, %v2018
        %v2020 = vlaneseq
        %v2021 = vshrl.u32 %v2020, 7
        %v2022 = vsub.s32 1, %v2021
        %v2023 = vrot.slane %v2014, %v2022
        %2026 = vmatprep.subr.mxu0 %v2013
        %2027 = vmatpush1.msra.mxu0 %v2012
        %2028 = vmatprep.subr.mxu0 %v2011
        %2029 = vmatpush1.msra.mxu0 %v2010
        %2030 = vmatprep.subr.mxu0 %v2009
        %2031 = vmatpush1.msra.mxu0 %v2008
        %2032 = vmatprep.subr.mxu0 %v2007
        %2033 = vmatpush1.msra.mxu0 %v2006
        %2034 = vmatprep.subr.mxu0 %v2005
        %2035 = vmatpush1.msra.mxu0 %v2004
        %2036 = vmatprep.subr.mxu0 %v2003
        %2037 = vmatpush1.msra.mxu0 %v2002
        %2038 = vmatprep.subr.mxu0 %v2001
        %2039 = vmatpush1.msra.mxu0 %v2000
        %2040 = vmatprep.subr.mxu0 %v1999
        %2041 = vmatpush1.msra.mxu0 %v1998
        %2042 = vmatprep.subr.mxu0 %v1997
        %2043 = vmatpush1.msra.mxu0 %v1996
        %2044 = vmatprep.subr.mxu0 %v1995
        %2045 = vmatpush1.msra.mxu0 %v1994
        %2046 = vmatprep.subr.mxu0 %v1993
        %2047 = vmatpush1.msra.mxu0 %v1992
        %2048 = vmatprep.subr.mxu0 %v1991
        %2049 = vmatpush1.msra.mxu0 %v1990
        %2050 = vmatprep.subr.mxu0 %v1989
        %2051 = vmatpush1.msra.mxu0 %v1988
        %2052 = vmatprep.subr.mxu0 %v1987
        %2053 = vmatpush1.msra.mxu0 %v1986
        %2054 = vmatprep.subr.mxu0 %v1985
        %2055 = vmatpush1.msra.mxu0 %v1984
        %2056 = vmatprep.subr.mxu0 %v1983
        %2057 = vmatpush1.msra.mxu0 %v1982
        %2058 = vmatprep.subr.mxu0 0.0
        %2059 = vmatpush2.msra.mxu0 0.0
        %2060 = vmatprep.subr.mxu0 0.0
        %2061 = vmatpush2.msra.mxu0 0.0
        %2062 = vmatprep.subr.mxu0 0.0
        %2063 = vmatpush2.msra.mxu0 0.0
        %2064 = vmatprep.subr.mxu0 0.0
        %2065 = vmatpush2.msra.mxu0 0.0
        %2066 = vmatprep.subr.mxu0 0.0
        %2067 = vmatpush2.msra.mxu0 0.0
        %2068 = vmatprep.subr.mxu0 0.0
        %2069 = vmatpush2.msra.mxu0 0.0
        %2070 = vmatprep.subr.mxu0 0.0
        %2071 = vmatpush2.msra.mxu0 0.0
        %2072 = vmatprep.subr.mxu0 0.0
        %2073 = vmatpush2.msra.mxu0 0.0
        %2074 = vmatprep.subr.mxu0 0.0
        %2075 = vmatpush2.msra.mxu0 0.0
        %2076 = vmatprep.subr.mxu0 0.0
        %2077 = vmatpush2.msra.mxu0 0.0
        %2078 = vmatprep.subr.mxu0 0.0
        %2079 = vmatpush2.msra.mxu0 0.0
        %2080 = vmatprep.subr.mxu0 0.0
        %2081 = vmatpush2.msra.mxu0 0.0
        %2082 = vmatprep.subr.mxu0 0.0
        %2083 = vmatpush2.msra.mxu0 0.0
        %2084 = vmatprep.subr.mxu0 0.0
        %2085 = vmatpush2.msra.mxu0 0.0
        %2086 = vmatprep.subr.mxu0 0.0
        %2087 = vmatpush2.msra.mxu0 0.0
        %2088 = vmatprep.subr.mxu0 0.0
        %2089 = vmatpush2.msra.mxu0 0.0
        %2090 = vmatprep.mubr.f32.mxu0 0.0
        %2091 = vmatmul.mubr.f32.gmra.mxu0 %v1981
        %v2092 = vpop.f32.mrf.mxu0
        %v2093 = vadd.f32 %v2019, %v2092
        %v2094 = vpop.f32.mrf.mxu0
        %v2095 = vadd.f32 %v2023, %v2094
        %2096 = vdwg.mxu0
        %v2097 = vmax.f32 %v2093, 0.0
        %v2098 = vmax.f32 %v2095, 0.0
        %v2099 = vld [vmem:[#allocation14] sm:$0xff]
        %v2100 = vld [vmem:[#allocation14 + $0x8] sm:$0xff]
        %v2101 = vld [vmem:[#allocation14 + $0x10] sm:$0xff]
        %v2102 = vld [vmem:[#allocation14 + $0x18] sm:$0xff]
        %v2103 = vld [vmem:[#allocation14 + $0x20] sm:$0xff]
        %v2104 = vld [vmem:[#allocation14 + $0x28] sm:$0xff]
        %v2105 = vld [vmem:[#allocation14 + $0x30] sm:$0xff]
        %v2106 = vld [vmem:[#allocation14 + $0x38] sm:$0xff]
        %v2107 = vld [vmem:[#allocation14 + $0x40] sm:$0xff]
        %v2108 = vld [vmem:[#allocation14 + $0x48] sm:$0xff]
        %v2109 = vld [vmem:[#allocation14 + $0x50] sm:$0xff]
        %v2110 = vld [vmem:[#allocation14 + $0x58] sm:$0xff]
        %v2111 = vld [vmem:[#allocation14 + $0x60] sm:$0xff]
        %v2112 = vld [vmem:[#allocation14 + $0x68] sm:$0xff]
        %v2113 = vld [vmem:[#allocation14 + $0x70] sm:$0xff]
        %v2114 = vld [vmem:[#allocation14 + $0x78] sm:$0xff]
        %v2115 = vld [vmem:[#allocation14 + $0x80] sm:$0xff]
        %v2116 = vld [vmem:[#allocation14 + $0x88] sm:$0xff]
        %v2117 = vld [vmem:[#allocation14 + $0x90] sm:$0xff]
        %v2118 = vld [vmem:[#allocation14 + $0x98] sm:$0xff]
        %v2119 = vld [vmem:[#allocation14 + $0xa0] sm:$0xff]
        %v2120 = vld [vmem:[#allocation14 + $0xa8] sm:$0xff]
        %v2121 = vld [vmem:[#allocation14 + $0xb0] sm:$0xff]
        %v2122 = vld [vmem:[#allocation14 + $0xb8] sm:$0xff]
        %v2123 = vld [vmem:[#allocation14 + $0xc0] sm:$0xff]
        %v2124 = vld [vmem:[#allocation14 + $0xc8] sm:$0xff]
        %v2125 = vld [vmem:[#allocation14 + $0xd0] sm:$0xff]
        %v2126 = vld [vmem:[#allocation14 + $0xd8] sm:$0xff]
        %v2127 = vld [vmem:[#allocation14 + $0xe0] sm:$0xff]
        %v2128 = vld [vmem:[#allocation14 + $0xe8] sm:$0xff]
        %v2129 = vld [vmem:[#allocation14 + $0xf0] sm:$0xff]
        %v2130 = vld [vmem:[#allocation14 + $0xf8] sm:$0xff]
        %v2131 = vld [vmem:[%s15] sm:$0x1]
        %v2133 = vlaneseq
        %v2134 = vshrl.u32 %v2133, 7
        %v2135 = vsub.s32 0, %v2134
        %v2136 = vrot.slane %v2131, %v2135
        %2138 = vmatprep.subr.mxu0 0.0
        %2139 = vmatpush1.msra.mxu0 %v2114
        %2140 = vmatprep.subr.mxu0 0.0
        %2141 = vmatpush1.msra.mxu0 %v2113
        %2142 = vmatprep.subr.mxu0 0.0
        %2143 = vmatpush1.msra.mxu0 %v2112
        %2144 = vmatprep.subr.mxu0 0.0
        %2145 = vmatpush1.msra.mxu0 %v2111
        %2146 = vmatprep.subr.mxu0 0.0
        %2147 = vmatpush1.msra.mxu0 %v2110
        %2148 = vmatprep.subr.mxu0 0.0
        %2149 = vmatpush1.msra.mxu0 %v2109
        %2150 = vmatprep.subr.mxu0 0.0
        %2151 = vmatpush1.msra.mxu0 %v2108
        %2152 = vmatprep.subr.mxu0 0.0
        %2153 = vmatpush1.msra.mxu0 %v2107
        %2154 = vmatprep.subr.mxu0 0.0
        %2155 = vmatpush1.msra.mxu0 %v2106
        %2156 = vmatprep.subr.mxu0 0.0
        %2157 = vmatpush1.msra.mxu0 %v2105
        %2158 = vmatprep.subr.mxu0 0.0
        %2159 = vmatpush1.msra.mxu0 %v2104
        %2160 = vmatprep.subr.mxu0 0.0
        %2161 = vmatpush1.msra.mxu0 %v2103
        %2162 = vmatprep.subr.mxu0 0.0
        %2163 = vmatpush1.msra.mxu0 %v2102
        %2164 = vmatprep.subr.mxu0 0.0
        %2165 = vmatpush1.msra.mxu0 %v2101
        %2166 = vmatprep.subr.mxu0 0.0
        %2167 = vmatpush1.msra.mxu0 %v2100
        %2168 = vmatprep.subr.mxu0 0.0
        %2169 = vmatpush1.msra.mxu0 %v2099
        %2170 = vmatprep.subr.mxu0 0.0
        %2171 = vmatpush2.msra.mxu0 %v2130
        %2172 = vmatprep.subr.mxu0 0.0
        %2173 = vmatpush2.msra.mxu0 %v2129
        %2174 = vmatprep.subr.mxu0 0.0
        %2175 = vmatpush2.msra.mxu0 %v2128
        %2176 = vmatprep.subr.mxu0 0.0
        %2177 = vmatpush2.msra.mxu0 %v2127
        %2178 = vmatprep.subr.mxu0 0.0
        %2179 = vmatpush2.msra.mxu0 %v2126
        %2180 = vmatprep.subr.mxu0 0.0
        %2181 = vmatpush2.msra.mxu0 %v2125
        %2182 = vmatprep.subr.mxu0 0.0
        %2183 = vmatpush2.msra.mxu0 %v2124
        %2184 = vmatprep.subr.mxu0 0.0
        %2185 = vmatpush2.msra.mxu0 %v2123
        %2186 = vmatprep.subr.mxu0 0.0
        %2187 = vmatpush2.msra.mxu0 %v2122
        %2188 = vmatprep.subr.mxu0 0.0
        %2189 = vmatpush2.msra.mxu0 %v2121
        %2190 = vmatprep.subr.mxu0 0.0
        %2191 = vmatpush2.msra.mxu0 %v2120
        %2192 = vmatprep.subr.mxu0 0.0
        %2193 = vmatpush2.msra.mxu0 %v2119
        %2194 = vmatprep.subr.mxu0 0.0
        %2195 = vmatpush2.msra.mxu0 %v2118
        %2196 = vmatprep.subr.mxu0 0.0
        %2197 = vmatpush2.msra.mxu0 %v2117
        %2198 = vmatprep.subr.mxu0 0.0
        %2199 = vmatpush2.msra.mxu0 %v2116
        %2200 = vmatprep.subr.mxu0 0.0
        %2201 = vmatpush2.msra.mxu0 %v2115
        %2202 = vmatprep.mubr.f32.mxu0 %v2098
        %2203 = vmatmul.mubr.f32.gmra.mxu0 %v2097
        %v2204 = vpop.f32.mrf.mxu0
        %v2205 = vadd.f32 %v2136, %v2204
        %v2206 = vpop.f32.mrf.mxu0
        %2207 = vdwg.mxu0
        %v2208 = vadd.f32 %v1981, %v2205
        %v2209 = vld [vmem:[%s16] sm:$0x1]
        %v2210 = vld [vmem:[%s17] sm:$0x1]
        %2211 = vadd.xlane.f32.xlu0 %v2208
        %v2212 = vpop.xlane.xlu0 %2211
        %v2213 = vmul.f32 %v2212, %v1958
        %v2214 = vsub.f32 %v2208, %v2213
        %v2215 = vmul.f32 %v2214, %v2214
        %2216 = vadd.xlane.f32.xlu0 %v2215
        %v2217 = vpop.xlane.xlu0 %2216
        %v2218 = vmul.f32 %v2217, %v1958
        %v2219 = vadd.f32 %v2218, 1e-05
        %v2220 = vrsqrt.pop %v2219
        %v2221 = vmul.f32 %v2214, %v2220
        %v2223 = vlaneseq
        %v2224 = vshrl.u32 %v2223, 7
        %v2225 = vsub.s32 0, %v2224
        %v2226 = vrot.slane %v2209, %v2225
        %v2228 = vmul.f32 %v2221, %v2226
        %v2230 = vlaneseq
        %v2231 = vshrl.u32 %v2230, 7
        %v2232 = vsub.s32 0, %v2231
        %v2233 = vrot.slane %v2210, %v2232
        %v2235 = vadd.f32 %v2228, %v2233
        %s2236 = scalar_lea.vmem [#allocation7], 128
        %v2237 = vld [vmem:[%s2236] sm:$0xff]
        %v2238 = vld [vmem:[%s2236 + $0x8] sm:$0xff]
        %v2239 = vld [vmem:[%s2236 + $0x10] sm:$0xff]
        %v2240 = vld [vmem:[%s2236 + $0x18] sm:$0xff]
        %v2241 = vld [vmem:[%s2236 + $0x20] sm:$0xff]
        %v2242 = vld [vmem:[%s2236 + $0x28] sm:$0xff]
        %v2243 = vld [vmem:[%s2236 + $0x30] sm:$0xff]
        %v2244 = vld [vmem:[%s2236 + $0x38] sm:$0xff]
        %v2245 = vld [vmem:[%s2236 + $0x40] sm:$0xff]
        %v2246 = vld [vmem:[%s2236 + $0x48] sm:$0xff]
        %v2247 = vld [vmem:[%s2236 + $0x50] sm:$0xff]
        %v2248 = vld [vmem:[%s2236 + $0x58] sm:$0xff]
        %v2249 = vld [vmem:[%s2236 + $0x60] sm:$0xff]
        %v2250 = vld [vmem:[%s2236 + $0x68] sm:$0xff]
        %v2251 = vld [vmem:[%s2236 + $0x70] sm:$0xff]
        %v2252 = vld [vmem:[%s2236 + $0x78] sm:$0xff]
        %s2253 = scalar_lea.vmem [#allocation8], 128
        %v2254 = vld [vmem:[%s2253] sm:$0xff]
        %v2255 = vld [vmem:[%s2253 + $0x8] sm:$0xff]
        %v2256 = vld [vmem:[%s2253 + $0x10] sm:$0xff]
        %v2257 = vld [vmem:[%s2253 + $0x18] sm:$0xff]
        %v2258 = vld [vmem:[%s2253 + $0x20] sm:$0xff]
        %v2259 = vld [vmem:[%s2253 + $0x28] sm:$0xff]
        %v2260 = vld [vmem:[%s2253 + $0x30] sm:$0xff]
        %v2261 = vld [vmem:[%s2253 + $0x38] sm:$0xff]
        %v2262 = vld [vmem:[%s2253 + $0x40] sm:$0xff]
        %v2263 = vld [vmem:[%s2253 + $0x48] sm:$0xff]
        %v2264 = vld [vmem:[%s2253 + $0x50] sm:$0xff]
        %v2265 = vld [vmem:[%s2253 + $0x58] sm:$0xff]
        %v2266 = vld [vmem:[%s2253 + $0x60] sm:$0xff]
        %v2267 = vld [vmem:[%s2253 + $0x68] sm:$0xff]
        %v2268 = vld [vmem:[%s2253 + $0x70] sm:$0xff]
        %v2269 = vld [vmem:[%s2253 + $0x78] sm:$0xff]
        %s2270 = scalar_lea.vmem [#allocation10], 128
        %v2271 = vld [vmem:[%s2270] sm:$0xff]
        %v2272 = vld [vmem:[%s2270 + $0x8] sm:$0xff]
        %v2273 = vld [vmem:[%s2270 + $0x10] sm:$0xff]
        %v2274 = vld [vmem:[%s2270 + $0x18] sm:$0xff]
        %v2275 = vld [vmem:[%s2270 + $0x20] sm:$0xff]
        %v2276 = vld [vmem:[%s2270 + $0x28] sm:$0xff]
        %v2277 = vld [vmem:[%s2270 + $0x30] sm:$0xff]
        %v2278 = vld [vmem:[%s2270 + $0x38] sm:$0xff]
        %v2279 = vld [vmem:[%s2270 + $0x40] sm:$0xff]
        %v2280 = vld [vmem:[%s2270 + $0x48] sm:$0xff]
        %v2281 = vld [vmem:[%s2270 + $0x50] sm:$0xff]
        %v2282 = vld [vmem:[%s2270 + $0x58] sm:$0xff]
        %v2283 = vld [vmem:[%s2270 + $0x60] sm:$0xff]
        %v2284 = vld [vmem:[%s2270 + $0x68] sm:$0xff]
        %v2285 = vld [vmem:[%s2270 + $0x70] sm:$0xff]
        %v2286 = vld [vmem:[%s2270 + $0x78] sm:$0xff]
        %s2287 = scalar_lea.vmem [#allocation11], 128
        %v2288 = vld [vmem:[%s2287] sm:$0xff]
        %v2289 = vld [vmem:[%s2287 + $0x8] sm:$0xff]
        %v2290 = vld [vmem:[%s2287 + $0x10] sm:$0xff]
        %v2291 = vld [vmem:[%s2287 + $0x18] sm:$0xff]
        %v2292 = vld [vmem:[%s2287 + $0x20] sm:$0xff]
        %v2293 = vld [vmem:[%s2287 + $0x28] sm:$0xff]
        %v2294 = vld [vmem:[%s2287 + $0x30] sm:$0xff]
        %v2295 = vld [vmem:[%s2287 + $0x38] sm:$0xff]
        %v2296 = vld [vmem:[%s2287 + $0x40] sm:$0xff]
        %v2297 = vld [vmem:[%s2287 + $0x48] sm:$0xff]
        %v2298 = vld [vmem:[%s2287 + $0x50] sm:$0xff]
        %v2299 = vld [vmem:[%s2287 + $0x58] sm:$0xff]
        %v2300 = vld [vmem:[%s2287 + $0x60] sm:$0xff]
        %v2301 = vld [vmem:[%s2287 + $0x68] sm:$0xff]
        %v2302 = vld [vmem:[%s2287 + $0x70] sm:$0xff]
        %v2303 = vld [vmem:[%s2287 + $0x78] sm:$0xff]
        %s2304 = scalar_lea.vmem %s3, 1
        %v2305 = vld [vmem:[%s2304] sm:$0x1]
        %s2306 = scalar_lea.vmem %s5, 1
        %v2307 = vld [vmem:[%s2306] sm:$0x1]
        %s2308 = scalar_lea.vmem %s7, 1
        %v2309 = vld [vmem:[%s2308] sm:$0x1]
        %s2310 = scalar_lea.vmem %s9, 1
        %v2311 = vld [vmem:[%s2310] sm:$0x1]
        %v2313 = vlaneseq
        %v2314 = vshrl.u32 %v2313, 7
        %v2315 = vsub.s32 0, %v2314
        %v2316 = vrot.slane %v2305, %v2315
        %2318 = vmatprep.subr.mxu0 0.0
        %2319 = vmatpush1.msra.mxu0 %v2252
        %2320 = vmatprep.subr.mxu0 0.0
        %2321 = vmatpush1.msra.mxu0 %v2251
        %2322 = vmatprep.subr.mxu0 0.0
        %2323 = vmatpush1.msra.mxu0 %v2250
        %2324 = vmatprep.subr.mxu0 0.0
        %2325 = vmatpush1.msra.mxu0 %v2249
        %2326 = vmatprep.subr.mxu0 0.0
        %2327 = vmatpush1.msra.mxu0 %v2248
        %2328 = vmatprep.subr.mxu0 0.0
        %2329 = vmatpush1.msra.mxu0 %v2247
        %2330 = vmatprep.subr.mxu0 0.0
        %2331 = vmatpush1.msra.mxu0 %v2246
        %2332 = vmatprep.subr.mxu0 0.0
        %2333 = vmatpush1.msra.mxu0 %v2245
        %2334 = vmatprep.subr.mxu0 0.0
        %2335 = vmatpush1.msra.mxu0 %v2244
        %2336 = vmatprep.subr.mxu0 0.0
        %2337 = vmatpush1.msra.mxu0 %v2243
        %2338 = vmatprep.subr.mxu0 0.0
        %2339 = vmatpush1.msra.mxu0 %v2242
        %2340 = vmatprep.subr.mxu0 0.0
        %2341 = vmatpush1.msra.mxu0 %v2241
        %2342 = vmatprep.subr.mxu0 0.0
        %2343 = vmatpush1.msra.mxu0 %v2240
        %2344 = vmatprep.subr.mxu0 0.0
        %2345 = vmatpush1.msra.mxu0 %v2239
        %2346 = vmatprep.subr.mxu0 0.0
        %2347 = vmatpush1.msra.mxu0 %v2238
        %2348 = vmatprep.subr.mxu0 0.0
        %2349 = vmatpush1.msra.mxu0 %v2237
        %2350 = vmatprep.subr.mxu0 0.0
        %2351 = vmatpush2.msra.mxu0 0.0
        %2352 = vmatprep.subr.mxu0 0.0
        %2353 = vmatpush2.msra.mxu0 0.0
        %2354 = vmatprep.subr.mxu0 0.0
        %2355 = vmatpush2.msra.mxu0 0.0
        %2356 = vmatprep.subr.mxu0 0.0
        %2357 = vmatpush2.msra.mxu0 0.0
        %2358 = vmatprep.subr.mxu0 0.0
        %2359 = vmatpush2.msra.mxu0 0.0
        %2360 = vmatprep.subr.mxu0 0.0
        %2361 = vmatpush2.msra.mxu0 0.0
        %2362 = vmatprep.subr.mxu0 0.0
        %2363 = vmatpush2.msra.mxu0 0.0
        %2364 = vmatprep.subr.mxu0 0.0
        %2365 = vmatpush2.msra.mxu0 0.0
        %2366 = vmatprep.subr.mxu0 0.0
        %2367 = vmatpush2.msra.mxu0 0.0
        %2368 = vmatprep.subr.mxu0 0.0
        %2369 = vmatpush2.msra.mxu0 0.0
        %2370 = vmatprep.subr.mxu0 0.0
        %2371 = vmatpush2.msra.mxu0 0.0
        %2372 = vmatprep.subr.mxu0 0.0
        %2373 = vmatpush2.msra.mxu0 0.0
        %2374 = vmatprep.subr.mxu0 0.0
        %2375 = vmatpush2.msra.mxu0 0.0
        %2376 = vmatprep.subr.mxu0 0.0
        %2377 = vmatpush2.msra.mxu0 0.0
        %2378 = vmatprep.subr.mxu0 0.0
        %2379 = vmatpush2.msra.mxu0 0.0
        %2380 = vmatprep.subr.mxu0 0.0
        %2381 = vmatpush2.msra.mxu0 0.0
        %2382 = vmatprep.mubr.f32.mxu0 0.0
        %2383 = vmatmul.mubr.f32.gmra.mxu0 %v2235
        %v2384 = vpop.f32.mrf.mxu0
        %v2385 = vadd.f32 %v2316, %v2384
        %v2386 = vpop.f32.mrf.mxu0
        %2387 = vdwg.mxu0
        %v2389 = vlaneseq
        %v2390 = vshrl.u32 %v2389, 7
        %v2391 = vsub.s32 0, %v2390
        %v2392 = vrot.slane %v2307, %v2391
        %2394 = vmatprep.subr.mxu0 0.0
        %2395 = vmatpush1.msra.mxu0 %v2269
        %2396 = vmatprep.subr.mxu0 0.0
        %2397 = vmatpush1.msra.mxu0 %v2268
        %2398 = vmatprep.subr.mxu0 0.0
        %2399 = vmatpush1.msra.mxu0 %v2267
        %2400 = vmatprep.subr.mxu0 0.0
        %2401 = vmatpush1.msra.mxu0 %v2266
        %2402 = vmatprep.subr.mxu0 0.0
        %2403 = vmatpush1.msra.mxu0 %v2265
        %2404 = vmatprep.subr.mxu0 0.0
        %2405 = vmatpush1.msra.mxu0 %v2264
        %2406 = vmatprep.subr.mxu0 0.0
        %2407 = vmatpush1.msra.mxu0 %v2263
        %2408 = vmatprep.subr.mxu0 0.0
        %2409 = vmatpush1.msra.mxu0 %v2262
        %2410 = vmatprep.subr.mxu0 0.0
        %2411 = vmatpush1.msra.mxu0 %v2261
        %2412 = vmatprep.subr.mxu0 0.0
        %2413 = vmatpush1.msra.mxu0 %v2260
        %2414 = vmatprep.subr.mxu0 0.0
        %2415 = vmatpush1.msra.mxu0 %v2259
        %2416 = vmatprep.subr.mxu0 0.0
        %2417 = vmatpush1.msra.mxu0 %v2258
        %2418 = vmatprep.subr.mxu0 0.0
        %2419 = vmatpush1.msra.mxu0 %v2257
        %2420 = vmatprep.subr.mxu0 0.0
        %2421 = vmatpush1.msra.mxu0 %v2256
        %2422 = vmatprep.subr.mxu0 0.0
        %2423 = vmatpush1.msra.mxu0 %v2255
        %2424 = vmatprep.subr.mxu0 0.0
        %2425 = vmatpush1.msra.mxu0 %v2254
        %2426 = vmatprep.subr.mxu0 0.0
        %2427 = vmatpush2.msra.mxu0 0.0
        %2428 = vmatprep.subr.mxu0 0.0
        %2429 = vmatpush2.msra.mxu0 0.0
        %2430 = vmatprep.subr.mxu0 0.0
        %2431 = vmatpush2.msra.mxu0 0.0
        %2432 = vmatprep.subr.mxu0 0.0
        %2433 = vmatpush2.msra.mxu0 0.0
        %2434 = vmatprep.subr.mxu0 0.0
        %2435 = vmatpush2.msra.mxu0 0.0
        %2436 = vmatprep.subr.mxu0 0.0
        %2437 = vmatpush2.msra.mxu0 0.0
        %2438 = vmatprep.subr.mxu0 0.0
        %2439 = vmatpush2.msra.mxu0 0.0
        %2440 = vmatprep.subr.mxu0 0.0
        %2441 = vmatpush2.msra.mxu0 0.0
        %2442 = vmatprep.subr.mxu0 0.0
        %2443 = vmatpush2.msra.mxu0 0.0
        %2444 = vmatprep.subr.mxu0 0.0
        %2445 = vmatpush2.msra.mxu0 0.0
        %2446 = vmatprep.subr.mxu0 0.0
        %2447 = vmatpush2.msra.mxu0 0.0
        %2448 = vmatprep.subr.mxu0 0.0
        %2449 = vmatpush2.msra.mxu0 0.0
        %2450 = vmatprep.subr.mxu0 0.0
        %2451 = vmatpush2.msra.mxu0 0.0
        %2452 = vmatprep.subr.mxu0 0.0
        %2453 = vmatpush2.msra.mxu0 0.0
        %2454 = vmatprep.subr.mxu0 0.0
        %2455 = vmatpush2.msra.mxu0 0.0
        %2456 = vmatprep.subr.mxu0 0.0
        %2457 = vmatpush2.msra.mxu0 0.0
        %2458 = vmatprep.mubr.f32.mxu0 0.0
        %2459 = vmatmul.mubr.f32.gmra.mxu0 %v2235
        %v2460 = vpop.f32.mrf.mxu0
        %v2461 = vadd.f32 %v2392, %v2460
        %v2462 = vpop.f32.mrf.mxu0
        %2463 = vdwg.mxu0
        %v2465 = vlaneseq
        %v2466 = vshrl.u32 %v2465, 7
        %v2467 = vsub.s32 0, %v2466
        %v2468 = vrot.slane %v2309, %v2467
        %2470 = vmatprep.subr.mxu0 0.0
        %2471 = vmatpush1.msra.mxu0 %v2286
        %2472 = vmatprep.subr.mxu0 0.0
        %2473 = vmatpush1.msra.mxu0 %v2285
        %2474 = vmatprep.subr.mxu0 0.0
        %2475 = vmatpush1.msra.mxu0 %v2284
        %2476 = vmatprep.subr.mxu0 0.0
        %2477 = vmatpush1.msra.mxu0 %v2283
        %2478 = vmatprep.subr.mxu0 0.0
        %2479 = vmatpush1.msra.mxu0 %v2282
        %2480 = vmatprep.subr.mxu0 0.0
        %2481 = vmatpush1.msra.mxu0 %v2281
        %2482 = vmatprep.subr.mxu0 0.0
        %2483 = vmatpush1.msra.mxu0 %v2280
        %2484 = vmatprep.subr.mxu0 0.0
        %2485 = vmatpush1.msra.mxu0 %v2279
        %2486 = vmatprep.subr.mxu0 0.0
        %2487 = vmatpush1.msra.mxu0 %v2278
        %2488 = vmatprep.subr.mxu0 0.0
        %2489 = vmatpush1.msra.mxu0 %v2277
        %2490 = vmatprep.subr.mxu0 0.0
        %2491 = vmatpush1.msra.mxu0 %v2276
        %2492 = vmatprep.subr.mxu0 0.0
        %2493 = vmatpush1.msra.mxu0 %v2275
        %2494 = vmatprep.subr.mxu0 0.0
        %2495 = vmatpush1.msra.mxu0 %v2274
        %2496 = vmatprep.subr.mxu0 0.0
        %2497 = vmatpush1.msra.mxu0 %v2273
        %2498 = vmatprep.subr.mxu0 0.0
        %2499 = vmatpush1.msra.mxu0 %v2272
        %2500 = vmatprep.subr.mxu0 0.0
        %2501 = vmatpush1.msra.mxu0 %v2271
        %2502 = vmatprep.subr.mxu0 0.0
        %2503 = vmatpush2.msra.mxu0 0.0
        %2504 = vmatprep.subr.mxu0 0.0
        %2505 = vmatpush2.msra.mxu0 0.0
        %2506 = vmatprep.subr.mxu0 0.0
        %2507 = vmatpush2.msra.mxu0 0.0
        %2508 = vmatprep.subr.mxu0 0.0
        %2509 = vmatpush2.msra.mxu0 0.0
        %2510 = vmatprep.subr.mxu0 0.0
        %2511 = vmatpush2.msra.mxu0 0.0
        %2512 = vmatprep.subr.mxu0 0.0
        %2513 = vmatpush2.msra.mxu0 0.0
        %2514 = vmatprep.subr.mxu0 0.0
        %2515 = vmatpush2.msra.mxu0 0.0
        %2516 = vmatprep.subr.mxu0 0.0
        %2517 = vmatpush2.msra.mxu0 0.0
        %2518 = vmatprep.subr.mxu0 0.0
        %2519 = vmatpush2.msra.mxu0 0.0
        %2520 = vmatprep.subr.mxu0 0.0
        %2521 = vmatpush2.msra.mxu0 0.0
        %2522 = vmatprep.subr.mxu0 0.0
        %2523 = vmatpush2.msra.mxu0 0.0
        %2524 = vmatprep.subr.mxu0 0.0
        %2525 = vmatpush2.msra.mxu0 0.0
        %2526 = vmatprep.subr.mxu0 0.0
        %2527 = vmatpush2.msra.mxu0 0.0
        %2528 = vmatprep.subr.mxu0 0.0
        %2529 = vmatpush2.msra.mxu0 0.0
        %2530 = vmatprep.subr.mxu0 0.0
        %2531 = vmatpush2.msra.mxu0 0.0
        %2532 = vmatprep.subr.mxu0 0.0
        %2533 = vmatpush2.msra.mxu0 0.0
        %2534 = vmatprep.mubr.f32.mxu0 0.0
        %2535 = vmatmul.mubr.f32.gmra.mxu0 %v2235
        %v2536 = vpop.f32.mrf.mxu0
        %v2537 = vadd.f32 %v2468, %v2536
        %v2538 = vpop.f32.mrf.mxu0
        %2539 = vdwg.mxu0
        %v2541 = vsel %vm990, %v2385, 0
        %v2544 = vsel %vm990, %v2461, 0
        %2546 = vmatprep.subr.mxu0 0.0
        %2547 = vmatpush1.xpose.msra.mxu0 0.0
        %2548 = vmatprep.subr.mxu0 0.0
        %2549 = vmatpush1.xpose.msra.mxu0 0.0
        %2550 = vmatprep.subr.mxu0 0.0
        %2551 = vmatpush1.xpose.msra.mxu0 0.0
        %2552 = vmatprep.subr.mxu0 0.0
        %2553 = vmatpush1.xpose.msra.mxu0 0.0
        %2554 = vmatprep.subr.mxu0 0.0
        %2555 = vmatpush1.xpose.msra.mxu0 0.0
        %2556 = vmatprep.subr.mxu0 0.0
        %2557 = vmatpush1.xpose.msra.mxu0 0.0
        %2558 = vmatprep.subr.mxu0 0.0
        %2559 = vmatpush1.xpose.msra.mxu0 0.0
        %2560 = vmatprep.subr.mxu0 0.0
        %2561 = vmatpush1.xpose.msra.mxu0 0.0
        %2562 = vmatprep.subr.mxu0 0.0
        %2563 = vmatpush1.xpose.msra.mxu0 0.0
        %2564 = vmatprep.subr.mxu0 0.0
        %2565 = vmatpush1.xpose.msra.mxu0 0.0
        %2566 = vmatprep.subr.mxu0 0.0
        %2567 = vmatpush1.xpose.msra.mxu0 0.0
        %2568 = vmatprep.subr.mxu0 0.0
        %2569 = vmatpush1.xpose.msra.mxu0 0.0
        %2570 = vmatprep.subr.mxu0 0.0
        %2571 = vmatpush1.xpose.msra.mxu0 0.0
        %2572 = vmatprep.subr.mxu0 0.0
        %2573 = vmatpush1.xpose.msra.mxu0 0.0
        %2574 = vmatprep.subr.mxu0 0.0
        %2575 = vmatpush1.xpose.msra.mxu0 0.0
        %2576 = vmatprep.subr.mxu0 0.0
        %2577 = vmatpush1.xpose.msra.mxu0 %v2544
        %2578 = vmatprep.subr.mxu0 0.0
        %2579 = vmatpush2.xpose.msra.mxu0 0.0
        %2580 = vmatprep.subr.mxu0 0.0
        %2581 = vmatpush2.xpose.msra.mxu0 0.0
        %2582 = vmatprep.subr.mxu0 0.0
        %2583 = vmatpush2.xpose.msra.mxu0 0.0
        %2584 = vmatprep.subr.mxu0 0.0
        %2585 = vmatpush2.xpose.msra.mxu0 0.0
        %2586 = vmatprep.subr.mxu0 0.0
        %2587 = vmatpush2.xpose.msra.mxu0 0.0
        %2588 = vmatprep.subr.mxu0 0.0
        %2589 = vmatpush2.xpose.msra.mxu0 0.0
        %2590 = vmatprep.subr.mxu0 0.0
        %2591 = vmatpush2.xpose.msra.mxu0 0.0
        %2592 = vmatprep.subr.mxu0 0.0
        %2593 = vmatpush2.xpose.msra.mxu0 0.0
        %2594 = vmatprep.subr.mxu0 0.0
        %2595 = vmatpush2.xpose.msra.mxu0 0.0
        %2596 = vmatprep.subr.mxu0 0.0
        %2597 = vmatpush2.xpose.msra.mxu0 0.0
        %2598 = vmatprep.subr.mxu0 0.0
        %2599 = vmatpush2.xpose.msra.mxu0 0.0
        %2600 = vmatprep.subr.mxu0 0.0
        %2601 = vmatpush2.xpose.msra.mxu0 0.0
        %2602 = vmatprep.subr.mxu0 0.0
        %2603 = vmatpush2.xpose.msra.mxu0 0.0
        %2604 = vmatprep.subr.mxu0 0.0
        %2605 = vmatpush2.xpose.msra.mxu0 0.0
        %2606 = vmatprep.subr.mxu0 0.0
        %2607 = vmatpush2.xpose.msra.mxu0 0.0
        %2608 = vmatprep.subr.mxu0 0.0
        %2609 = vmatpush2.xpose.msra.mxu0 0.0
        %2610 = vmatprep.mubr.f32.mxu0 0.0
        %2611 = vmatmul.mubr.f32.gmra.mxu0 %v2541
        %v2612 = vpop.f32.mrf.mxu0
        %v2613 = vadd.f32 0.0, %v2612
        %v2614 = vpop.f32.mrf.mxu0
        %2615 = vdwg.mxu0
        %v2616 = vmul.f32 %v2613, 0.17677669
        %v2617 = vsel %vm1068, %v2616, -inf
        %2618 = vmax.xlane.f32.xlu0 %v2617
        %v2619 = vpop.xlane.xlu0 %2618
        %v2620 = vsub.f32 %v2616, %v2619
        %v2621 = vmul.f32 %v2620, 1.442695
        %v2622 = vpow.pop %v2621
        %v2623 = vsel %vm1068, %v2622, 0.0
        %2624 = vadd.xlane.f32.xlu0 %v2623
        %v2625 = vpop.xlane.xlu0 %2624
        %v2626 = vrcp.pop %v2625
        %v2627 = vmul.f32 %v2622, %v2626
        %v2629 = vsel %vm1068, %v2627, 0
        %2631 = vmatprep.subr.mxu0 0.0
        %2632 = vmatpush1.msra.mxu0 0.0
        %2633 = vmatprep.subr.mxu0 0.0
        %2634 = vmatpush1.msra.mxu0 0.0
        %2635 = vmatprep.subr.mxu0 0.0
        %2636 = vmatpush1.msra.mxu0 0.0
        %2637 = vmatprep.subr.mxu0 0.0
        %2638 = vmatpush1.msra.mxu0 0.0
        %2639 = vmatprep.subr.mxu0 0.0
        %2640 = vmatpush1.msra.mxu0 0.0
        %2641 = vmatprep.subr.mxu0 0.0
        %2642 = vmatpush1.msra.mxu0 0.0
        %2643 = vmatprep.subr.mxu0 0.0
        %2644 = vmatpush1.msra.mxu0 0.0
        %2645 = vmatprep.subr.mxu0 0.0
        %2646 = vmatpush1.msra.mxu0 0.0
        %2647 = vmatprep.subr.mxu0 0.0
        %2648 = vmatpush1.msra.mxu0 0.0
        %2649 = vmatprep.subr.mxu0 0.0
        %2650 = vmatpush1.msra.mxu0 0.0
        %2651 = vmatprep.subr.mxu0 0.0
        %2652 = vmatpush1.msra.mxu0 0.0
        %2653 = vmatprep.subr.mxu0 0.0
        %2654 = vmatpush1.msra.mxu0 0.0
        %2655 = vmatprep.subr.mxu0 0.0
        %2656 = vmatpush1.msra.mxu0 0.0
        %2657 = vmatprep.subr.mxu0 0.0
        %2658 = vmatpush1.msra.mxu0 0.0
        %2659 = vmatprep.subr.mxu0 0.0
        %2660 = vmatpush1.msra.mxu0 0.0
        %2661 = vmatprep.subr.mxu0 0.0
        %2662 = vmatpush1.msra.mxu0 %v2537
        %2663 = vmatprep.subr.mxu0 0.0
        %2664 = vmatpush2.msra.mxu0 0.0
        %2665 = vmatprep.subr.mxu0 0.0
        %2666 = vmatpush2.msra.mxu0 0.0
        %2667 = vmatprep.subr.mxu0 0.0
        %2668 = vmatpush2.msra.mxu0 0.0
        %2669 = vmatprep.subr.mxu0 0.0
        %2670 = vmatpush2.msra.mxu0 0.0
        %2671 = vmatprep.subr.mxu0 0.0
        %2672 = vmatpush2.msra.mxu0 0.0
        %2673 = vmatprep.subr.mxu0 0.0
        %2674 = vmatpush2.msra.mxu0 0.0
        %2675 = vmatprep.subr.mxu0 0.0
        %2676 = vmatpush2.msra.mxu0 0.0
        %2677 = vmatprep.subr.mxu0 0.0
        %2678 = vmatpush2.msra.mxu0 0.0
        %2679 = vmatprep.subr.mxu0 0.0
        %2680 = vmatpush2.msra.mxu0 0.0
        %2681 = vmatprep.subr.mxu0 0.0
        %2682 = vmatpush2.msra.mxu0 0.0
        %2683 = vmatprep.subr.mxu0 0.0
        %2684 = vmatpush2.msra.mxu0 0.0
        %2685 = vmatprep.subr.mxu0 0.0
        %2686 = vmatpush2.msra.mxu0 0.0
        %2687 = vmatprep.subr.mxu0 0.0
        %2688 = vmatpush2.msra.mxu0 0.0
        %2689 = vmatprep.subr.mxu0 0.0
        %2690 = vmatpush2.msra.mxu0 0.0
        %2691 = vmatprep.subr.mxu0 0.0
        %2692 = vmatpush2.msra.mxu0 0.0
        %2693 = vmatprep.subr.mxu0 0.0
        %2694 = vmatpush2.msra.mxu0 0.0
        %2695 = vmatprep.mubr.f32.mxu0 0.0
        %2696 = vmatmul.mubr.f32.gmra.mxu0 %v2629
        %v2697 = vpop.f32.mrf.mxu0
        %v2698 = vadd.f32 0.0, %v2697
        %v2699 = vpop.f32.mrf.mxu0
        %2700 = vdwg.mxu0
        %2701 = vrot.lane.b32.xlu0 %v2385, 96
        %v2702 = vpop.permute.xlu0 %2701
        %2703 = vrot.lane.b32.xlu0 %v2461, 96
        %v2704 = vpop.permute.xlu0 %2703
        %v2705 = vsel %vm990, %v2702, 0
        %v2707 = vsel %vm990, %v2704, 0
        %2709 = vmatprep.subr.mxu0 0.0
        %2710 = vmatpush1.xpose.msra.mxu0 0.0
        %2711 = vmatprep.subr.mxu0 0.0
        %2712 = vmatpush1.xpose.msra.mxu0 0.0
        %2713 = vmatprep.subr.mxu0 0.0
        %2714 = vmatpush1.xpose.msra.mxu0 0.0
        %2715 = vmatprep.subr.mxu0 0.0
        %2716 = vmatpush1.xpose.msra.mxu0 0.0
        %2717 = vmatprep.subr.mxu0 0.0
        %2718 = vmatpush1.xpose.msra.mxu0 0.0
        %2719 = vmatprep.subr.mxu0 0.0
        %2720 = vmatpush1.xpose.msra.mxu0 0.0
        %2721 = vmatprep.subr.mxu0 0.0
        %2722 = vmatpush1.xpose.msra.mxu0 0.0
        %2723 = vmatprep.subr.mxu0 0.0
        %2724 = vmatpush1.xpose.msra.mxu0 0.0
        %2725 = vmatprep.subr.mxu0 0.0
        %2726 = vmatpush1.xpose.msra.mxu0 0.0
        %2727 = vmatprep.subr.mxu0 0.0
        %2728 = vmatpush1.xpose.msra.mxu0 0.0
        %2729 = vmatprep.subr.mxu0 0.0
        %2730 = vmatpush1.xpose.msra.mxu0 0.0
        %2731 = vmatprep.subr.mxu0 0.0
        %2732 = vmatpush1.xpose.msra.mxu0 0.0
        %2733 = vmatprep.subr.mxu0 0.0
        %2734 = vmatpush1.xpose.msra.mxu0 0.0
        %2735 = vmatprep.subr.mxu0 0.0
        %2736 = vmatpush1.xpose.msra.mxu0 0.0
        %2737 = vmatprep.subr.mxu0 0.0
        %2738 = vmatpush1.xpose.msra.mxu0 0.0
        %2739 = vmatprep.subr.mxu0 0.0
        %2740 = vmatpush1.xpose.msra.mxu0 %v2707
        %2741 = vmatprep.subr.mxu0 0.0
        %2742 = vmatpush2.xpose.msra.mxu0 0.0
        %2743 = vmatprep.subr.mxu0 0.0
        %2744 = vmatpush2.xpose.msra.mxu0 0.0
        %2745 = vmatprep.subr.mxu0 0.0
        %2746 = vmatpush2.xpose.msra.mxu0 0.0
        %2747 = vmatprep.subr.mxu0 0.0
        %2748 = vmatpush2.xpose.msra.mxu0 0.0
        %2749 = vmatprep.subr.mxu0 0.0
        %2750 = vmatpush2.xpose.msra.mxu0 0.0
        %2751 = vmatprep.subr.mxu0 0.0
        %2752 = vmatpush2.xpose.msra.mxu0 0.0
        %2753 = vmatprep.subr.mxu0 0.0
        %2754 = vmatpush2.xpose.msra.mxu0 0.0
        %2755 = vmatprep.subr.mxu0 0.0
        %2756 = vmatpush2.xpose.msra.mxu0 0.0
        %2757 = vmatprep.subr.mxu0 0.0
        %2758 = vmatpush2.xpose.msra.mxu0 0.0
        %2759 = vmatprep.subr.mxu0 0.0
        %2760 = vmatpush2.xpose.msra.mxu0 0.0
        %2761 = vmatprep.subr.mxu0 0.0
        %2762 = vmatpush2.xpose.msra.mxu0 0.0
        %2763 = vmatprep.subr.mxu0 0.0
        %2764 = vmatpush2.xpose.msra.mxu0 0.0
        %2765 = vmatprep.subr.mxu0 0.0
        %2766 = vmatpush2.xpose.msra.mxu0 0.0
        %2767 = vmatprep.subr.mxu0 0.0
        %2768 = vmatpush2.xpose.msra.mxu0 0.0
        %2769 = vmatprep.subr.mxu0 0.0
        %2770 = vmatpush2.xpose.msra.mxu0 0.0
        %2771 = vmatprep.subr.mxu0 0.0
        %2772 = vmatpush2.xpose.msra.mxu0 0.0
        %2773 = vmatprep.mubr.f32.mxu0 0.0
        %2774 = vmatmul.mubr.f32.gmra.mxu0 %v2705
        %v2775 = vpop.f32.mrf.mxu0
        %v2776 = vadd.f32 0.0, %v2775
        %v2777 = vpop.f32.mrf.mxu0
        %2778 = vdwg.mxu0
        %v2779 = vmul.f32 %v2776, 0.17677669
        %v2780 = vsel %vm1068, %v2779, -inf
        %2781 = vmax.xlane.f32.xlu0 %v2780
        %v2782 = vpop.xlane.xlu0 %2781
        %v2783 = vsub.f32 %v2779, %v2782
        %v2784 = vmul.f32 %v2783, 1.442695
        %v2785 = vpow.pop %v2784
        %v2786 = vsel %vm1068, %v2785, 0.0
        %2787 = vadd.xlane.f32.xlu0 %v2786
        %v2788 = vpop.xlane.xlu0 %2787
        %v2789 = vrcp.pop %v2788
        %v2790 = vmul.f32 %v2785, %v2789
        %2792 = vrot.lane.b32.xlu0 %v2537, 96
        %v2793 = vpop.permute.xlu0 %2792
        %v2796 = vsel %vm1068, %v2790, 0
        %2798 = vmatprep.subr.mxu0 0.0
        %2799 = vmatpush1.msra.mxu0 0.0
        %2800 = vmatprep.subr.mxu0 0.0
        %2801 = vmatpush1.msra.mxu0 0.0
        %2802 = vmatprep.subr.mxu0 0.0
        %2803 = vmatpush1.msra.mxu0 0.0
        %2804 = vmatprep.subr.mxu0 0.0
        %2805 = vmatpush1.msra.mxu0 0.0
        %2806 = vmatprep.subr.mxu0 0.0
        %2807 = vmatpush1.msra.mxu0 0.0
        %2808 = vmatprep.subr.mxu0 0.0
        %2809 = vmatpush1.msra.mxu0 0.0
        %2810 = vmatprep.subr.mxu0 0.0
        %2811 = vmatpush1.msra.mxu0 0.0
        %2812 = vmatprep.subr.mxu0 0.0
        %2813 = vmatpush1.msra.mxu0 0.0
        %2814 = vmatprep.subr.mxu0 0.0
        %2815 = vmatpush1.msra.mxu0 0.0
        %2816 = vmatprep.subr.mxu0 0.0
        %2817 = vmatpush1.msra.mxu0 0.0
        %2818 = vmatprep.subr.mxu0 0.0
        %2819 = vmatpush1.msra.mxu0 0.0
        %2820 = vmatprep.subr.mxu0 0.0
        %2821 = vmatpush1.msra.mxu0 0.0
        %2822 = vmatprep.subr.mxu0 0.0
        %2823 = vmatpush1.msra.mxu0 0.0
        %2824 = vmatprep.subr.mxu0 0.0
        %2825 = vmatpush1.msra.mxu0 0.0
        %2826 = vmatprep.subr.mxu0 0.0
        %2827 = vmatpush1.msra.mxu0 0.0
        %2828 = vmatprep.subr.mxu0 0.0
        %2829 = vmatpush1.msra.mxu0 %v2793
        %2830 = vmatprep.subr.mxu0 0.0
        %2831 = vmatpush2.msra.mxu0 0.0
        %2832 = vmatprep.subr.mxu0 0.0
        %2833 = vmatpush2.msra.mxu0 0.0
        %2834 = vmatprep.subr.mxu0 0.0
        %2835 = vmatpush2.msra.mxu0 0.0
        %2836 = vmatprep.subr.mxu0 0.0
        %2837 = vmatpush2.msra.mxu0 0.0
        %2838 = vmatprep.subr.mxu0 0.0
        %2839 = vmatpush2.msra.mxu0 0.0
        %2840 = vmatprep.subr.mxu0 0.0
        %2841 = vmatpush2.msra.mxu0 0.0
        %2842 = vmatprep.subr.mxu0 0.0
        %2843 = vmatpush2.msra.mxu0 0.0
        %2844 = vmatprep.subr.mxu0 0.0
        %2845 = vmatpush2.msra.mxu0 0.0
        %2846 = vmatprep.subr.mxu0 0.0
        %2847 = vmatpush2.msra.mxu0 0.0
        %2848 = vmatprep.subr.mxu0 0.0
        %2849 = vmatpush2.msra.mxu0 0.0
        %2850 = vmatprep.subr.mxu0 0.0
        %2851 = vmatpush2.msra.mxu0 0.0
        %2852 = vmatprep.subr.mxu0 0.0
        %2853 = vmatpush2.msra.mxu0 0.0
        %2854 = vmatprep.subr.mxu0 0.0
        %2855 = vmatpush2.msra.mxu0 0.0
        %2856 = vmatprep.subr.mxu0 0.0
        %2857 = vmatpush2.msra.mxu0 0.0
        %2858 = vmatprep.subr.mxu0 0.0
        %2859 = vmatpush2.msra.mxu0 0.0
        %2860 = vmatprep.subr.mxu0 0.0
        %2861 = vmatpush2.msra.mxu0 0.0
        %2862 = vmatprep.mubr.f32.mxu0 0.0
        %2863 = vmatmul.mubr.f32.gmra.mxu0 %v2796
        %v2864 = vpop.f32.mrf.mxu0
        %v2865 = vadd.f32 0.0, %v2864
        %v2866 = vpop.f32.mrf.mxu0
        %2867 = vdwg.mxu0
        %v2869 = vsel %vm990, %v2865, 0
        %2871 = vmatprep.subr.mxu0 0.0
        %2872 = vmatpush1.msra.mxu0 0.0
        %2873 = vmatprep.subr.mxu0 0.0
        %2874 = vmatpush1.msra.mxu0 0.0
        %2875 = vmatprep.subr.mxu0 0.0
        %2876 = vmatpush1.msra.mxu0 0.0
        %2877 = vmatprep.subr.mxu0 0.0
        %2878 = vmatpush1.msra.mxu0 0.0
        %2879 = vmatprep.subr.mxu0 0.0
        %2880 = vmatpush1.msra.mxu0 0.0
        %2881 = vmatprep.subr.mxu0 0.0
        %2882 = vmatpush1.msra.mxu0 0.0
        %2883 = vmatprep.subr.mxu0 0.0
        %2884 = vmatpush1.msra.mxu0 0.0
        %2885 = vmatprep.subr.mxu0 0.0
        %2886 = vmatpush1.msra.mxu0 0.0
        %2887 = vmatprep.subr.mxu0 0.0
        %2888 = vmatpush1.msra.mxu0 0.0
        %2889 = vmatprep.subr.mxu0 0.0
        %2890 = vmatpush1.msra.mxu0 0.0
        %2891 = vmatprep.subr.mxu0 0.0
        %2892 = vmatpush1.msra.mxu0 0.0
        %2893 = vmatprep.subr.mxu0 0.0
        %2894 = vmatpush1.msra.mxu0 0.0
        %2895 = vmatprep.subr.mxu0 0.0
        %2896 = vmatpush1.msra.mxu0 %v2295
        %2897 = vmatprep.subr.mxu0 0.0
        %2898 = vmatpush1.msra.mxu0 %v2294
        %2899 = vmatprep.subr.mxu0 0.0
        %2900 = vmatpush1.msra.mxu0 %v2293
        %2901 = vmatprep.subr.mxu0 0.0
        %2902 = vmatpush1.msra.mxu0 %v2292
        %2903 = vmatprep.subr.mxu0 0.0
        %2904 = vmatpush2.msra.mxu0 0.0
        %2905 = vmatprep.subr.mxu0 0.0
        %2906 = vmatpush2.msra.mxu0 0.0
        %2907 = vmatprep.subr.mxu0 0.0
        %2908 = vmatpush2.msra.mxu0 0.0
        %2909 = vmatprep.subr.mxu0 0.0
        %2910 = vmatpush2.msra.mxu0 0.0
        %2911 = vmatprep.subr.mxu0 0.0
        %2912 = vmatpush2.msra.mxu0 0.0
        %2913 = vmatprep.subr.mxu0 0.0
        %2914 = vmatpush2.msra.mxu0 0.0
        %2915 = vmatprep.subr.mxu0 0.0
        %2916 = vmatpush2.msra.mxu0 0.0
        %2917 = vmatprep.subr.mxu0 0.0
        %2918 = vmatpush2.msra.mxu0 0.0
        %2919 = vmatprep.subr.mxu0 0.0
        %2920 = vmatpush2.msra.mxu0 0.0
        %2921 = vmatprep.subr.mxu0 0.0
        %2922 = vmatpush2.msra.mxu0 0.0
        %2923 = vmatprep.subr.mxu0 0.0
        %2924 = vmatpush2.msra.mxu0 0.0
        %2925 = vmatprep.subr.mxu0 0.0
        %2926 = vmatpush2.msra.mxu0 0.0
        %2927 = vmatprep.subr.mxu0 0.0
        %2928 = vmatpush2.msra.mxu0 0.0
        %2929 = vmatprep.subr.mxu0 0.0
        %2930 = vmatpush2.msra.mxu0 0.0
        %2931 = vmatprep.subr.mxu0 0.0
        %2932 = vmatpush2.msra.mxu0 0.0
        %2933 = vmatprep.subr.mxu0 0.0
        %2934 = vmatpush2.msra.mxu0 0.0
        %2935 = vmatprep.mubr.f32.mxu0 0.0
        %2936 = vmatmul.mubr.f32.gmra.mxu0 %v2869
        %v2937 = vpop.f32.mrf.mxu0
        %v2938 = vadd.f32 0.0, %v2937
        %v2939 = vpop.f32.mrf.mxu0
        %2940 = vdwg.mxu0
        %v2942 = vsel %vm990, %v2698, 0
        %2944 = vmatprep.subr.mxu0 0.0
        %2945 = vmatpush1.msra.mxu0 0.0
        %2946 = vmatprep.subr.mxu0 0.0
        %2947 = vmatpush1.msra.mxu0 0.0
        %2948 = vmatprep.subr.mxu0 0.0
        %2949 = vmatpush1.msra.mxu0 0.0
        %2950 = vmatprep.subr.mxu0 0.0
        %2951 = vmatpush1.msra.mxu0 0.0
        %2952 = vmatprep.subr.mxu0 0.0
        %2953 = vmatpush1.msra.mxu0 0.0
        %2954 = vmatprep.subr.mxu0 0.0
        %2955 = vmatpush1.msra.mxu0 0.0
        %2956 = vmatprep.subr.mxu0 0.0
        %2957 = vmatpush1.msra.mxu0 0.0
        %2958 = vmatprep.subr.mxu0 0.0
        %2959 = vmatpush1.msra.mxu0 0.0
        %2960 = vmatprep.subr.mxu0 0.0
        %2961 = vmatpush1.msra.mxu0 0.0
        %2962 = vmatprep.subr.mxu0 0.0
        %2963 = vmatpush1.msra.mxu0 0.0
        %2964 = vmatprep.subr.mxu0 0.0
        %2965 = vmatpush1.msra.mxu0 0.0
        %2966 = vmatprep.subr.mxu0 0.0
        %2967 = vmatpush1.msra.mxu0 0.0
        %2968 = vmatprep.subr.mxu0 0.0
        %2969 = vmatpush1.msra.mxu0 %v2291
        %2970 = vmatprep.subr.mxu0 0.0
        %2971 = vmatpush1.msra.mxu0 %v2290
        %2972 = vmatprep.subr.mxu0 0.0
        %2973 = vmatpush1.msra.mxu0 %v2289
        %2974 = vmatprep.subr.mxu0 0.0
        %2975 = vmatpush1.msra.mxu0 %v2288
        %2976 = vmatprep.subr.mxu0 0.0
        %2977 = vmatpush2.msra.mxu0 0.0
        %2978 = vmatprep.subr.mxu0 0.0
        %2979 = vmatpush2.msra.mxu0 0.0
        %2980 = vmatprep.subr.mxu0 0.0
        %2981 = vmatpush2.msra.mxu0 0.0
        %2982 = vmatprep.subr.mxu0 0.0
        %2983 = vmatpush2.msra.mxu0 0.0
        %2984 = vmatprep.subr.mxu0 0.0
        %2985 = vmatpush2.msra.mxu0 0.0
        %2986 = vmatprep.subr.mxu0 0.0
        %2987 = vmatpush2.msra.mxu0 0.0
        %2988 = vmatprep.subr.mxu0 0.0
        %2989 = vmatpush2.msra.mxu0 0.0
        %2990 = vmatprep.subr.mxu0 0.0
        %2991 = vmatpush2.msra.mxu0 0.0
        %2992 = vmatprep.subr.mxu0 0.0
        %2993 = vmatpush2.msra.mxu0 0.0
        %2994 = vmatprep.subr.mxu0 0.0
        %2995 = vmatpush2.msra.mxu0 0.0
        %2996 = vmatprep.subr.mxu0 0.0
        %2997 = vmatpush2.msra.mxu0 0.0
        %2998 = vmatprep.subr.mxu0 0.0
        %2999 = vmatpush2.msra.mxu0 0.0
        %3000 = vmatprep.subr.mxu0 0.0
        %3001 = vmatpush2.msra.mxu0 0.0
        %3002 = vmatprep.subr.mxu0 0.0
        %3003 = vmatpush2.msra.mxu0 0.0
        %3004 = vmatprep.subr.mxu0 0.0
        %3005 = vmatpush2.msra.mxu0 0.0
        %3006 = vmatprep.subr.mxu0 0.0
        %3007 = vmatpush2.msra.mxu0 0.0
        %3008 = vmatprep.mubr.f32.mxu0 0.0
        %3009 = vmatmul.mubr.f32.gmra.mxu0 %v2942
        %v3010 = vpop.f32.mrf.mxu0
        %v3011 = vadd.f32 %v2938, %v3010
        %v3012 = vpop.f32.mrf.mxu0
        %3013 = vdwg.mxu0
        %3014 = vrot.lane.b32.xlu0 %v2385, 64
        %v3015 = vpop.permute.xlu0 %3014
        %3016 = vrot.lane.b32.xlu0 %v2461, 64
        %v3017 = vpop.permute.xlu0 %3016
        %v3018 = vsel %vm990, %v3015, 0
        %v3020 = vsel %vm990, %v3017, 0
        %3022 = vmatprep.subr.mxu0 0.0
        %3023 = vmatpush1.xpose.msra.mxu0 0.0
        %3024 = vmatprep.subr.mxu0 0.0
        %3025 = vmatpush1.xpose.msra.mxu0 0.0
        %3026 = vmatprep.subr.mxu0 0.0
        %3027 = vmatpush1.xpose.msra.mxu0 0.0
        %3028 = vmatprep.subr.mxu0 0.0
        %3029 = vmatpush1.xpose.msra.mxu0 0.0
        %3030 = vmatprep.subr.mxu0 0.0
        %3031 = vmatpush1.xpose.msra.mxu0 0.0
        %3032 = vmatprep.subr.mxu0 0.0
        %3033 = vmatpush1.xpose.msra.mxu0 0.0
        %3034 = vmatprep.subr.mxu0 0.0
        %3035 = vmatpush1.xpose.msra.mxu0 0.0
        %3036 = vmatprep.subr.mxu0 0.0
        %3037 = vmatpush1.xpose.msra.mxu0 0.0
        %3038 = vmatprep.subr.mxu0 0.0
        %3039 = vmatpush1.xpose.msra.mxu0 0.0
        %3040 = vmatprep.subr.mxu0 0.0
        %3041 = vmatpush1.xpose.msra.mxu0 0.0
        %3042 = vmatprep.subr.mxu0 0.0
        %3043 = vmatpush1.xpose.msra.mxu0 0.0
        %3044 = vmatprep.subr.mxu0 0.0
        %3045 = vmatpush1.xpose.msra.mxu0 0.0
        %3046 = vmatprep.subr.mxu0 0.0
        %3047 = vmatpush1.xpose.msra.mxu0 0.0
        %3048 = vmatprep.subr.mxu0 0.0
        %3049 = vmatpush1.xpose.msra.mxu0 0.0
        %3050 = vmatprep.subr.mxu0 0.0
        %3051 = vmatpush1.xpose.msra.mxu0 0.0
        %3052 = vmatprep.subr.mxu0 0.0
        %3053 = vmatpush1.xpose.msra.mxu0 %v3020
        %3054 = vmatprep.subr.mxu0 0.0
        %3055 = vmatpush2.xpose.msra.mxu0 0.0
        %3056 = vmatprep.subr.mxu0 0.0
        %3057 = vmatpush2.xpose.msra.mxu0 0.0
        %3058 = vmatprep.subr.mxu0 0.0
        %3059 = vmatpush2.xpose.msra.mxu0 0.0
        %3060 = vmatprep.subr.mxu0 0.0
        %3061 = vmatpush2.xpose.msra.mxu0 0.0
        %3062 = vmatprep.subr.mxu0 0.0
        %3063 = vmatpush2.xpose.msra.mxu0 0.0
        %3064 = vmatprep.subr.mxu0 0.0
        %3065 = vmatpush2.xpose.msra.mxu0 0.0
        %3066 = vmatprep.subr.mxu0 0.0
        %3067 = vmatpush2.xpose.msra.mxu0 0.0
        %3068 = vmatprep.subr.mxu0 0.0
        %3069 = vmatpush2.xpose.msra.mxu0 0.0
        %3070 = vmatprep.subr.mxu0 0.0
        %3071 = vmatpush2.xpose.msra.mxu0 0.0
        %3072 = vmatprep.subr.mxu0 0.0
        %3073 = vmatpush2.xpose.msra.mxu0 0.0
        %3074 = vmatprep.subr.mxu0 0.0
        %3075 = vmatpush2.xpose.msra.mxu0 0.0
        %3076 = vmatprep.subr.mxu0 0.0
        %3077 = vmatpush2.xpose.msra.mxu0 0.0
        %3078 = vmatprep.subr.mxu0 0.0
        %3079 = vmatpush2.xpose.msra.mxu0 0.0
        %3080 = vmatprep.subr.mxu0 0.0
        %3081 = vmatpush2.xpose.msra.mxu0 0.0
        %3082 = vmatprep.subr.mxu0 0.0
        %3083 = vmatpush2.xpose.msra.mxu0 0.0
        %3084 = vmatprep.subr.mxu0 0.0
        %3085 = vmatpush2.xpose.msra.mxu0 0.0
        %3086 = vmatprep.mubr.f32.mxu0 0.0
        %3087 = vmatmul.mubr.f32.gmra.mxu0 %v3018
        %v3088 = vpop.f32.mrf.mxu0
        %v3089 = vadd.f32 0.0, %v3088
        %v3090 = vpop.f32.mrf.mxu0
        %3091 = vdwg.mxu0
        %v3092 = vmul.f32 %v3089, 0.17677669
        %v3093 = vsel %vm1068, %v3092, -inf
        %3094 = vmax.xlane.f32.xlu0 %v3093
        %v3095 = vpop.xlane.xlu0 %3094
        %v3096 = vsub.f32 %v3092, %v3095
        %v3097 = vmul.f32 %v3096, 1.442695
        %v3098 = vpow.pop %v3097
        %v3099 = vsel %vm1068, %v3098, 0.0
        %3100 = vadd.xlane.f32.xlu0 %v3099
        %v3101 = vpop.xlane.xlu0 %3100
        %v3102 = vrcp.pop %v3101
        %v3103 = vmul.f32 %v3098, %v3102
        %3104 = vrot.lane.b32.xlu0 %v2537, 64
        %v3105 = vpop.permute.xlu0 %3104
        %v3108 = vsel %vm1068, %v3103, 0
        %3110 = vmatprep.subr.mxu0 0.0
        %3111 = vmatpush1.msra.mxu0 0.0
        %3112 = vmatprep.subr.mxu0 0.0
        %3113 = vmatpush1.msra.mxu0 0.0
        %3114 = vmatprep.subr.mxu0 0.0
        %3115 = vmatpush1.msra.mxu0 0.0
        %3116 = vmatprep.subr.mxu0 0.0
        %3117 = vmatpush1.msra.mxu0 0.0
        %3118 = vmatprep.subr.mxu0 0.0
        %3119 = vmatpush1.msra.mxu0 0.0
        %3120 = vmatprep.subr.mxu0 0.0
        %3121 = vmatpush1.msra.mxu0 0.0
        %3122 = vmatprep.subr.mxu0 0.0
        %3123 = vmatpush1.msra.mxu0 0.0
        %3124 = vmatprep.subr.mxu0 0.0
        %3125 = vmatpush1.msra.mxu0 0.0
        %3126 = vmatprep.subr.mxu0 0.0
        %3127 = vmatpush1.msra.mxu0 0.0
        %3128 = vmatprep.subr.mxu0 0.0
        %3129 = vmatpush1.msra.mxu0 0.0
        %3130 = vmatprep.subr.mxu0 0.0
        %3131 = vmatpush1.msra.mxu0 0.0
        %3132 = vmatprep.subr.mxu0 0.0
        %3133 = vmatpush1.msra.mxu0 0.0
        %3134 = vmatprep.subr.mxu0 0.0
        %3135 = vmatpush1.msra.mxu0 0.0
        %3136 = vmatprep.subr.mxu0 0.0
        %3137 = vmatpush1.msra.mxu0 0.0
        %3138 = vmatprep.subr.mxu0 0.0
        %3139 = vmatpush1.msra.mxu0 0.0
        %3140 = vmatprep.subr.mxu0 0.0
        %3141 = vmatpush1.msra.mxu0 %v3105
        %3142 = vmatprep.subr.mxu0 0.0
        %3143 = vmatpush2.msra.mxu0 0.0
        %3144 = vmatprep.subr.mxu0 0.0
        %3145 = vmatpush2.msra.mxu0 0.0
        %3146 = vmatprep.subr.mxu0 0.0
        %3147 = vmatpush2.msra.mxu0 0.0
        %3148 = vmatprep.subr.mxu0 0.0
        %3149 = vmatpush2.msra.mxu0 0.0
        %3150 = vmatprep.subr.mxu0 0.0
        %3151 = vmatpush2.msra.mxu0 0.0
        %3152 = vmatprep.subr.mxu0 0.0
        %3153 = vmatpush2.msra.mxu0 0.0
        %3154 = vmatprep.subr.mxu0 0.0
        %3155 = vmatpush2.msra.mxu0 0.0
        %3156 = vmatprep.subr.mxu0 0.0
        %3157 = vmatpush2.msra.mxu0 0.0
        %3158 = vmatprep.subr.mxu0 0.0
        %3159 = vmatpush2.msra.mxu0 0.0
        %3160 = vmatprep.subr.mxu0 0.0
        %3161 = vmatpush2.msra.mxu0 0.0
        %3162 = vmatprep.subr.mxu0 0.0
        %3163 = vmatpush2.msra.mxu0 0.0
        %3164 = vmatprep.subr.mxu0 0.0
        %3165 = vmatpush2.msra.mxu0 0.0
        %3166 = vmatprep.subr.mxu0 0.0
        %3167 = vmatpush2.msra.mxu0 0.0
        %3168 = vmatprep.subr.mxu0 0.0
        %3169 = vmatpush2.msra.mxu0 0.0
        %3170 = vmatprep.subr.mxu0 0.0
        %3171 = vmatpush2.msra.mxu0 0.0
        %3172 = vmatprep.subr.mxu0 0.0
        %3173 = vmatpush2.msra.mxu0 0.0
        %3174 = vmatprep.mubr.f32.mxu0 0.0
        %3175 = vmatmul.mubr.f32.gmra.mxu0 %v3108
        %v3176 = vpop.f32.mrf.mxu0
        %v3177 = vadd.f32 0.0, %v3176
        %v3178 = vpop.f32.mrf.mxu0
        %3179 = vdwg.mxu0
        %v3181 = vsel %vm990, %v3177, 0
        %3183 = vmatprep.subr.mxu0 0.0
        %3184 = vmatpush1.msra.mxu0 0.0
        %3185 = vmatprep.subr.mxu0 0.0
        %3186 = vmatpush1.msra.mxu0 0.0
        %3187 = vmatprep.subr.mxu0 0.0
        %3188 = vmatpush1.msra.mxu0 0.0
        %3189 = vmatprep.subr.mxu0 0.0
        %3190 = vmatpush1.msra.mxu0 0.0
        %3191 = vmatprep.subr.mxu0 0.0
        %3192 = vmatpush1.msra.mxu0 0.0
        %3193 = vmatprep.subr.mxu0 0.0
        %3194 = vmatpush1.msra.mxu0 0.0
        %3195 = vmatprep.subr.mxu0 0.0
        %3196 = vmatpush1.msra.mxu0 0.0
        %3197 = vmatprep.subr.mxu0 0.0
        %3198 = vmatpush1.msra.mxu0 0.0
        %3199 = vmatprep.subr.mxu0 0.0
        %3200 = vmatpush1.msra.mxu0 0.0
        %3201 = vmatprep.subr.mxu0 0.0
        %3202 = vmatpush1.msra.mxu0 0.0
        %3203 = vmatprep.subr.mxu0 0.0
        %3204 = vmatpush1.msra.mxu0 0.0
        %3205 = vmatprep.subr.mxu0 0.0
        %3206 = vmatpush1.msra.mxu0 0.0
        %3207 = vmatprep.subr.mxu0 0.0
        %3208 = vmatpush1.msra.mxu0 %v2299
        %3209 = vmatprep.subr.mxu0 0.0
        %3210 = vmatpush1.msra.mxu0 %v2298
        %3211 = vmatprep.subr.mxu0 0.0
        %3212 = vmatpush1.msra.mxu0 %v2297
        %3213 = vmatprep.subr.mxu0 0.0
        %3214 = vmatpush1.msra.mxu0 %v2296
        %3215 = vmatprep.subr.mxu0 0.0
        %3216 = vmatpush2.msra.mxu0 0.0
        %3217 = vmatprep.subr.mxu0 0.0
        %3218 = vmatpush2.msra.mxu0 0.0
        %3219 = vmatprep.subr.mxu0 0.0
        %3220 = vmatpush2.msra.mxu0 0.0
        %3221 = vmatprep.subr.mxu0 0.0
        %3222 = vmatpush2.msra.mxu0 0.0
        %3223 = vmatprep.subr.mxu0 0.0
        %3224 = vmatpush2.msra.mxu0 0.0
        %3225 = vmatprep.subr.mxu0 0.0
        %3226 = vmatpush2.msra.mxu0 0.0
        %3227 = vmatprep.subr.mxu0 0.0
        %3228 = vmatpush2.msra.mxu0 0.0
        %3229 = vmatprep.subr.mxu0 0.0
        %3230 = vmatpush2.msra.mxu0 0.0
        %3231 = vmatprep.subr.mxu0 0.0
        %3232 = vmatpush2.msra.mxu0 0.0
        %3233 = vmatprep.subr.mxu0 0.0
        %3234 = vmatpush2.msra.mxu0 0.0
        %3235 = vmatprep.subr.mxu0 0.0
        %3236 = vmatpush2.msra.mxu0 0.0
        %3237 = vmatprep.subr.mxu0 0.0
        %3238 = vmatpush2.msra.mxu0 0.0
        %3239 = vmatprep.subr.mxu0 0.0
        %3240 = vmatpush2.msra.mxu0 0.0
        %3241 = vmatprep.subr.mxu0 0.0
        %3242 = vmatpush2.msra.mxu0 0.0
        %3243 = vmatprep.subr.mxu0 0.0
        %3244 = vmatpush2.msra.mxu0 0.0
        %3245 = vmatprep.subr.mxu0 0.0
        %3246 = vmatpush2.msra.mxu0 0.0
        %3247 = vmatprep.mubr.f32.mxu0 0.0
        %3248 = vmatmul.mubr.f32.gmra.mxu0 %v3181
        %v3249 = vpop.f32.mrf.mxu0
        %v3250 = vadd.f32 0.0, %v3249
        %v3251 = vpop.f32.mrf.mxu0
        %3252 = vdwg.mxu0
        %v3253 = vadd.f32 %v3011, %v3250
        %3254 = vrot.lane.b32.xlu0 %v2385, 32
        %v3255 = vpop.permute.xlu0 %3254
        %3256 = vrot.lane.b32.xlu0 %v2461, 32
        %v3257 = vpop.permute.xlu0 %3256
        %v3258 = vsel %vm990, %v3255, 0
        %v3260 = vsel %vm990, %v3257, 0
        %3262 = vmatprep.subr.mxu0 0.0
        %3263 = vmatpush1.xpose.msra.mxu0 0.0
        %3264 = vmatprep.subr.mxu0 0.0
        %3265 = vmatpush1.xpose.msra.mxu0 0.0
        %3266 = vmatprep.subr.mxu0 0.0
        %3267 = vmatpush1.xpose.msra.mxu0 0.0
        %3268 = vmatprep.subr.mxu0 0.0
        %3269 = vmatpush1.xpose.msra.mxu0 0.0
        %3270 = vmatprep.subr.mxu0 0.0
        %3271 = vmatpush1.xpose.msra.mxu0 0.0
        %3272 = vmatprep.subr.mxu0 0.0
        %3273 = vmatpush1.xpose.msra.mxu0 0.0
        %3274 = vmatprep.subr.mxu0 0.0
        %3275 = vmatpush1.xpose.msra.mxu0 0.0
        %3276 = vmatprep.subr.mxu0 0.0
        %3277 = vmatpush1.xpose.msra.mxu0 0.0
        %3278 = vmatprep.subr.mxu0 0.0
        %3279 = vmatpush1.xpose.msra.mxu0 0.0
        %3280 = vmatprep.subr.mxu0 0.0
        %3281 = vmatpush1.xpose.msra.mxu0 0.0
        %3282 = vmatprep.subr.mxu0 0.0
        %3283 = vmatpush1.xpose.msra.mxu0 0.0
        %3284 = vmatprep.subr.mxu0 0.0
        %3285 = vmatpush1.xpose.msra.mxu0 0.0
        %3286 = vmatprep.subr.mxu0 0.0
        %3287 = vmatpush1.xpose.msra.mxu0 0.0
        %3288 = vmatprep.subr.mxu0 0.0
        %3289 = vmatpush1.xpose.msra.mxu0 0.0
        %3290 = vmatprep.subr.mxu0 0.0
        %3291 = vmatpush1.xpose.msra.mxu0 0.0
        %3292 = vmatprep.subr.mxu0 0.0
        %3293 = vmatpush1.xpose.msra.mxu0 %v3260
        %3294 = vmatprep.subr.mxu0 0.0
        %3295 = vmatpush2.xpose.msra.mxu0 0.0
        %3296 = vmatprep.subr.mxu0 0.0
        %3297 = vmatpush2.xpose.msra.mxu0 0.0
        %3298 = vmatprep.subr.mxu0 0.0
        %3299 = vmatpush2.xpose.msra.mxu0 0.0
        %3300 = vmatprep.subr.mxu0 0.0
        %3301 = vmatpush2.xpose.msra.mxu0 0.0
        %3302 = vmatprep.subr.mxu0 0.0
        %3303 = vmatpush2.xpose.msra.mxu0 0.0
        %3304 = vmatprep.subr.mxu0 0.0
        %3305 = vmatpush2.xpose.msra.mxu0 0.0
        %3306 = vmatprep.subr.mxu0 0.0
        %3307 = vmatpush2.xpose.msra.mxu0 0.0
        %3308 = vmatprep.subr.mxu0 0.0
        %3309 = vmatpush2.xpose.msra.mxu0 0.0
        %3310 = vmatprep.subr.mxu0 0.0
        %3311 = vmatpush2.xpose.msra.mxu0 0.0
        %3312 = vmatprep.subr.mxu0 0.0
        %3313 = vmatpush2.xpose.msra.mxu0 0.0
        %3314 = vmatprep.subr.mxu0 0.0
        %3315 = vmatpush2.xpose.msra.mxu0 0.0
        %3316 = vmatprep.subr.mxu0 0.0
        %3317 = vmatpush2.xpose.msra.mxu0 0.0
        %3318 = vmatprep.subr.mxu0 0.0
        %3319 = vmatpush2.xpose.msra.mxu0 0.0
        %3320 = vmatprep.subr.mxu0 0.0
        %3321 = vmatpush2.xpose.msra.mxu0 0.0
        %3322 = vmatprep.subr.mxu0 0.0
        %3323 = vmatpush2.xpose.msra.mxu0 0.0
        %3324 = vmatprep.subr.mxu0 0.0
        %3325 = vmatpush2.xpose.msra.mxu0 0.0
        %3326 = vmatprep.mubr.f32.mxu0 0.0
        %3327 = vmatmul.mubr.f32.gmra.mxu0 %v3258
        %v3328 = vpop.f32.mrf.mxu0
        %v3329 = vadd.f32 0.0, %v3328
        %v3330 = vpop.f32.mrf.mxu0
        %3331 = vdwg.mxu0
        %v3332 = vmul.f32 %v3329, 0.17677669
        %v3333 = vsel %vm1068, %v3332, -inf
        %3334 = vmax.xlane.f32.xlu0 %v3333
        %v3335 = vpop.xlane.xlu0 %3334
        %v3336 = vsub.f32 %v3332, %v3335
        %v3337 = vmul.f32 %v3336, 1.442695
        %v3338 = vpow.pop %v3337
        %v3339 = vsel %vm1068, %v3338, 0.0
        %3340 = vadd.xlane.f32.xlu0 %v3339
        %v3341 = vpop.xlane.xlu0 %3340
        %v3342 = vrcp.pop %v3341
        %v3343 = vmul.f32 %v3338, %v3342
        %3344 = vrot.lane.b32.xlu0 %v2537, 32
        %v3345 = vpop.permute.xlu0 %3344
        %v3348 = vsel %vm1068, %v3343, 0
        %3350 = vmatprep.subr.mxu0 0.0
        %3351 = vmatpush1.msra.mxu0 0.0
        %3352 = vmatprep.subr.mxu0 0.0
        %3353 = vmatpush1.msra.mxu0 0.0
        %3354 = vmatprep.subr.mxu0 0.0
        %3355 = vmatpush1.msra.mxu0 0.0
        %3356 = vmatprep.subr.mxu0 0.0
        %3357 = vmatpush1.msra.mxu0 0.0
        %3358 = vmatprep.subr.mxu0 0.0
        %3359 = vmatpush1.msra.mxu0 0.0
        %3360 = vmatprep.subr.mxu0 0.0
        %3361 = vmatpush1.msra.mxu0 0.0
        %3362 = vmatprep.subr.mxu0 0.0
        %3363 = vmatpush1.msra.mxu0 0.0
        %3364 = vmatprep.subr.mxu0 0.0
        %3365 = vmatpush1.msra.mxu0 0.0
        %3366 = vmatprep.subr.mxu0 0.0
        %3367 = vmatpush1.msra.mxu0 0.0
        %3368 = vmatprep.subr.mxu0 0.0
        %3369 = vmatpush1.msra.mxu0 0.0
        %3370 = vmatprep.subr.mxu0 0.0
        %3371 = vmatpush1.msra.mxu0 0.0
        %3372 = vmatprep.subr.mxu0 0.0
        %3373 = vmatpush1.msra.mxu0 0.0
        %3374 = vmatprep.subr.mxu0 0.0
        %3375 = vmatpush1.msra.mxu0 0.0
        %3376 = vmatprep.subr.mxu0 0.0
        %3377 = vmatpush1.msra.mxu0 0.0
        %3378 = vmatprep.subr.mxu0 0.0
        %3379 = vmatpush1.msra.mxu0 0.0
        %3380 = vmatprep.subr.mxu0 0.0
        %3381 = vmatpush1.msra.mxu0 %v3345
        %3382 = vmatprep.subr.mxu0 0.0
        %3383 = vmatpush2.msra.mxu0 0.0
        %3384 = vmatprep.subr.mxu0 0.0
        %3385 = vmatpush2.msra.mxu0 0.0
        %3386 = vmatprep.subr.mxu0 0.0
        %3387 = vmatpush2.msra.mxu0 0.0
        %3388 = vmatprep.subr.mxu0 0.0
        %3389 = vmatpush2.msra.mxu0 0.0
        %3390 = vmatprep.subr.mxu0 0.0
        %3391 = vmatpush2.msra.mxu0 0.0
        %3392 = vmatprep.subr.mxu0 0.0
        %3393 = vmatpush2.msra.mxu0 0.0
        %3394 = vmatprep.subr.mxu0 0.0
        %3395 = vmatpush2.msra.mxu0 0.0
        %3396 = vmatprep.subr.mxu0 0.0
        %3397 = vmatpush2.msra.mxu0 0.0
        %3398 = vmatprep.subr.mxu0 0.0
        %3399 = vmatpush2.msra.mxu0 0.0
        %3400 = vmatprep.subr.mxu0 0.0
        %3401 = vmatpush2.msra.mxu0 0.0
        %3402 = vmatprep.subr.mxu0 0.0
        %3403 = vmatpush2.msra.mxu0 0.0
        %3404 = vmatprep.subr.mxu0 0.0
        %3405 = vmatpush2.msra.mxu0 0.0
        %3406 = vmatprep.subr.mxu0 0.0
        %3407 = vmatpush2.msra.mxu0 0.0
        %3408 = vmatprep.subr.mxu0 0.0
        %3409 = vmatpush2.msra.mxu0 0.0
        %3410 = vmatprep.subr.mxu0 0.0
        %3411 = vmatpush2.msra.mxu0 0.0
        %3412 = vmatprep.subr.mxu0 0.0
        %3413 = vmatpush2.msra.mxu0 0.0
        %3414 = vmatprep.mubr.f32.mxu0 0.0
        %3415 = vmatmul.mubr.f32.gmra.mxu0 %v3348
        %v3416 = vpop.f32.mrf.mxu0
        %v3417 = vadd.f32 0.0, %v3416
        %v3418 = vpop.f32.mrf.mxu0
        %3419 = vdwg.mxu0
        %v3421 = vsel %vm990, %v3417, 0
        %3423 = vmatprep.subr.mxu0 0.0
        %3424 = vmatpush1.msra.mxu0 0.0
        %3425 = vmatprep.subr.mxu0 0.0
        %3426 = vmatpush1.msra.mxu0 0.0
        %3427 = vmatprep.subr.mxu0 0.0
        %3428 = vmatpush1.msra.mxu0 0.0
        %3429 = vmatprep.subr.mxu0 0.0
        %3430 = vmatpush1.msra.mxu0 0.0
        %3431 = vmatprep.subr.mxu0 0.0
        %3432 = vmatpush1.msra.mxu0 0.0
        %3433 = vmatprep.subr.mxu0 0.0
        %3434 = vmatpush1.msra.mxu0 0.0
        %3435 = vmatprep.subr.mxu0 0.0
        %3436 = vmatpush1.msra.mxu0 0.0
        %3437 = vmatprep.subr.mxu0 0.0
        %3438 = vmatpush1.msra.mxu0 0.0
        %3439 = vmatprep.subr.mxu0 0.0
        %3440 = vmatpush1.msra.mxu0 0.0
        %3441 = vmatprep.subr.mxu0 0.0
        %3442 = vmatpush1.msra.mxu0 0.0
        %3443 = vmatprep.subr.mxu0 0.0
        %3444 = vmatpush1.msra.mxu0 0.0
        %3445 = vmatprep.subr.mxu0 0.0
        %3446 = vmatpush1.msra.mxu0 0.0
        %3447 = vmatprep.subr.mxu0 0.0
        %3448 = vmatpush1.msra.mxu0 %v2303
        %3449 = vmatprep.subr.mxu0 0.0
        %3450 = vmatpush1.msra.mxu0 %v2302
        %3451 = vmatprep.subr.mxu0 0.0
        %3452 = vmatpush1.msra.mxu0 %v2301
        %3453 = vmatprep.subr.mxu0 0.0
        %3454 = vmatpush1.msra.mxu0 %v2300
        %3455 = vmatprep.subr.mxu0 0.0
        %3456 = vmatpush2.msra.mxu0 0.0
        %3457 = vmatprep.subr.mxu0 0.0
        %3458 = vmatpush2.msra.mxu0 0.0
        %3459 = vmatprep.subr.mxu0 0.0
        %3460 = vmatpush2.msra.mxu0 0.0
        %3461 = vmatprep.subr.mxu0 0.0
        %3462 = vmatpush2.msra.mxu0 0.0
        %3463 = vmatprep.subr.mxu0 0.0
        %3464 = vmatpush2.msra.mxu0 0.0
        %3465 = vmatprep.subr.mxu0 0.0
        %3466 = vmatpush2.msra.mxu0 0.0
        %3467 = vmatprep.subr.mxu0 0.0
        %3468 = vmatpush2.msra.mxu0 0.0
        %3469 = vmatprep.subr.mxu0 0.0
        %3470 = vmatpush2.msra.mxu0 0.0
        %3471 = vmatprep.subr.mxu0 0.0
        %3472 = vmatpush2.msra.mxu0 0.0
        %3473 = vmatprep.subr.mxu0 0.0
        %3474 = vmatpush2.msra.mxu0 0.0
        %3475 = vmatprep.subr.mxu0 0.0
        %3476 = vmatpush2.msra.mxu0 0.0
        %3477 = vmatprep.subr.mxu0 0.0
        %3478 = vmatpush2.msra.mxu0 0.0
        %3479 = vmatprep.subr.mxu0 0.0
        %3480 = vmatpush2.msra.mxu0 0.0
        %3481 = vmatprep.subr.mxu0 0.0
        %3482 = vmatpush2.msra.mxu0 0.0
        %3483 = vmatprep.subr.mxu0 0.0
        %3484 = vmatpush2.msra.mxu0 0.0
        %3485 = vmatprep.subr.mxu0 0.0
        %3486 = vmatpush2.msra.mxu0 0.0
        %3487 = vmatprep.mubr.f32.mxu0 0.0
        %3488 = vmatmul.mubr.f32.gmra.mxu0 %v3421
        %v3489 = vpop.f32.mrf.mxu0
        %v3490 = vadd.f32 0.0, %v3489
        %v3491 = vpop.f32.mrf.mxu0
        %3492 = vdwg.mxu0
        %v3493 = vadd.f32 %v3253, %v3490
        %v3495 = vlaneseq
        %v3496 = vshrl.u32 %v3495, 7
        %v3497 = vsub.s32 0, %v3496
        %v3498 = vrot.slane %v2311, %v3497
        %v3500 = vadd.f32 %v3493, %v3498
        %v3501 = vadd.f32 %v2235, %v3500
        %s3502 = scalar_lea.vmem %s10, 1
        %v3503 = vld [vmem:[%s3502] sm:$0x1]
        %s3504 = scalar_lea.vmem %s11, 1
        %v3505 = vld [vmem:[%s3504] sm:$0x1]
        %3506 = vadd.xlane.f32.xlu0 %v3501
        %v3507 = vpop.xlane.xlu0 %3506
        %v3508 = vmul.f32 %v3507, %v1958
        %v3509 = vsub.f32 %v3501, %v3508
        %v3510 = vmul.f32 %v3509, %v3509
        %3511 = vadd.xlane.f32.xlu0 %v3510
        %v3512 = vpop.xlane.xlu0 %3511
        %v3513 = vmul.f32 %v3512, %v1958
        %v3514 = vadd.f32 %v3513, 1e-05
        %v3515 = vrsqrt.pop %v3514
        %v3516 = vmul.f32 %v3509, %v3515
        %v3518 = vlaneseq
        %v3519 = vshrl.u32 %v3518, 7
        %v3520 = vsub.s32 0, %v3519
        %v3521 = vrot.slane %v3503, %v3520
        %v3523 = vmul.f32 %v3516, %v3521
        %v3525 = vlaneseq
        %v3526 = vshrl.u32 %v3525, 7
        %v3527 = vsub.s32 0, %v3526
        %v3528 = vrot.slane %v3505, %v3527
        %v3530 = vadd.f32 %v3523, %v3528
        %s3531 = scalar_lea.vmem [#allocation13], 256
        %v3532 = vld [vmem:[%s3531] sm:$0xff]
        %v3533 = vld [vmem:[%s3531 + $0x8] sm:$0xff]
        %v3534 = vld [vmem:[%s3531 + $0x10] sm:$0xff]
        %v3535 = vld [vmem:[%s3531 + $0x18] sm:$0xff]
        %v3536 = vld [vmem:[%s3531 + $0x20] sm:$0xff]
        %v3537 = vld [vmem:[%s3531 + $0x28] sm:$0xff]
        %v3538 = vld [vmem:[%s3531 + $0x30] sm:$0xff]
        %v3539 = vld [vmem:[%s3531 + $0x38] sm:$0xff]
        %v3540 = vld [vmem:[%s3531 + $0x40] sm:$0xff]
        %v3541 = vld [vmem:[%s3531 + $0x48] sm:$0xff]
        %v3542 = vld [vmem:[%s3531 + $0x50] sm:$0xff]
        %v3543 = vld [vmem:[%s3531 + $0x58] sm:$0xff]
        %v3544 = vld [vmem:[%s3531 + $0x60] sm:$0xff]
        %v3545 = vld [vmem:[%s3531 + $0x68] sm:$0xff]
        %v3546 = vld [vmem:[%s3531 + $0x70] sm:$0xff]
        %v3547 = vld [vmem:[%s3531 + $0x78] sm:$0xff]
        %v3548 = vld [vmem:[%s3531 + $0x80] sm:$0xff]
        %v3549 = vld [vmem:[%s3531 + $0x88] sm:$0xff]
        %v3550 = vld [vmem:[%s3531 + $0x90] sm:$0xff]
        %v3551 = vld [vmem:[%s3531 + $0x98] sm:$0xff]
        %v3552 = vld [vmem:[%s3531 + $0xa0] sm:$0xff]
        %v3553 = vld [vmem:[%s3531 + $0xa8] sm:$0xff]
        %v3554 = vld [vmem:[%s3531 + $0xb0] sm:$0xff]
        %v3555 = vld [vmem:[%s3531 + $0xb8] sm:$0xff]
        %v3556 = vld [vmem:[%s3531 + $0xc0] sm:$0xff]
        %v3557 = vld [vmem:[%s3531 + $0xc8] sm:$0xff]
        %v3558 = vld [vmem:[%s3531 + $0xd0] sm:$0xff]
        %v3559 = vld [vmem:[%s3531 + $0xd8] sm:$0xff]
        %v3560 = vld [vmem:[%s3531 + $0xe0] sm:$0xff]
        %v3561 = vld [vmem:[%s3531 + $0xe8] sm:$0xff]
        %v3562 = vld [vmem:[%s3531 + $0xf0] sm:$0xff]
        %v3563 = vld [vmem:[%s3531 + $0xf8] sm:$0xff]
        %s3564 = scalar_lea.vmem %s13, 2
        %v3565 = vld [vmem:[%s3564] sm:$0x3]
        %v3567 = vlaneseq
        %v3568 = vshrl.u32 %v3567, 7
        %v3569 = vsub.s32 0, %v3568
        %v3570 = vrot.slane %v3565, %v3569
        %v3571 = vlaneseq
        %v3572 = vshrl.u32 %v3571, 7
        %v3573 = vsub.s32 1, %v3572
        %v3574 = vrot.slane %v3565, %v3573
        %3577 = vmatprep.subr.mxu0 %v3563
        %3578 = vmatpush1.msra.mxu0 %v3562
        %3579 = vmatprep.subr.mxu0 %v3561
        %3580 = vmatpush1.msra.mxu0 %v3560
        %3581 = vmatprep.subr.mxu0 %v3559
        %3582 = vmatpush1.msra.mxu0 %v3558
        %3583 = vmatprep.subr.mxu0 %v3557
        %3584 = vmatpush1.msra.mxu0 %v3556
        %3585 = vmatprep.subr.mxu0 %v3555
        %3586 = vmatpush1.msra.mxu0 %v3554
        %3587 = vmatprep.subr.mxu0 %v3553
        %3588 = vmatpush1.msra.mxu0 %v3552
        %3589 = vmatprep.subr.mxu0 %v3551
        %3590 = vmatpush1.msra.mxu0 %v3550
        %3591 = vmatprep.subr.mxu0 %v3549
        %3592 = vmatpush1.msra.mxu0 %v3548
        %3593 = vmatprep.subr.mxu0 %v3547
        %3594 = vmatpush1.msra.mxu0 %v3546
        %3595 = vmatprep.subr.mxu0 %v3545
        %3596 = vmatpush1.msra.mxu0 %v3544
        %3597 = vmatprep.subr.mxu0 %v3543
        %3598 = vmatpush1.msra.mxu0 %v3542
        %3599 = vmatprep.subr.mxu0 %v3541
        %3600 = vmatpush1.msra.mxu0 %v3540
        %3601 = vmatprep.subr.mxu0 %v3539
        %3602 = vmatpush1.msra.mxu0 %v3538
        %3603 = vmatprep.subr.mxu0 %v3537
        %3604 = vmatpush1.msra.mxu0 %v3536
        %3605 = vmatprep.subr.mxu0 %v3535
        %3606 = vmatpush1.msra.mxu0 %v3534
        %3607 = vmatprep.subr.mxu0 %v3533
        %3608 = vmatpush1.msra.mxu0 %v3532
        %3609 = vmatprep.subr.mxu0 0.0
        %3610 = vmatpush2.msra.mxu0 0.0
        %3611 = vmatprep.subr.mxu0 0.0
        %3612 = vmatpush2.msra.mxu0 0.0
        %3613 = vmatprep.subr.mxu0 0.0
        %3614 = vmatpush2.msra.mxu0 0.0
        %3615 = vmatprep.subr.mxu0 0.0
        %3616 = vmatpush2.msra.mxu0 0.0
        %3617 = vmatprep.subr.mxu0 0.0
        %3618 = vmatpush2.msra.mxu0 0.0
        %3619 = vmatprep.subr.mxu0 0.0
        %3620 = vmatpush2.msra.mxu0 0.0
        %3621 = vmatprep.subr.mxu0 0.0
        %3622 = vmatpush2.msra.mxu0 0.0
        %3623 = vmatprep.subr.mxu0 0.0
        %3624 = vmatpush2.msra.mxu0 0.0
        %3625 = vmatprep.subr.mxu0 0.0
        %3626 = vmatpush2.msra.mxu0 0.0
        %3627 = vmatprep.subr.mxu0 0.0
        %3628 = vmatpush2.msra.mxu0 0.0
        %3629 = vmatprep.subr.mxu0 0.0
        %3630 = vmatpush2.msra.mxu0 0.0
        %3631 = vmatprep.subr.mxu0 0.0
        %3632 = vmatpush2.msra.mxu0 0.0
        %3633 = vmatprep.subr.mxu0 0.0
        %3634 = vmatpush2.msra.mxu0 0.0
        %3635 = vmatprep.subr.mxu0 0.0
        %3636 = vmatpush2.msra.mxu0 0.0
        %3637 = vmatprep.subr.mxu0 0.0
        %3638 = vmatpush2.msra.mxu0 0.0
        %3639 = vmatprep.subr.mxu0 0.0
        %3640 = vmatpush2.msra.mxu0 0.0
        %3641 = vmatprep.mubr.f32.mxu0 0.0
        %3642 = vmatmul.mubr.f32.gmra.mxu0 %v3530
        %v3643 = vpop.f32.mrf.mxu0
        %v3644 = vadd.f32 %v3570, %v3643
        %v3645 = vpop.f32.mrf.mxu0
        %v3646 = vadd.f32 %v3574, %v3645
        %3647 = vdwg.mxu0
        %v3648 = vmax.f32 %v3644, 0.0
        %v3649 = vmax.f32 %v3646, 0.0
        %s3650 = scalar_lea.vmem [#allocation14], 256
        %v3651 = vld [vmem:[%s3650] sm:$0xff]
        %v3652 = vld [vmem:[%s3650 + $0x8] sm:$0xff]
        %v3653 = vld [vmem:[%s3650 + $0x10] sm:$0xff]
        %v3654 = vld [vmem:[%s3650 + $0x18] sm:$0xff]
        %v3655 = vld [vmem:[%s3650 + $0x20] sm:$0xff]
        %v3656 = vld [vmem:[%s3650 + $0x28] sm:$0xff]
        %v3657 = vld [vmem:[%s3650 + $0x30] sm:$0xff]
        %v3658 = vld [vmem:[%s3650 + $0x38] sm:$0xff]
        %v3659 = vld [vmem:[%s3650 + $0x40] sm:$0xff]
        %v3660 = vld [vmem:[%s3650 + $0x48] sm:$0xff]
        %v3661 = vld [vmem:[%s3650 + $0x50] sm:$0xff]
        %v3662 = vld [vmem:[%s3650 + $0x58] sm:$0xff]
        %v3663 = vld [vmem:[%s3650 + $0x60] sm:$0xff]
        %v3664 = vld [vmem:[%s3650 + $0x68] sm:$0xff]
        %v3665 = vld [vmem:[%s3650 + $0x70] sm:$0xff]
        %v3666 = vld [vmem:[%s3650 + $0x78] sm:$0xff]
        %v3667 = vld [vmem:[%s3650 + $0x80] sm:$0xff]
        %v3668 = vld [vmem:[%s3650 + $0x88] sm:$0xff]
        %v3669 = vld [vmem:[%s3650 + $0x90] sm:$0xff]
        %v3670 = vld [vmem:[%s3650 + $0x98] sm:$0xff]
        %v3671 = vld [vmem:[%s3650 + $0xa0] sm:$0xff]
        %v3672 = vld [vmem:[%s3650 + $0xa8] sm:$0xff]
        %v3673 = vld [vmem:[%s3650 + $0xb0] sm:$0xff]
        %v3674 = vld [vmem:[%s3650 + $0xb8] sm:$0xff]
        %v3675 = vld [vmem:[%s3650 + $0xc0] sm:$0xff]
        %v3676 = vld [vmem:[%s3650 + $0xc8] sm:$0xff]
        %v3677 = vld [vmem:[%s3650 + $0xd0] sm:$0xff]
        %v3678 = vld [vmem:[%s3650 + $0xd8] sm:$0xff]
        %v3679 = vld [vmem:[%s3650 + $0xe0] sm:$0xff]
        %v3680 = vld [vmem:[%s3650 + $0xe8] sm:$0xff]
        %v3681 = vld [vmem:[%s3650 + $0xf0] sm:$0xff]
        %v3682 = vld [vmem:[%s3650 + $0xf8] sm:$0xff]
        %s3683 = scalar_lea.vmem %s15, 1
        %v3684 = vld [vmem:[%s3683] sm:$0x1]
        %v3686 = vlaneseq
        %v3687 = vshrl.u32 %v3686, 7
        %v3688 = vsub.s32 0, %v3687
        %v3689 = vrot.slane %v3684, %v3688
        %3691 = vmatprep.subr.mxu0 0.0
        %3692 = vmatpush1.msra.mxu0 %v3666
        %3693 = vmatprep.subr.mxu0 0.0
        %3694 = vmatpush1.msra.mxu0 %v3665
        %3695 = vmatprep.subr.mxu0 0.0
        %3696 = vmatpush1.msra.mxu0 %v3664
        %3697 = vmatprep.subr.mxu0 0.0
        %3698 = vmatpush1.msra.mxu0 %v3663
        %3699 = vmatprep.subr.mxu0 0.0
        %3700 = vmatpush1.msra.mxu0 %v3662
        %3701 = vmatprep.subr.mxu0 0.0
        %3702 = vmatpush1.msra.mxu0 %v3661
        %3703 = vmatprep.subr.mxu0 0.0
        %3704 = vmatpush1.msra.mxu0 %v3660
        %3705 = vmatprep.subr.mxu0 0.0
        %3706 = vmatpush1.msra.mxu0 %v3659
        %3707 = vmatprep.subr.mxu0 0.0
        %3708 = vmatpush1.msra.mxu0 %v3658
        %3709 = vmatprep.subr.mxu0 0.0
        %3710 = vmatpush1.msra.mxu0 %v3657
        %3711 = vmatprep.subr.mxu0 0.0
        %3712 = vmatpush1.msra.mxu0 %v3656
        %3713 = vmatprep.subr.mxu0 0.0
        %3714 = vmatpush1.msra.mxu0 %v3655
        %3715 = vmatprep.subr.mxu0 0.0
        %3716 = vmatpush1.msra.mxu0 %v3654
        %3717 = vmatprep.subr.mxu0 0.0
        %3718 = vmatpush1.msra.mxu0 %v3653
        %3719 = vmatprep.subr.mxu0 0.0
        %3720 = vmatpush1.msra.mxu0 %v3652
        %3721 = vmatprep.subr.mxu0 0.0
        %3722 = vmatpush1.msra.mxu0 %v3651
        %3723 = vmatprep.subr.mxu0 0.0
        %3724 = vmatpush2.msra.mxu0 %v3682
        %3725 = vmatprep.subr.mxu0 0.0
        %3726 = vmatpush2.msra.mxu0 %v3681
        %3727 = vmatprep.subr.mxu0 0.0
        %3728 = vmatpush2.msra.mxu0 %v3680
        %3729 = vmatprep.subr.mxu0 0.0
        %3730 = vmatpush2.msra.mxu0 %v3679
        %3731 = vmatprep.subr.mxu0 0.0
        %3732 = vmatpush2.msra.mxu0 %v3678
        %3733 = vmatprep.subr.mxu0 0.0
        %3734 = vmatpush2.msra.mxu0 %v3677
        %3735 = vmatprep.subr.mxu0 0.0
        %3736 = vmatpush2.msra.mxu0 %v3676
        %3737 = vmatprep.subr.mxu0 0.0
        %3738 = vmatpush2.msra.mxu0 %v3675
        %3739 = vmatprep.subr.mxu0 0.0
        %3740 = vmatpush2.msra.mxu0 %v3674
        %3741 = vmatprep.subr.mxu0 0.0
        %3742 = vmatpush2.msra.mxu0 %v3673
        %3743 = vmatprep.subr.mxu0 0.0
        %3744 = vmatpush2.msra.mxu0 %v3672
        %3745 = vmatprep.subr.mxu0 0.0
        %3746 = vmatpush2.msra.mxu0 %v3671
        %3747 = vmatprep.subr.mxu0 0.0
        %3748 = vmatpush2.msra.mxu0 %v3670
        %3749 = vmatprep.subr.mxu0 0.0
        %3750 = vmatpush2.msra.mxu0 %v3669
        %3751 = vmatprep.subr.mxu0 0.0
        %3752 = vmatpush2.msra.mxu0 %v3668
        %3753 = vmatprep.subr.mxu0 0.0
        %3754 = vmatpush2.msra.mxu0 %v3667
        %3755 = vmatprep.mubr.f32.mxu0 %v3649
        %3756 = vmatmul.mubr.f32.gmra.mxu0 %v3648
        %v3757 = vpop.f32.mrf.mxu0
        %v3758 = vadd.f32 %v3689, %v3757
        %v3759 = vpop.f32.mrf.mxu0
        %3760 = vdwg.mxu0
        %v3761 = vadd.f32 %v3530, %v3758
        %s3762 = scalar_lea.vmem %s16, 1
        %v3763 = vld [vmem:[%s3762] sm:$0x1]
        %s3764 = scalar_lea.vmem %s17, 1
        %v3765 = vld [vmem:[%s3764] sm:$0x1]
        %3766 = vadd.xlane.f32.xlu0 %v3761
        %v3767 = vpop.xlane.xlu0 %3766
        %v3768 = vmul.f32 %v3767, %v1958
        %v3769 = vsub.f32 %v3761, %v3768
        %v3770 = vmul.f32 %v3769, %v3769
        %3771 = vadd.xlane.f32.xlu0 %v3770
        %v3772 = vpop.xlane.xlu0 %3771
        %v3773 = vmul.f32 %v3772, %v1958
        %v3774 = vadd.f32 %v3773, 1e-05
        %v3775 = vrsqrt.pop %v3774
        %v3776 = vmul.f32 %v3769, %v3775
        %v3778 = vlaneseq
        %v3779 = vshrl.u32 %v3778, 7
        %v3780 = vsub.s32 0, %v3779
        %v3781 = vrot.slane %v3763, %v3780
        %v3783 = vmul.f32 %v3776, %v3781
        %v3785 = vlaneseq
        %v3786 = vshrl.u32 %v3785, 7
        %v3787 = vsub.s32 0, %v3786
        %v3788 = vrot.slane %v3765, %v3787
        %v3790 = vadd.f32 %v3783, %v3788
        %3791 = vst [vmem:[%s690] sm:$0xff] %v3790
        %s3792 = sand.u32 %s430, 1
        %s3793 = scalar_lea.sflag [#allocation4], %s3792
        %s3794 = sand.u32 %s430, 1
        %s3795 = smul.addr %s3794, 8
        %s3796 = scalar_lea.vmem [#allocation16], %s3795
        // Predicated region
        $region125: #{tpu_custom_call.1} parent=91 // pred_check
          %p3797 = pneg %p440
        $region126: #{tpu_custom_call.1} parent=91 // pred_check_branch
          %3799 = sbr.rel (%p3797) target = $region128
        $region127: #{tpu_custom_call.1} parent=91 // pred_region
          %s3801 = ssub.s32 128, 128
          %3802 = vsyncadd %s3793, %s3801
          %s3803 = smul.addr %s39, 128
          %s3804 = scalar_lea.hbm %s18, %s3803
          %s3806 = sshll.u32 %s3796, 4
          %s3807 = int_to_ptr.vmem [resolvable:$true] %s3806
          %3809 = dma.vmem_to_hbm [thread:$0]  %s3807, 128, %s3804, %s3793
        $region128: #{tpu_custom_call.1} parent=91 // pred_fallthru
          _
      $region92: #{tpu_custom_call.1} parent=5 // pred_fallthru
        _
      %p3810 = scmp.le.s32.totalorder 2, %s34
      // Predicated region
      $region129: #{tpu_custom_call.1} parent=5 // pred_check
        %p3811 = pneg %p3810
      $region130: #{tpu_custom_call.1} parent=5 // pred_check_branch
        %3813 = sbr.rel (%p3811) target = $region132
      $region131: #{tpu_custom_call.1} parent=5 // pred_region
        %s3814 = ssub.s32 %s34, 2
        // Predicated region
        $region133: #{tpu_custom_call.1} parent=131 // pred_check
          %p3815 = pneg %p446
        $region134: #{tpu_custom_call.1} parent=131 // pred_check_branch
          %3817 = sbr.rel (%p3815) target = $region136
        $region135: #{tpu_custom_call.1} parent=131 // pred_region
          %s3818 = sand.u32 %s431, 1
          %s3819 = scalar_lea.sflag [#allocation4], %s3818
          %s3820 = sand.u32 %s431, 1
          %s3821 = smul.addr %s3820, 8
          %s3822 = scalar_lea.vmem [#allocation16], %s3821
          %3823 = dma.done %s3819, 128
        $region136: #{tpu_custom_call.1} parent=131 // pred_fallthru
          _
      $region132: #{tpu_custom_call.1} parent=5 // pred_fallthru
        _
    $region6: #{tpu_custom_call.1} parent=1 // loop_footer
      %s38 = sadd.s32 1, %s34
    $region7: #{tpu_custom_call.1} parent=1 // loop_footer_branch
      %33 = sbr.rel target = $region3
    $region8: #{tpu_custom_call.1} parent=1 // loop_exit
      _
    %3824 = vsyncpa [#allocation3], 1
    %s3825 = scalar_lea.sflag [#allocation3], 1
    %3826 = vsyncpa %s3825, 1
    %3827 = vsyncpa [#allocation6], 1
    %3828 = vsyncpa [#allocation9], 1
    %3829 = vsyncpa [#allocation12], 1
    %3830 = vsyncpa [#allocation15], 1
    %3831 = vsyncpa [#allocation4], 1
    %s3832 = scalar_lea.sflag [#allocation4], 1
    %3833 = vsyncpa %s3832, 1

</llo_original>
